<compile_context>
chip_gen: v5e
topology: v5e:2x2
jax: 0.10.0
libtpu: 0.0.40
codegen_flags: <defaults>
</compile_context>

<pallas_src>
import functools

import jax
import jax.numpy as jnp
from jax import lax
from jax.experimental import pallas as pl
from jax.experimental.pallas import tpu as pltpu


_NORM_EPS = 1e-12  # torch F.normalize default eps


# ----------------------------------------------------------------------------
# Fused RVQ kernel: one (batch, T-tile) block, loops over all quantizers in VMEM
# ----------------------------------------------------------------------------
def _rvq_kernel(z_ref, w_in_ref, b_in_ref, cbn_t_ref, cb_t_ref, w_out_t_ref,
                b_out_sum_ref, zq_ref, codes_ref, lat_ref, sqerr_ref,
                *, n_q, cb_dim, score_in_bf16):
    """Block shapes:
       z_ref      : (1, D, Tt)
       w_in_ref   : (n_q, d, D)        b_in_ref    : (n_q, d, 1)   (effective bias)
       cbn_t_ref  : (n_q, d, Ncb)      cb_t_ref    : (n_q, d, Ncb)
       w_out_t_ref: (n_q, d, D)        b_out_sum_ref: (D, 1)
       zq_ref     : (1, D, Tt)         codes_ref   : (1, n_q, Tt) int32
       lat_ref    : (1, n_q*d, Tt)     sqerr_ref   : (1, n_q, Tt)
    """
    residual = z_ref[0].astype(jnp.float32)              # (D, Tt)
    zq_acc = jnp.zeros_like(residual)

    n_codes = cbn_t_ref.shape[2]
    tt = residual.shape[1]

    # Quantizer-invariant iota, hoisted out of the loop (JAX does not CSE
    # broadcast_in_dim; previously this was rebuilt n_q times per grid step).
    row_i = lax.broadcasted_iota(jnp.int32, (n_codes, tt), 0)   # (Ncb, Tt)
    row_f = row_i.astype(jnp.float32)
    big = jnp.float32(n_codes)

    # Contract dim 0 of both operands (trans-LHS matmul): keeps the small-d
    # operands lane-dense in VMEM.
    trans_lhs = (((0,), (0,)), ((), ()))

    for i in range(n_q):                                  # static unroll (small)
        # in_proj (1x1 conv): (d, D) @ (D, Tt), plus folded effective bias.
        z_e = jnp.dot(w_in_ref[i], residual,
                      preferred_element_type=jnp.float32) + b_in_ref[i]   # (d, Tt)

        # Score: argmax_k of cb_n[k] . z_e  == argmax of the reference -dist.
        if score_in_bf16:
            sim = lax.dot_general(cbn_t_ref[i].astype(jnp.bfloat16),
                                  z_e.astype(jnp.bfloat16), trans_lhs,
                                  preferred_element_type=jnp.float32)
        else:
            sim = lax.dot_general(cbn_t_ref[i], z_e, trans_lhs,
                                  preferred_element_type=jnp.float32)     # (Ncb, Tt)

        # Argmax over the codebook axis (first occurrence on ties).
        m = jnp.max(sim, axis=0, keepdims=True)                           # (1, Tt)
        idx_f = jnp.min(jnp.where(sim == m, row_f, big),
                        axis=0, keepdims=True)                            # (1, Tt)
        idx = idx_f.astype(jnp.int32)
        onehot = (row_i == idx).astype(jnp.float32)                       # (Ncb, Tt)

        # decode_code with the RAW codebook (transposed storage, no in-kernel
        # transpose): (d, Ncb) @ (Ncb, Tt).
        z_q_pre = jnp.dot(cb_t_ref[i], onehot,
                          preferred_element_type=jnp.float32)             # (d, Tt)

        # out_proj without bias (biases folded in the wrapper):
        # (d, D)^T @ (d, Tt) -> (D, Tt).
        z_q_i = lax.dot_general(w_out_t_ref[i], z_q_pre, trans_lhs,
                                preferred_element_type=jnp.float32)       # (D, Tt)

        zq_acc = zq_acc + z_q_i
        residual = residual - z_q_i

        codes_ref[0, pl.ds(i, 1), :] = idx
        lat_ref[0, pl.ds(i * cb_dim, cb_dim), :] = z_e.astype(lat_ref.dtype)
        # Commitment/codebook-loss partial: sum over d of (z_e - z_q_pre)^2
        # per column (replaces the large "quantized latents" HBM output).
        diff = z_e - z_q_pre
        sqerr_ref[0, pl.ds(i, 1), :] = jnp.sum(diff * diff, axis=0, keepdims=True)

    # Add the total out_proj bias once (folded out of the per-stage updates).
    zq_ref[0] = (zq_acc + b_out_sum_ref[...]).astype(zq_ref.dtype)


# ----------------------------------------------------------------------------
# Wrapper: layout transforms, bias folding, tiling, loss reduction
# ----------------------------------------------------------------------------
def residual_vector_quantize(z, params, n_quantizers=None, tile_t=512,
                             score_in_bf16=False, vmem_limit_bytes=None):
    """Eval-mode ResidualVectorQuantize.forward.

    z      : (B, D, T) float32
    params : dict of effective (weight-normed) parameters:
             w_in (N, d, D), b_in (N, d), codebook (N, Ncb, d),
             w_out (N, D, d), b_out (N, D)
    Returns (z_q, codes, latents, commitment_loss, codebook_loss).
    """
    w_in = params["w_in"].astype(jnp.float32)
    b_in = params["b_in"].astype(jnp.float32)
    cb = params["codebook"].astype(jnp.float32)
    w_out = params["w_out"].astype(jnp.float32)
    b_out = params["b_out"].astype(jnp.float32)

    n_codebooks, cb_dim, in_dim = w_in.shape
    cb_size = cb.shape[1]
    n_q = n_codebooks if n_quantizers is None else min(int(n_quantizers), n_codebooks)
    # Eval-mode early break: only run the first n_q quantizers.
    w_in, b_in, cb, w_out, b_out = (w_in[:n_q], b_in[:n_q], cb[:n_q],
                                    w_out[:n_q], b_out[:n_q])
    # TODO(synk): training-mode quantizer_dropout (random per-sample n_quantizers
    # mask) is framework glue, not implemented here (eval-mode semantics only).

    B, D, T = z.shape
    assert D == in_dim, (D, in_dim)

    # --- Lane-dense weight layouts -------------------------------------------
    # Codebook: raw (for the lookup) and row-normalized (for the score), both
    # stored transposed (n_q, d, Ncb) so the VMEM blocks are lane-dense.
    cb_norm = jnp.maximum(jnp.linalg.norm(cb, axis=2, keepdims=True), _NORM_EPS)
    cb_n = cb / cb_norm
    cb_t = jnp.transpose(cb, (0, 2, 1))      # (n_q, d, Ncb)
    cbn_t = jnp.transpose(cb_n, (0, 2, 1))   # (n_q, d, Ncb)
    w_out_t = jnp.transpose(w_out, (0, 2, 1))  # (n_q, d, D)

    # --- Fold out_proj biases (exact algebra, wrapper-side) -------------------
    # residual tracked without out_proj biases; compensate in in_proj biases:
    #   b_in_eff[i] = b_in[i] - w_in[i] @ sum_{j<i} b_out[j]
    #   z_q_total  += sum_i b_out[i]  (added once at the end of the kernel)
    cum_prev = jnp.concatenate(
        [jnp.zeros((1, D), jnp.float32), jnp.cumsum(b_out, axis=0)[:-1]], axis=0)
    b_in_eff = b_in - jnp.einsum("ndk,nk->nd", w_in, cum_prev,
                                 precision=lax.Precision.HIGHEST)
    b_in_eff3 = b_in_eff.reshape(n_q, cb_dim, 1)
    b_out_sum = jnp.sum(b_out, axis=0).reshape(D, 1)

    # --- Tiling ----------------------------------------------------------------
    lanes = 128
    tile = min(max(int(tile_t), lanes), ((T + lanes - 1) // lanes) * lanes)
    tile = (tile // lanes) * lanes
    t_pad = ((T + tile - 1) // tile) * tile
    num_t = t_pad // tile

    zp = z.astype(jnp.float32)
    if t_pad != T:
        zp = jnp.pad(zp, ((0, 0), (0, 0), (0, t_pad - T)))

    kernel = functools.partial(_rvq_kernel, n_q=n_q, cb_dim=cb_dim,
                               score_in_bf16=score_in_bf16)

    grid_spec = pltpu.PrefetchScalarGridSpec(
        num_scalar_prefetch=0,
        grid=(B, num_t),
        in_specs=[
            pl.BlockSpec((1, D, tile), lambda b, t: (b, 0, t)),             # z
            pl.BlockSpec((n_q, cb_dim, D), lambda b, t: (0, 0, 0)),         # w_in
            pl.BlockSpec((n_q, cb_dim, 1), lambda b, t: (0, 0, 0)),         # b_in_eff
            pl.BlockSpec((n_q, cb_dim, cb_size), lambda b, t: (0, 0, 0)),   # cb_n^T
            pl.BlockSpec((n_q, cb_dim, cb_size), lambda b, t: (0, 0, 0)),   # cb^T
            pl.BlockSpec((n_q, cb_dim, D), lambda b, t: (0, 0, 0)),         # w_out^T
            pl.BlockSpec((D, 1), lambda b, t: (0, 0)),                      # sum b_out
        ],
        out_specs=(
            pl.BlockSpec((1, D, tile), lambda b, t: (b, 0, t)),             # z_q
            pl.BlockSpec((1, n_q, tile), lambda b, t: (b, 0, t)),           # codes
            pl.BlockSpec((1, n_q * cb_dim, tile), lambda b, t: (b, 0, t)),  # latents
            pl.BlockSpec((1, n_q, tile), lambda b, t: (b, 0, t)),           # sq-err
        ),
    )

    zq, codes, lat, sqerr = pl.pallas_call(
        kernel,
        grid_spec=grid_spec,
        out_shape=(
            jax.ShapeDtypeStruct((B, D, t_pad), jnp.float32),
            jax.ShapeDtypeStruct((B, n_q, t_pad), jnp.int32),
            jax.ShapeDtypeStruct((B, n_q * cb_dim, t_pad), jnp.float32),
            jax.ShapeDtypeStruct((B, n_q, t_pad), jnp.float32),
        ),
        compiler_params=pltpu.CompilerParams(
            dimension_semantics=("parallel", "parallel"),
            vmem_limit_bytes=vmem_limit_bytes),
    )(zp, w_in, b_in_eff3, cbn_t, cb_t, w_out_t, b_out_sum)

    # Strip T padding (loss partials for padded columns are dropped here).
    zq = zq[:, :, :T]
    codes = codes[:, :, :T]
    lat = lat[:, :, :T]
    sqerr = sqerr[:, :, :T]

    # Losses (eval mode: mask is all ones). In the forward pass the commitment
    # and codebook losses have identical values (they differ only in gradients).
    per = jnp.sum(sqerr, axis=2) / jnp.float32(cb_dim * T)   # mean over (d, T)
    commitment_loss = jnp.sum(jnp.mean(per, axis=0))
    codebook_loss = commitment_loss

    return zq, codes, lat, commitment_loss, codebook_loss


# ----------------------------------------------------------------------------
# Deterministic parameter init (effective weights after weight_norm)
# ----------------------------------------------------------------------------
def init_rvq_params(key, input_dim, n_codebooks, codebook_size, codebook_dim):
    ks = jax.random.split(key, 5)
    return dict(
        w_in=0.1 * jax.random.normal(ks[0], (n_codebooks, codebook_dim, input_dim),
                                     jnp.float32),
        b_in=0.01 * jax.random.normal(ks[1], (n_codebooks, codebook_dim), jnp.float32),
        codebook=jax.random.normal(ks[2], (n_codebooks, codebook_size, codebook_dim),
                                   jnp.float32),
        w_out=0.1 * jax.random.normal(ks[3], (n_codebooks, input_dim, codebook_dim),
                                      jnp.float32),
        b_out=0.01 * jax.random.normal(ks[4], (n_codebooks, input_dim), jnp.float32),
    )


# ----------------------------------------------------------------------------
# Pure-JAX reference (mirrors the PyTorch math path exactly)
# ----------------------------------------------------------------------------
def rvq_reference(z, params, n_quantizers=None):
    w_in, b_in = params["w_in"], params["b_in"]
    cb, w_out, b_out = params["codebook"], params["w_out"], params["b_out"]
    n_codebooks, d, _ = w_in.shape
    n_q = n_codebooks if n_quantizers is None else min(int(n_quantizers), n_codebooks)
    B, _, T = z.shape
    hp = lax.Precision.HIGHEST

    residual = z
    z_q = jnp.zeros_like(z)
    commitment_loss = jnp.float32(0.0)
    codebook_loss = jnp.float32(0.0)
    codes, latents = [], []
    for i in range(n_q):
        z_e = jnp.einsum("od,bdt->bot", w_in[i], residual,
                         precision=hp) + b_in[i][None, :, None]
        enc = z_e.transpose(0, 2, 1).reshape(B * T, d)
        enc_n = enc / jnp.maximum(jnp.linalg.norm(enc, axis=1, keepdims=True), _NORM_EPS)
        cb_n = cb[i] / jnp.maximum(jnp.linalg.norm(cb[i], axis=1, keepdims=True),
                                   _NORM_EPS)
        dist = ((enc_n ** 2).sum(1, keepdims=True)
                - 2 * jnp.matmul(enc_n, cb_n.T, precision=hp)
                + (cb_n ** 2).sum(1, keepdims=True).T)
        idx = jnp.argmax(-dist, axis=1).reshape(B, T)
        z_q_pre = jnp.take(cb[i], idx, axis=0).transpose(0, 2, 1)       # (B, d, T)
        c_l = jnp.mean((z_e - z_q_pre) ** 2, axis=(1, 2))
        commitment_loss = commitment_loss + jnp.mean(c_l)
        codebook_loss = codebook_loss + jnp.mean(c_l)
        z_q_i = jnp.einsum("od,bdt->bot", w_out[i], z_q_pre,
                           precision=hp) + b_out[i][None, :, None]
        z_q = z_q + z_q_i
        residual = residual - z_q_i
        codes.append(idx)
        latents.append(z_e)
    return (z_q, jnp.stack(codes, axis=1), jnp.concatenate(latents, axis=1),
            commitment_loss, codebook_loss)


def _rel_err(a, b):
    return float(jnp.linalg.norm(a - b) / (jnp.linalg.norm(b) + 1e-6))


if __name__ == "__main__":
    key = jax.random.PRNGKey(0)
    k_z, k_p = jax.random.split(key)

    # Small shapes consistent with the module (input_dim=D, codebook_dim=8, B x D x T).
    B, D, T = 2, 64, 256
    n_codebooks, codebook_size, codebook_dim = 4, 256, 8

    z = jax.random.normal(k_z, (B, D, T), jnp.float32)
    params = init_rvq_params(k_p, D, n_codebooks, codebook_size, codebook_dim)

    # tile_t=128 -> grid (B, 2): exercises the pipelined T-tiling.
    out = residual_vector_quantize(z, params, tile_t=128)
    jax.block_until_ready(out)
    z_q, codes, latents, commit, cb_loss = out

    z_q_r, codes_r, lat_r, commit_r, cb_r = rvq_reference(z, params)

    assert z_q.shape == (B, D, T)
    assert codes.shape == (B, n_codebooks, T) and codes.dtype == jnp.int32
    assert latents.shape == (B, n_codebooks * codebook_dim, T)
    assert bool(jnp.all(jnp.isfinite(z_q))) and bool(jnp.all(jnp.isfinite(latents)))

    assert float(jnp.mean((codes == codes_r).astype(jnp.float32))) > 0.99, "codes mismatch"
    assert _rel_err(latents, lat_r) < 1e-2, "latents mismatch"
    assert _rel_err(z_q, z_q_r) < 1e-2, "z_q mismatch"
    assert abs(float(commit) - float(commit_r)) < 1e-2 * max(1.0, float(commit_r))
    assert abs(float(cb_loss) - float(cb_r)) < 1e-2 * max(1.0, float(cb_r))

    print("KERNEL_OK")
</pallas_src>

<mosaic_0001>
module attributes {stable_mosaic.version = 11 : i64} {
  func.func @_rvq_kernel(%arg0: i32, %arg1: i32, %arg2: memref<1x64x128xf32, #tpu.memory_space<vmem>>, %arg3: memref<4x8x64xf32, #tpu.memory_space<vmem>>, %arg4: memref<4x8x1xf32, #tpu.memory_space<vmem>>, %arg5: memref<4x8x256xf32, #tpu.memory_space<vmem>>, %arg6: memref<4x8x256xf32, #tpu.memory_space<vmem>>, %arg7: memref<4x8x64xf32, #tpu.memory_space<vmem>>, %arg8: memref<64x1xf32, #tpu.memory_space<vmem>>, %arg9: memref<1x64x128xf32, #tpu.memory_space<vmem>>, %arg10: memref<1x4x128xi32, #tpu.memory_space<vmem>>, %arg11: memref<1x32x128xf32, #tpu.memory_space<vmem>>, %arg12: memref<1x4x128xf32, #tpu.memory_space<vmem>>) attributes {dimension_semantics = [#tpu.dimension_semantics<parallel>, #tpu.dimension_semantics<parallel>], iteration_bounds = array<i64: 2, 2>, scalar_prefetch = 0 : i64, scratch_operands = 0 : i64, tpu.core_type = #tpu.core_type<tc>, window_params = [{transform_indices = @transform_0, window_bounds = array<i64: 1, 64, 128>}, {pipeline_mode = #tpu.pipeline_mode<synchronous>, transform_indices = @transform_1, window_bounds = array<i64: 4, 8, 64>}, {pipeline_mode = #tpu.pipeline_mode<synchronous>, transform_indices = @transform_2, window_bounds = array<i64: 4, 8, 1>}, {pipeline_mode = #tpu.pipeline_mode<synchronous>, transform_indices = @transform_3, window_bounds = array<i64: 4, 8, 256>}, {pipeline_mode = #tpu.pipeline_mode<synchronous>, transform_indices = @transform_4, window_bounds = array<i64: 4, 8, 256>}, {pipeline_mode = #tpu.pipeline_mode<synchronous>, transform_indices = @transform_5, window_bounds = array<i64: 4, 8, 64>}, {pipeline_mode = #tpu.pipeline_mode<synchronous>, transform_indices = @transform_6, window_bounds = array<i64: 64, 1>}, {transform_indices = @transform_7, window_bounds = array<i64: 1, 64, 128>}, {transform_indices = @transform_8, window_bounds = array<i64: 1, 4, 128>}, {transform_indices = @transform_9, window_bounds = array<i64: 1, 32, 128>}, {transform_indices = @transform_10, window_bounds = array<i64: 1, 4, 128>}]} {
    %c0 = arith.constant 0 : index
    %c0_0 = arith.constant 0 : index
    %c0_1 = arith.constant 0 : index
    %0 = vector.load %arg2[%c0, %c0_0, %c0_1] : memref<1x64x128xf32, #tpu.memory_space<vmem>>, vector<1x64x128xf32>
    %1 = vector.shape_cast %0 : vector<1x64x128xf32> to vector<64x128xf32>
    %cst = arith.constant 0.000000e+00 : f32
    %2 = vector.broadcast %cst : f32 to vector<64x128xf32>
    %3 = tpu.iota {dimensions = array<i32: 0>} : vector<256x128xi32>
    %4 = arith.sitofp %3 : vector<256x128xi32> to vector<256x128xf32>
    %c0_2 = arith.constant 0 : index
    %c0_3 = arith.constant 0 : index
    %c0_4 = arith.constant 0 : index
    %5 = vector.load %arg3[%c0_2, %c0_3, %c0_4] : memref<4x8x64xf32, #tpu.memory_space<vmem>>, vector<1x8x64xf32>
    %6 = vector.shape_cast %5 : vector<1x8x64xf32> to vector<8x64xf32>
    %cst_5 = arith.constant dense<0.000000e+00> : vector<8x128xf32>
    %7 = tpu.matmul %6, %1, %cst_5 {dimension_numbers = #tpu.dot_dimension_numbers<[1], [0], [0], [1], [0, 0, 1, 1], [], []>} : vector<8x64xf32>, vector<64x128xf32>, vector<8x128xf32> -> vector<8x128xf32>
    %c0_6 = arith.constant 0 : index
    %c0_7 = arith.constant 0 : index
    %c0_8 = arith.constant 0 : index
    %8 = vector.load %arg4[%c0_6, %c0_7, %c0_8] : memref<4x8x1xf32, #tpu.memory_space<vmem>>, vector<1x8x1xf32>
    %9 = vector.shape_cast %8 : vector<1x8x1xf32> to vector<8x1xf32>
    %10 = vector.broadcast %9 : vector<8x1xf32> to vector<8x128xf32>
    %11 = arith.addf %7, %10 : vector<8x128xf32>
    %c0_9 = arith.constant 0 : index
    %c0_10 = arith.constant 0 : index
    %c0_11 = arith.constant 0 : index
    %12 = vector.load %arg5[%c0_9, %c0_10, %c0_11] : memref<4x8x256xf32, #tpu.memory_space<vmem>>, vector<1x8x256xf32>
    %13 = vector.shape_cast %12 : vector<1x8x256xf32> to vector<8x256xf32>
    %cst_12 = arith.constant dense<0.000000e+00> : vector<256x128xf32>
    %14 = tpu.matmul %13, %11, %cst_12 {dimension_numbers = #tpu.dot_dimension_numbers<[0], [0], [1], [1], [0, 1, 1, 1], [], []>} : vector<8x256xf32>, vector<8x128xf32>, vector<256x128xf32> -> vector<256x128xf32>
    %cst_13 = arith.constant dense<0xFF800000> : vector<128xf32>
    %15 = vector.multi_reduction <maximumf>, %14, %cst_13 [0] : vector<256x128xf32> to vector<128xf32>
    %16 = vector.shape_cast %15 : vector<128xf32> to vector<1x128xf32>
    %17 = vector.broadcast %16 : vector<1x128xf32> to vector<256x128xf32>
    %18 = arith.cmpf oeq, %14, %17 : vector<256x128xf32>
    %cst_14 = arith.constant 2.560000e+02 : f32
    %19 = vector.broadcast %cst_14 : f32 to vector<256x128xf32>
    %20 = arith.select %18, %4, %19 : vector<256x128xi1>, vector<256x128xf32>
    %cst_15 = arith.constant dense<0x7F800000> : vector<128xf32>
    %21 = vector.multi_reduction <minimumf>, %20, %cst_15 [0] : vector<256x128xf32> to vector<128xf32>
    %22 = vector.shape_cast %21 : vector<128xf32> to vector<1x128xf32>
    %23 = arith.fptosi %22 : vector<1x128xf32> to vector<1x128xi32>
    %24 = vector.broadcast %23 : vector<1x128xi32> to vector<256x128xi32>
    %25 = arith.cmpi eq, %3, %24 : vector<256x128xi32>
    %26 = arith.extui %25 : vector<256x128xi1> to vector<256x128xi32>
    %27 = arith.sitofp %26 : vector<256x128xi32> to vector<256x128xf32>
    %c0_16 = arith.constant 0 : index
    %c0_17 = arith.constant 0 : index
    %c0_18 = arith.constant 0 : index
    %28 = vector.load %arg6[%c0_16, %c0_17, %c0_18] : memref<4x8x256xf32, #tpu.memory_space<vmem>>, vector<1x8x256xf32>
    %29 = vector.shape_cast %28 : vector<1x8x256xf32> to vector<8x256xf32>
    %cst_19 = arith.constant dense<0.000000e+00> : vector<8x128xf32>
    %30 = tpu.matmul %29, %27, %cst_19 {dimension_numbers = #tpu.dot_dimension_numbers<[1], [0], [0], [1], [0, 0, 1, 1], [], []>} : vector<8x256xf32>, vector<256x128xf32>, vector<8x128xf32> -> vector<8x128xf32>
    %c0_20 = arith.constant 0 : index
    %c0_21 = arith.constant 0 : index
    %c0_22 = arith.constant 0 : index
    %31 = vector.load %arg7[%c0_20, %c0_21, %c0_22] : memref<4x8x64xf32, #tpu.memory_space<vmem>>, vector<1x8x64xf32>
    %32 = vector.shape_cast %31 : vector<1x8x64xf32> to vector<8x64xf32>
    %cst_23 = arith.constant dense<0.000000e+00> : vector<64x128xf32>
    %33 = tpu.matmul %32, %30, %cst_23 {dimension_numbers = #tpu.dot_dimension_numbers<[0], [0], [1], [1], [0, 1, 1, 1], [], []>} : vector<8x64xf32>, vector<8x128xf32>, vector<64x128xf32> -> vector<64x128xf32>
    %34 = arith.addf %2, %33 : vector<64x128xf32>
    %35 = arith.subf %1, %33 : vector<64x128xf32>
    %c0_24 = arith.constant 0 : index
    %c0_25 = arith.constant 0 : index
    %c0_26 = arith.constant 0 : index
    %36 = vector.load %arg10[%c0_24, %c0_25, %c0_26] : memref<1x4x128xi32, #tpu.memory_space<vmem>>, vector<1x1x128xi32>
    %37 = vector.shape_cast %36 : vector<1x1x128xi32> to vector<1x128xi32>
    %38 = vector.shape_cast %23 : vector<1x128xi32> to vector<1x1x128xi32>
    tpu.vector_store %arg10[%c0_24, %c0_25, %c0_26], %38 {strides = array<i32>} : memref<1x4x128xi32, #tpu.memory_space<vmem>>, vector<1x1x128xi32>,
    %c0_27 = arith.constant 0 : index
    %c0_28 = arith.constant 0 : index
    %c0_29 = arith.constant 0 : index
    %39 = vector.load %arg11[%c0_27, %c0_28, %c0_29] : memref<1x32x128xf32, #tpu.memory_space<vmem>>, vector<1x8x128xf32>
    %40 = vector.shape_cast %39 : vector<1x8x128xf32> to vector<8x128xf32>
    %41 = vector.shape_cast %11 : vector<8x128xf32> to vector<1x8x128xf32>
    tpu.vector_store %arg11[%c0_27, %c0_28, %c0_29], %41 {strides = array<i32>} : memref<1x32x128xf32, #tpu.memory_space<vmem>>, vector<1x8x128xf32>,
    %42 = arith.subf %11, %30 : vector<8x128xf32>
    %43 = arith.mulf %42, %42 : vector<8x128xf32>
    %cst_30 = arith.constant dense<0.000000e+00> : vector<128xf32>
    %44 = vector.multi_reduction <add>, %43, %cst_30 [0] : vector<8x128xf32> to vector<128xf32>
    %45 = vector.shape_cast %44 : vector<128xf32> to vector<1x128xf32>
    %c0_31 = arith.constant 0 : index
    %c0_32 = arith.constant 0 : index
    %c0_33 = arith.constant 0 : index
    %46 = vector.load %arg12[%c0_31, %c0_32, %c0_33] : memref<1x4x128xf32, #tpu.memory_space<vmem>>, vector<1x1x128xf32>
    %47 = vector.shape_cast %46 : vector<1x1x128xf32> to vector<1x128xf32>
    %48 = vector.shape_cast %45 : vector<1x128xf32> to vector<1x1x128xf32>
    tpu.vector_store %arg12[%c0_31, %c0_32, %c0_33], %48 {strides = array<i32>} : memref<1x4x128xf32, #tpu.memory_space<vmem>>, vector<1x1x128xf32>,
    %c1 = arith.constant 1 : index
    %c0_34 = arith.constant 0 : index
    %c0_35 = arith.constant 0 : index
    %49 = vector.load %arg3[%c1, %c0_34, %c0_35] : memref<4x8x64xf32, #tpu.memory_space<vmem>>, vector<1x8x64xf32>
    %50 = vector.shape_cast %49 : vector<1x8x64xf32> to vector<8x64xf32>
    %cst_36 = arith.constant dense<0.000000e+00> : vector<8x128xf32>
    %51 = tpu.matmul %50, %35, %cst_36 {dimension_numbers = #tpu.dot_dimension_numbers<[1], [0], [0], [1], [0, 0, 1, 1], [], []>} : vector<8x64xf32>, vector<64x128xf32>, vector<8x128xf32> -> vector<8x128xf32>
    %c1_37 = arith.constant 1 : index
    %c0_38 = arith.constant 0 : index
    %c0_39 = arith.constant 0 : index
    %52 = vector.load %arg4[%c1_37, %c0_38, %c0_39] : memref<4x8x1xf32, #tpu.memory_space<vmem>>, vector<1x8x1xf32>
    %53 = vector.shape_cast %52 : vector<1x8x1xf32> to vector<8x1xf32>
    %54 = vector.broadcast %53 : vector<8x1xf32> to vector<8x128xf32>
    %55 = arith.addf %51, %54 : vector<8x128xf32>
    %c1_40 = arith.constant 1 : index
    %c0_41 = arith.constant 0 : index
    %c0_42 = arith.constant 0 : index
    %56 = vector.load %arg5[%c1_40, %c0_41, %c0_42] : memref<4x8x256xf32, #tpu.memory_space<vmem>>, vector<1x8x256xf32>
    %57 = vector.shape_cast %56 : vector<1x8x256xf32> to vector<8x256xf32>
    %cst_43 = arith.constant dense<0.000000e+00> : vector<256x128xf32>
    %58 = tpu.matmul %57, %55, %cst_43 {dimension_numbers = #tpu.dot_dimension_numbers<[0], [0], [1], [1], [0, 1, 1, 1], [], []>} : vector<8x256xf32>, vector<8x128xf32>, vector<256x128xf32> -> vector<256x128xf32>
    %cst_44 = arith.constant dense<0xFF800000> : vector<128xf32>
    %59 = vector.multi_reduction <maximumf>, %58, %cst_44 [0] : vector<256x128xf32> to vector<128xf32>
    %60 = vector.shape_cast %59 : vector<128xf32> to vector<1x128xf32>
    %61 = vector.broadcast %60 : vector<1x128xf32> to vector<256x128xf32>
    %62 = arith.cmpf oeq, %58, %61 : vector<256x128xf32>
    %cst_45 = arith.constant 2.560000e+02 : f32
    %63 = vector.broadcast %cst_45 : f32 to vector<256x128xf32>
    %64 = arith.select %62, %4, %63 : vector<256x128xi1>, vector<256x128xf32>
    %cst_46 = arith.constant dense<0x7F800000> : vector<128xf32>
    %65 = vector.multi_reduction <minimumf>, %64, %cst_46 [0] : vector<256x128xf32> to vector<128xf32>
    %66 = vector.shape_cast %65 : vector<128xf32> to vector<1x128xf32>
    %67 = arith.fptosi %66 : vector<1x128xf32> to vector<1x128xi32>
    %68 = vector.broadcast %67 : vector<1x128xi32> to vector<256x128xi32>
    %69 = arith.cmpi eq, %3, %68 : vector<256x128xi32>
    %70 = arith.extui %69 : vector<256x128xi1> to vector<256x128xi32>
    %71 = arith.sitofp %70 : vector<256x128xi32> to vector<256x128xf32>
    %c1_47 = arith.constant 1 : index
    %c0_48 = arith.constant 0 : index
    %c0_49 = arith.constant 0 : index
    %72 = vector.load %arg6[%c1_47, %c0_48, %c0_49] : memref<4x8x256xf32, #tpu.memory_space<vmem>>, vector<1x8x256xf32>
    %73 = vector.shape_cast %72 : vector<1x8x256xf32> to vector<8x256xf32>
    %cst_50 = arith.constant dense<0.000000e+00> : vector<8x128xf32>
    %74 = tpu.matmul %73, %71, %cst_50 {dimension_numbers = #tpu.dot_dimension_numbers<[1], [0], [0], [1], [0, 0, 1, 1], [], []>} : vector<8x256xf32>, vector<256x128xf32>, vector<8x128xf32> -> vector<8x128xf32>
    %c1_51 = arith.constant 1 : index
    %c0_52 = arith.constant 0 : index
    %c0_53 = arith.constant 0 : index
    %75 = vector.load %arg7[%c1_51, %c0_52, %c0_53] : memref<4x8x64xf32, #tpu.memory_space<vmem>>, vector<1x8x64xf32>
    %76 = vector.shape_cast %75 : vector<1x8x64xf32> to vector<8x64xf32>
    %cst_54 = arith.constant dense<0.000000e+00> : vector<64x128xf32>
    %77 = tpu.matmul %76, %74, %cst_54 {dimension_numbers = #tpu.dot_dimension_numbers<[0], [0], [1], [1], [0, 1, 1, 1], [], []>} : vector<8x64xf32>, vector<8x128xf32>, vector<64x128xf32> -> vector<64x128xf32>
    %78 = arith.addf %34, %77 : vector<64x128xf32>
    %79 = arith.subf %35, %77 : vector<64x128xf32>
    %c0_55 = arith.constant 0 : index
    %c1_56 = arith.constant 1 : index
    %c0_57 = arith.constant 0 : index
    %80 = vector.load %arg10[%c0_55, %c1_56, %c0_57] : memref<1x4x128xi32, #tpu.memory_space<vmem>>, vector<1x1x128xi32>
    %81 = vector.shape_cast %80 : vector<1x1x128xi32> to vector<1x128xi32>
    %82 = vector.shape_cast %67 : vector<1x128xi32> to vector<1x1x128xi32>
    tpu.vector_store %arg10[%c0_55, %c1_56, %c0_57], %82 {strides = array<i32>} : memref<1x4x128xi32, #tpu.memory_space<vmem>>, vector<1x1x128xi32>,
    %c0_58 = arith.constant 0 : index
    %c8 = arith.constant 8 : index
    %c0_59 = arith.constant 0 : index
    %83 = vector.load %arg11[%c0_58, %c8, %c0_59] : memref<1x32x128xf32, #tpu.memory_space<vmem>>, vector<1x8x128xf32>
    %84 = vector.shape_cast %83 : vector<1x8x128xf32> to vector<8x128xf32>
    %85 = vector.shape_cast %55 : vector<8x128xf32> to vector<1x8x128xf32>
    tpu.vector_store %arg11[%c0_58, %c8, %c0_59], %85 {strides = array<i32>} : memref<1x32x128xf32, #tpu.memory_space<vmem>>, vector<1x8x128xf32>,
    %86 = arith.subf %55, %74 : vector<8x128xf32>
    %87 = arith.mulf %86, %86 : vector<8x128xf32>
    %cst_60 = arith.constant dense<0.000000e+00> : vector<128xf32>
    %88 = vector.multi_reduction <add>, %87, %cst_60 [0] : vector<8x128xf32> to vector<128xf32>
    %89 = vector.shape_cast %88 : vector<128xf32> to vector<1x128xf32>
    %c0_61 = arith.constant 0 : index
    %c1_62 = arith.constant 1 : index
    %c0_63 = arith.constant 0 : index
    %90 = vector.load %arg12[%c0_61, %c1_62, %c0_63] : memref<1x4x128xf32, #tpu.memory_space<vmem>>, vector<1x1x128xf32>
    %91 = vector.shape_cast %90 : vector<1x1x128xf32> to vector<1x128xf32>
    %92 = vector.shape_cast %89 : vector<1x128xf32> to vector<1x1x128xf32>
    tpu.vector_store %arg12[%c0_61, %c1_62, %c0_63], %92 {strides = array<i32>} : memref<1x4x128xf32, #tpu.memory_space<vmem>>, vector<1x1x128xf32>,
    %c2 = arith.constant 2 : index
    %c0_64 = arith.constant 0 : index
    %c0_65 = arith.constant 0 : index
    %93 = vector.load %arg3[%c2, %c0_64, %c0_65] : memref<4x8x64xf32, #tpu.memory_space<vmem>>, vector<1x8x64xf32>
    %94 = vector.shape_cast %93 : vector<1x8x64xf32> to vector<8x64xf32>
    %cst_66 = arith.constant dense<0.000000e+00> : vector<8x128xf32>
    %95 = tpu.matmul %94, %79, %cst_66 {dimension_numbers = #tpu.dot_dimension_numbers<[1], [0], [0], [1], [0, 0, 1, 1], [], []>} : vector<8x64xf32>, vector<64x128xf32>, vector<8x128xf32> -> vector<8x128xf32>
    %c2_67 = arith.constant 2 : index
    %c0_68 = arith.constant 0 : index
    %c0_69 = arith.constant 0 : index
    %96 = vector.load %arg4[%c2_67, %c0_68, %c0_69] : memref<4x8x1xf32, #tpu.memory_space<vmem>>, vector<1x8x1xf32>
    %97 = vector.shape_cast %96 : vector<1x8x1xf32> to vector<8x1xf32>
    %98 = vector.broadcast %97 : vector<8x1xf32> to vector<8x128xf32>
    %99 = arith.addf %95, %98 : vector<8x128xf32>
    %c2_70 = arith.constant 2 : index
    %c0_71 = arith.constant 0 : index
    %c0_72 = arith.constant 0 : index
    %100 = vector.load %arg5[%c2_70, %c0_71, %c0_72] : memref<4x8x256xf32, #tpu.memory_space<vmem>>, vector<1x8x256xf32>
    %101 = vector.shape_cast %100 : vector<1x8x256xf32> to vector<8x256xf32>
    %cst_73 = arith.constant dense<0.000000e+00> : vector<256x128xf32>
    %102 = tpu.matmul %101, %99, %cst_73 {dimension_numbers = #tpu.dot_dimension_numbers<[0], [0], [1], [1], [0, 1, 1, 1], [], []>} : vector<8x256xf32>, vector<8x128xf32>, vector<256x128xf32> -> vector<256x128xf32>
    %cst_74 = arith.constant dense<0xFF800000> : vector<128xf32>
    %103 = vector.multi_reduction <maximumf>, %102, %cst_74 [0] : vector<256x128xf32> to vector<128xf32>
    %104 = vector.shape_cast %103 : vector<128xf32> to vector<1x128xf32>
    %105 = vector.broadcast %104 : vector<1x128xf32> to vector<256x128xf32>
    %106 = arith.cmpf oeq, %102, %105 : vector<256x128xf32>
    %cst_75 = arith.constant 2.560000e+02 : f32
    %107 = vector.broadcast %cst_75 : f32 to vector<256x128xf32>
    %108 = arith.select %106, %4, %107 : vector<256x128xi1>, vector<256x128xf32>
    %cst_76 = arith.constant dense<0x7F800000> : vector<128xf32>
    %109 = vector.multi_reduction <minimumf>, %108, %cst_76 [0] : vector<256x128xf32> to vector<128xf32>
    %110 = vector.shape_cast %109 : vector<128xf32> to vector<1x128xf32>
    %111 = arith.fptosi %110 : vector<1x128xf32> to vector<1x128xi32>
    %112 = vector.broadcast %111 : vector<1x128xi32> to vector<256x128xi32>
    %113 = arith.cmpi eq, %3, %112 : vector<256x128xi32>
    %114 = arith.extui %113 : vector<256x128xi1> to vector<256x128xi32>
    %115 = arith.sitofp %114 : vector<256x128xi32> to vector<256x128xf32>
    %c2_77 = arith.constant 2 : index
    %c0_78 = arith.constant 0 : index
    %c0_79 = arith.constant 0 : index
    %116 = vector.load %arg6[%c2_77, %c0_78, %c0_79] : memref<4x8x256xf32, #tpu.memory_space<vmem>>, vector<1x8x256xf32>
    %117 = vector.shape_cast %116 : vector<1x8x256xf32> to vector<8x256xf32>
    %cst_80 = arith.constant dense<0.000000e+00> : vector<8x128xf32>
    %118 = tpu.matmul %117, %115, %cst_80 {dimension_numbers = #tpu.dot_dimension_numbers<[1], [0], [0], [1], [0, 0, 1, 1], [], []>} : vector<8x256xf32>, vector<256x128xf32>, vector<8x128xf32> -> vector<8x128xf32>
    %c2_81 = arith.constant 2 : index
    %c0_82 = arith.constant 0 : index
    %c0_83 = arith.constant 0 : index
    %119 = vector.load %arg7[%c2_81, %c0_82, %c0_83] : memref<4x8x64xf32, #tpu.memory_space<vmem>>, vector<1x8x64xf32>
    %120 = vector.shape_cast %119 : vector<1x8x64xf32> to vector<8x64xf32>
    %cst_84 = arith.constant dense<0.000000e+00> : vector<64x128xf32>
    %121 = tpu.matmul %120, %118, %cst_84 {dimension_numbers = #tpu.dot_dimension_numbers<[0], [0], [1], [1], [0, 1, 1, 1], [], []>} : vector<8x64xf32>, vector<8x128xf32>, vector<64x128xf32> -> vector<64x128xf32>
    %122 = arith.addf %78, %121 : vector<64x128xf32>
    %123 = arith.subf %79, %121 : vector<64x128xf32>
    %c0_85 = arith.constant 0 : index
    %c2_86 = arith.constant 2 : index
    %c0_87 = arith.constant 0 : index
    %124 = vector.load %arg10[%c0_85, %c2_86, %c0_87] : memref<1x4x128xi32, #tpu.memory_space<vmem>>, vector<1x1x128xi32>
    %125 = vector.shape_cast %124 : vector<1x1x128xi32> to vector<1x128xi32>
    %126 = vector.shape_cast %111 : vector<1x128xi32> to vector<1x1x128xi32>
    tpu.vector_store %arg10[%c0_85, %c2_86, %c0_87], %126 {strides = array<i32>} : memref<1x4x128xi32, #tpu.memory_space<vmem>>, vector<1x1x128xi32>,
    %c0_88 = arith.constant 0 : index
    %c16 = arith.constant 16 : index
    %c0_89 = arith.constant 0 : index
    %127 = vector.load %arg11[%c0_88, %c16, %c0_89] : memref<1x32x128xf32, #tpu.memory_space<vmem>>, vector<1x8x128xf32>
    %128 = vector.shape_cast %127 : vector<1x8x128xf32> to vector<8x128xf32>
    %129 = vector.shape_cast %99 : vector<8x128xf32> to vector<1x8x128xf32>
    tpu.vector_store %arg11[%c0_88, %c16, %c0_89], %129 {strides = array<i32>} : memref<1x32x128xf32, #tpu.memory_space<vmem>>, vector<1x8x128xf32>,
    %130 = arith.subf %99, %118 : vector<8x128xf32>
    %131 = arith.mulf %130, %130 : vector<8x128xf32>
    %cst_90 = arith.constant dense<0.000000e+00> : vector<128xf32>
    %132 = vector.multi_reduction <add>, %131, %cst_90 [0] : vector<8x128xf32> to vector<128xf32>
    %133 = vector.shape_cast %132 : vector<128xf32> to vector<1x128xf32>
    %c0_91 = arith.constant 0 : index
    %c2_92 = arith.constant 2 : index
    %c0_93 = arith.constant 0 : index
    %134 = vector.load %arg12[%c0_91, %c2_92, %c0_93] : memref<1x4x128xf32, #tpu.memory_space<vmem>>, vector<1x1x128xf32>
    %135 = vector.shape_cast %134 : vector<1x1x128xf32> to vector<1x128xf32>
    %136 = vector.shape_cast %133 : vector<1x128xf32> to vector<1x1x128xf32>
    tpu.vector_store %arg12[%c0_91, %c2_92, %c0_93], %136 {strides = array<i32>} : memref<1x4x128xf32, #tpu.memory_space<vmem>>, vector<1x1x128xf32>,
    %c3 = arith.constant 3 : index
    %c0_94 = arith.constant 0 : index
    %c0_95 = arith.constant 0 : index
    %137 = vector.load %arg3[%c3, %c0_94, %c0_95] : memref<4x8x64xf32, #tpu.memory_space<vmem>>, vector<1x8x64xf32>
    %138 = vector.shape_cast %137 : vector<1x8x64xf32> to vector<8x64xf32>
    %cst_96 = arith.constant dense<0.000000e+00> : vector<8x128xf32>
    %139 = tpu.matmul %138, %123, %cst_96 {dimension_numbers = #tpu.dot_dimension_numbers<[1], [0], [0], [1], [0, 0, 1, 1], [], []>} : vector<8x64xf32>, vector<64x128xf32>, vector<8x128xf32> -> vector<8x128xf32>
    %c3_97 = arith.constant 3 : index
    %c0_98 = arith.constant 0 : index
    %c0_99 = arith.constant 0 : index
    %140 = vector.load %arg4[%c3_97, %c0_98, %c0_99] : memref<4x8x1xf32, #tpu.memory_space<vmem>>, vector<1x8x1xf32>
    %141 = vector.shape_cast %140 : vector<1x8x1xf32> to vector<8x1xf32>
    %142 = vector.broadcast %141 : vector<8x1xf32> to vector<8x128xf32>
    %143 = arith.addf %139, %142 : vector<8x128xf32>
    %c3_100 = arith.constant 3 : index
    %c0_101 = arith.constant 0 : index
    %c0_102 = arith.constant 0 : index
    %144 = vector.load %arg5[%c3_100, %c0_101, %c0_102] : memref<4x8x256xf32, #tpu.memory_space<vmem>>, vector<1x8x256xf32>
    %145 = vector.shape_cast %144 : vector<1x8x256xf32> to vector<8x256xf32>
    %cst_103 = arith.constant dense<0.000000e+00> : vector<256x128xf32>
    %146 = tpu.matmul %145, %143, %cst_103 {dimension_numbers = #tpu.dot_dimension_numbers<[0], [0], [1], [1], [0, 1, 1, 1], [], []>} : vector<8x256xf32>, vector<8x128xf32>, vector<256x128xf32> -> vector<256x128xf32>
    %cst_104 = arith.constant dense<0xFF800000> : vector<128xf32>
    %147 = vector.multi_reduction <maximumf>, %146, %cst_104 [0] : vector<256x128xf32> to vector<128xf32>
    %148 = vector.shape_cast %147 : vector<128xf32> to vector<1x128xf32>
    %149 = vector.broadcast %148 : vector<1x128xf32> to vector<256x128xf32>
    %150 = arith.cmpf oeq, %146, %149 : vector<256x128xf32>
    %cst_105 = arith.constant 2.560000e+02 : f32
    %151 = vector.broadcast %cst_105 : f32 to vector<256x128xf32>
    %152 = arith.select %150, %4, %151 : vector<256x128xi1>, vector<256x128xf32>
    %cst_106 = arith.constant dense<0x7F800000> : vector<128xf32>
    %153 = vector.multi_reduction <minimumf>, %152, %cst_106 [0] : vector<256x128xf32> to vector<128xf32>
    %154 = vector.shape_cast %153 : vector<128xf32> to vector<1x128xf32>
    %155 = arith.fptosi %154 : vector<1x128xf32> to vector<1x128xi32>
    %156 = vector.broadcast %155 : vector<1x128xi32> to vector<256x128xi32>
    %157 = arith.cmpi eq, %3, %156 : vector<256x128xi32>
    %158 = arith.extui %157 : vector<256x128xi1> to vector<256x128xi32>
    %159 = arith.sitofp %158 : vector<256x128xi32> to vector<256x128xf32>
    %c3_107 = arith.constant 3 : index
    %c0_108 = arith.constant 0 : index
    %c0_109 = arith.constant 0 : index
    %160 = vector.load %arg6[%c3_107, %c0_108, %c0_109] : memref<4x8x256xf32, #tpu.memory_space<vmem>>, vector<1x8x256xf32>
    %161 = vector.shape_cast %160 : vector<1x8x256xf32> to vector<8x256xf32>
    %cst_110 = arith.constant dense<0.000000e+00> : vector<8x128xf32>
    %162 = tpu.matmul %161, %159, %cst_110 {dimension_numbers = #tpu.dot_dimension_numbers<[1], [0], [0], [1], [0, 0, 1, 1], [], []>} : vector<8x256xf32>, vector<256x128xf32>, vector<8x128xf32> -> vector<8x128xf32>
    %c3_111 = arith.constant 3 : index
    %c0_112 = arith.constant 0 : index
    %c0_113 = arith.constant 0 : index
    %163 = vector.load %arg7[%c3_111, %c0_112, %c0_113] : memref<4x8x64xf32, #tpu.memory_space<vmem>>, vector<1x8x64xf32>
    %164 = vector.shape_cast %163 : vector<1x8x64xf32> to vector<8x64xf32>
    %cst_114 = arith.constant dense<0.000000e+00> : vector<64x128xf32>
    %165 = tpu.matmul %164, %162, %cst_114 {dimension_numbers = #tpu.dot_dimension_numbers<[0], [0], [1], [1], [0, 1, 1, 1], [], []>} : vector<8x64xf32>, vector<8x128xf32>, vector<64x128xf32> -> vector<64x128xf32>
    %166 = arith.addf %122, %165 : vector<64x128xf32>
    %c0_115 = arith.constant 0 : index
    %c3_116 = arith.constant 3 : index
    %c0_117 = arith.constant 0 : index
    %167 = vector.load %arg10[%c0_115, %c3_116, %c0_117] : memref<1x4x128xi32, #tpu.memory_space<vmem>>, vector<1x1x128xi32>
    %168 = vector.shape_cast %167 : vector<1x1x128xi32> to vector<1x128xi32>
    %169 = vector.shape_cast %155 : vector<1x128xi32> to vector<1x1x128xi32>
    tpu.vector_store %arg10[%c0_115, %c3_116, %c0_117], %169 {strides = array<i32>} : memref<1x4x128xi32, #tpu.memory_space<vmem>>, vector<1x1x128xi32>,
    %c0_118 = arith.constant 0 : index
    %c24 = arith.constant 24 : index
    %c0_119 = arith.constant 0 : index
    %170 = vector.load %arg11[%c0_118, %c24, %c0_119] : memref<1x32x128xf32, #tpu.memory_space<vmem>>, vector<1x8x128xf32>
    %171 = vector.shape_cast %170 : vector<1x8x128xf32> to vector<8x128xf32>
    %172 = vector.shape_cast %143 : vector<8x128xf32> to vector<1x8x128xf32>
    tpu.vector_store %arg11[%c0_118, %c24, %c0_119], %172 {strides = array<i32>} : memref<1x32x128xf32, #tpu.memory_space<vmem>>, vector<1x8x128xf32>,
    %173 = arith.subf %143, %162 : vector<8x128xf32>
    %174 = arith.mulf %173, %173 : vector<8x128xf32>
    %cst_120 = arith.constant dense<0.000000e+00> : vector<128xf32>
    %175 = vector.multi_reduction <add>, %174, %cst_120 [0] : vector<8x128xf32> to vector<128xf32>
    %176 = vector.shape_cast %175 : vector<128xf32> to vector<1x128xf32>
    %c0_121 = arith.constant 0 : index
    %c3_122 = arith.constant 3 : index
    %c0_123 = arith.constant 0 : index
    %177 = vector.load %arg12[%c0_121, %c3_122, %c0_123] : memref<1x4x128xf32, #tpu.memory_space<vmem>>, vector<1x1x128xf32>
    %178 = vector.shape_cast %177 : vector<1x1x128xf32> to vector<1x128xf32>
    %179 = vector.shape_cast %176 : vector<1x128xf32> to vector<1x1x128xf32>
    tpu.vector_store %arg12[%c0_121, %c3_122, %c0_123], %179 {strides = array<i32>} : memref<1x4x128xf32, #tpu.memory_space<vmem>>, vector<1x1x128xf32>,
    %c0_124 = arith.constant 0 : index
    %c0_125 = arith.constant 0 : index
    %180 = vector.load %arg8[%c0_124, %c0_125] : memref<64x1xf32, #tpu.memory_space<vmem>>, vector<64x1xf32>
    %181 = vector.broadcast %180 : vector<64x1xf32> to vector<64x128xf32>
    %182 = arith.addf %166, %181 : vector<64x128xf32>
    %c0_126 = arith.constant 0 : index
    %c0_127 = arith.constant 0 : index
    %c0_128 = arith.constant 0 : index
    %183 = vector.load %arg9[%c0_126, %c0_127, %c0_128] : memref<1x64x128xf32, #tpu.memory_space<vmem>>, vector<1x64x128xf32>
    %184 = vector.shape_cast %183 : vector<1x64x128xf32> to vector<64x128xf32>
    %185 = vector.shape_cast %182 : vector<64x128xf32> to vector<1x64x128xf32>
    tpu.vector_store %arg9[%c0_126, %c0_127, %c0_128], %185 {strides = array<i32>} : memref<1x64x128xf32, #tpu.memory_space<vmem>>, vector<1x64x128xf32>,
    return
  }
  func.func @transform_0(%arg0: i32, %arg1: i32) -> (i32, i32, i32) {
    %c0_i32 = arith.constant 0 : i32
    %c0_i32_0 = arith.constant 0 : i32
    return %arg0, %c0_i32, %arg1 : i32, i32, i32
  }
  func.func @transform_1(%arg0: i32, %arg1: i32) -> (i32, i32, i32) {
    %c0_i32 = arith.constant 0 : i32
    %c0_i32_0 = arith.constant 0 : i32
    %c0_i32_1 = arith.constant 0 : i32
    %c0_i32_2 = arith.constant 0 : i32
    return %c0_i32, %c0_i32_0, %c0_i32_1 : i32, i32, i32
  }
  func.func @transform_2(%arg0: i32, %arg1: i32) -> (i32, i32, i32) {
    %c0_i32 = arith.constant 0 : i32
    %c0_i32_0 = arith.constant 0 : i32
    %c0_i32_1 = arith.constant 0 : i32
    %c0_i32_2 = arith.constant 0 : i32
    return %c0_i32, %c0_i32_0, %c0_i32_1 : i32, i32, i32
  }
  func.func @transform_3(%arg0: i32, %arg1: i32) -> (i32, i32, i32) {
    %c0_i32 = arith.constant 0 : i32
    %c0_i32_0 = arith.constant 0 : i32
    %c0_i32_1 = arith.constant 0 : i32
    %c0_i32_2 = arith.constant 0 : i32
    return %c0_i32, %c0_i32_0, %c0_i32_1 : i32, i32, i32
  }
  func.func @transform_4(%arg0: i32, %arg1: i32) -> (i32, i32, i32) {
    %c0_i32 = arith.constant 0 : i32
    %c0_i32_0 = arith.constant 0 : i32
    %c0_i32_1 = arith.constant 0 : i32
    %c0_i32_2 = arith.constant 0 : i32
    return %c0_i32, %c0_i32_0, %c0_i32_1 : i32, i32, i32
  }
  func.func @transform_5(%arg0: i32, %arg1: i32) -> (i32, i32, i32) {
    %c0_i32 = arith.constant 0 : i32
    %c0_i32_0 = arith.constant 0 : i32
    %c0_i32_1 = arith.constant 0 : i32
    %c0_i32_2 = arith.constant 0 : i32
    return %c0_i32, %c0_i32_0, %c0_i32_1 : i32, i32, i32
  }
  func.func @transform_6(%arg0: i32, %arg1: i32) -> (i32, i32) {
    %c0_i32 = arith.constant 0 : i32
    %c0_i32_0 = arith.constant 0 : i32
    %c0_i32_1 = arith.constant 0 : i32
    return %c0_i32, %c0_i32_0 : i32, i32
  }
  func.func @transform_7(%arg0: i32, %arg1: i32) -> (i32, i32, i32) {
    %c0_i32 = arith.constant 0 : i32
    %c0_i32_0 = arith.constant 0 : i32
    return %arg0, %c0_i32, %arg1 : i32, i32, i32
  }
  func.func @transform_8(%arg0: i32, %arg1: i32) -> (i32, i32, i32) {
    %c0_i32 = arith.constant 0 : i32
    %c0_i32_0 = arith.constant 0 : i32
    return %arg0, %c0_i32, %arg1 : i32, i32, i32
  }
  func.func @transform_9(%arg0: i32, %arg1: i32) -> (i32, i32, i32) {
    %c0_i32 = arith.constant 0 : i32
    %c0_i32_0 = arith.constant 0 : i32
    return %arg0, %c0_i32, %arg1 : i32, i32, i32
  }
  func.func @transform_10(%arg0: i32, %arg1: i32) -> (i32, i32, i32) {
    %c0_i32 = arith.constant 0 : i32
    %c0_i32_0 = arith.constant 0 : i32
    return %arg0, %c0_i32, %arg1 : i32, i32, i32
  }
}

</mosaic_0001>

<llo_original>
// kernel: tpu_custom_call.1
$region0: #{tpu_custom_call.1}
  #allocation0 [shape = 'u32[]', space=smem, size = 0x4, offset = 0x4, fixed_abs, tag = 'smem constant byte address 0x4 - core index']
  #allocation1 [shape = 'u32[72,128]{1,0:T(1,128)}', space=vmem, size = 0x9000, scoped, tag = 'internal scratch']
  %s0 = inlined_call_operand.hbm [shape: f32[2,64,256], index: 0, kind: input, shape index: {}]
  %s1 = inlined_call_operand.vmem [shape: f32[4,8,64], index: 1, kind: input, shape index: {}]
  %s2 = inlined_call_operand.vmem [shape: f32[4,8,1], index: 2, kind: input, shape index: {}]
  %s3 = inlined_call_operand.vmem [shape: f32[4,8,256], index: 3, kind: input, shape index: {}]
  %s4 = inlined_call_operand.hbm [shape: f32[4,8,256], index: 4, kind: input, shape index: {}]
  %s5 = inlined_call_operand.hbm [shape: f32[4,8,64], index: 5, kind: input, shape index: {}]
  %s6 = inlined_call_operand.vmem [shape: f32[64,1], index: 6, kind: input, shape index: {}]
  %s7 = inlined_call_operand.hbm [shape: f32[2,64,256], index: 7, kind: output, shape index: {0}]
  %s8 = inlined_call_operand.hbm [shape: s32[2,4,256], index: 8, kind: output, shape index: {1}]
  %s9 = inlined_call_operand.hbm [shape: f32[2,32,256], index: 9, kind: output, shape index: {2}]
  %s10 = inlined_call_operand.hbm [shape: f32[2,4,256], index: 10, kind: output, shape index: {3}]
  %11 = xla_tuple %s7, %s8, %s9, %s10
  %s12 = sld [smem:[#allocation0]]
  $region97: #{tpu_custom_call.1} parent=0
    _
  %s14 = ssub.s32 1, %s12
  %s15 = scalar_select 0, %s14, %s12
  $region1: #{tpu_custom_call.1} parent=0
    #allocation2 [shape = 'u8[65536]{0}', space=vmem, size = 0x10000, scoped, tag = 'input window, operand 0']
    #allocation3 [shape = 's32[2]{0}', space=sflag, size = 0x8, scoped, tag = 'scoped memory for tpu_custom_call.1']
    #allocation4 [shape = 's32[2]{0}', space=sflag, size = 0x8, scoped, tag = 'scoped memory for tpu_custom_call.1']
    #allocation5 [shape = 'u8[32768]{0}', space=vmem, size = 0x8000, scoped, tag = 'input window, operand 4, single buffered']
    #allocation6 [shape = 's32[1]{0}', space=sflag, size = 0x4, scoped, tag = 'scoped memory for tpu_custom_call.1']
    #allocation7 [shape = 'u8[16384]{0}', space=vmem, size = 0x4000, scoped, tag = 'input window, operand 5, single buffered']
    #allocation8 [shape = 'u8[65536]{0}', space=vmem, size = 0x10000, scoped, tag = 'output window, operand 0']
    #allocation9 [shape = 'u8[4096]{0}', space=vmem, size = 0x1000, scoped, tag = 'output window, operand 1']
    #allocation10 [shape = 's32[2]{0}', space=sflag, size = 0x8, scoped, tag = 'scoped memory for tpu_custom_call.1']
    #allocation11 [shape = 'u8[32768]{0}', space=vmem, size = 0x8000, scoped, tag = 'output window, operand 2']
    #allocation12 [shape = 'u8[4096]{0}', space=vmem, size = 0x1000, scoped, tag = 'output window, operand 3']
    #allocation13 [shape = 's32[2]{0}', space=sflag, size = 0x8, scoped, tag = 'scoped memory for tpu_custom_call.1']
    %16 = vsyncpa [#allocation3], 0
    %s17 = scalar_lea.sflag [#allocation3], 1
    %18 = vsyncpa %s17, 0
    %19 = vsyncpa [#allocation6], 0
    %20 = vsyncpa [#allocation4], 0
    %s21 = scalar_lea.sflag [#allocation4], 1
    %22 = vsyncpa %s21, 0
    %23 = vsyncpa [#allocation10], 0
    %s24 = scalar_lea.sflag [#allocation10], 1
    %25 = vsyncpa %s24, 0
    %26 = vsyncpa [#allocation13], 0
    %s27 = scalar_lea.sflag [#allocation13], 1
    %28 = vsyncpa %s27, 0
    loop: start=0, step=1, limit=6
    $region2: #{tpu_custom_call.1} parent=1 // loop_pre_header
      _
    $region3: #{tpu_custom_call.1} parent=1 // loop_header
      %s30 = sphi 0, %s34
      %p31 = scmp.ge.s32.totalorder %s30, 6
      %s37 = sphi 0, %s49
      %s38 = sphi 0, %s45
      %s39 = sphi 0, %s37
      %s40 = sphi 0, %s38
      %s41 = sphi 0, %s39
      %s42 = sphi 0, %s40
      %s54 = sphi 0, %s56
      %s57 = sphi 0, %s54
      %s58 = sphi 0, %s57
      %s74 = sphi 0, %s58
      %s78 = sphi 0, %s78
      %s80 = sphi 0, %s78
      %s81 = sphi 0, %s80
      %s95 = sphi 0, %s81
      %s99 = sphi 0, %s99
      %s101 = sphi 0, %s99
      %s102 = sphi 0, %s101
      %s116 = sphi 0, %s102
      %s120 = sphi 0, %s120
      %s122 = sphi 0, %s120
      %s123 = sphi 0, %s122
      %s137 = sphi 0, %s123
      %s141 = sphi 0, %s141
      %s143 = sphi 0, %s141
      %s144 = sphi 0, %s143
      %s158 = sphi 0, %s144
      %s162 = sphi 0, %s162
      %s164 = sphi 0, %s162
      %s165 = sphi 0, %s164
      %s179 = sphi 0, %s165
      %s183 = sphi 0, %s183
      %s185 = sphi 0, %s183
      %s186 = sphi 0, %s185
      %s200 = sphi 0, %s186
      %s208 = sphi 0, %s210
      %s211 = sphi 0, %s208
      %s212 = sphi 0, %s211
      %s228 = sphi 0, %s212
      %s236 = sphi 0, %s238
      %s239 = sphi 0, %s236
      %s240 = sphi 0, %s239
      %s256 = sphi 0, %s240
      %s264 = sphi 0, %s266
      %s267 = sphi 0, %s264
      %s268 = sphi 0, %s267
      %s284 = sphi 0, %s268
      %s292 = sphi 0, %s294
      %s295 = sphi 0, %s292
      %s296 = sphi 0, %s295
      %s312 = sphi 0, %s296
    $region4: #{tpu_custom_call.1} parent=1 // loop_header_branch
      %33 = sbr.rel (%p31) target = $region8
    $region5: #{tpu_custom_call.1} parent=1 // loop_body
      %s35 = ssub.s32 %s30, 1
      %s36 = ssub.s32 %s30, 2
      %s43 = sadd.s32 1, %s38
      %p44 = scmp.ge.s32.totalorder %s43, 2
      %s45 = scalar_select %p44, 0, %s43
      %s46 = sadd.s32 1, %s37
      %s47 = scalar_select %p44, %s46, %s37
      %p48 = scmp.ge.s32.totalorder %s47, 2
      %s49 = scalar_select %p48, 0, %s47
      %s50 = ssub.s32 %s37, %s49
      %s51 = ssub.s32 %s38, %s45
      %s52 = sor.u32 %s50, %s51
      %p53 = scmp.eq.s32.totalorder %s52, 0
      %s55 = sadd.s32 %s54, 1
      %s56 = scalar_select %p53, %s54, %s55
      %p59 = pneg %p53
      %p60 = scmp.eq.s32.totalorder %s30, 3
      %p61 = por %p59, %p60
      %p62 = scmp.ne.s32.totalorder %s54, %s57
      %p63 = scmp.eq.s32.totalorder %s30, 0
      %p64 = por %p62, %p63
      %p65 = scmp.ne.s32.totalorder %s54, %s57
      %p66 = scmp.eq.s32.totalorder %s35, 3
      %p67 = por %p65, %p66
      %p68 = scmp.ne.s32.totalorder %s57, %s58
      %p69 = scmp.eq.s32.totalorder %s35, 0
      %p70 = por %p68, %p69
      %p71 = scmp.ne.s32.totalorder %s57, %s58
      %p72 = scmp.eq.s32.totalorder %s36, 3
      %p73 = por %p71, %p72
      %p75 = scmp.ne.s32.totalorder %s58, %s74
      %p76 = scmp.eq.s32.totalorder %s36, 0
      %p77 = por %p75, %p76
      %s79 = sadd.s32 %s78, 1
      %p82 = scmp.eq.s32.totalorder %s30, 3
      %p83 = scmp.ne.s32.totalorder %s78, %s80
      %p84 = scmp.eq.s32.totalorder %s30, 0
      %p85 = por %p83, %p84
      %p86 = scmp.ne.s32.totalorder %s78, %s80
      %p87 = scmp.eq.s32.totalorder %s35, 3
      %p88 = por %p86, %p87
      %p89 = scmp.ne.s32.totalorder %s80, %s81
      %p90 = scmp.eq.s32.totalorder %s35, 0
      %p91 = por %p89, %p90
      %p92 = scmp.ne.s32.totalorder %s80, %s81
      %p93 = scmp.eq.s32.totalorder %s36, 3
      %p94 = por %p92, %p93
      %p96 = scmp.ne.s32.totalorder %s81, %s95
      %p97 = scmp.eq.s32.totalorder %s36, 0
      %p98 = por %p96, %p97
      %s100 = sadd.s32 %s99, 1
      %p103 = scmp.eq.s32.totalorder %s30, 3
      %p104 = scmp.ne.s32.totalorder %s99, %s101
      %p105 = scmp.eq.s32.totalorder %s30, 0
      %p106 = por %p104, %p105
      %p107 = scmp.ne.s32.totalorder %s99, %s101
      %p108 = scmp.eq.s32.totalorder %s35, 3
      %p109 = por %p107, %p108
      %p110 = scmp.ne.s32.totalorder %s101, %s102
      %p111 = scmp.eq.s32.totalorder %s35, 0
      %p112 = por %p110, %p111
      %p113 = scmp.ne.s32.totalorder %s101, %s102
      %p114 = scmp.eq.s32.totalorder %s36, 3
      %p115 = por %p113, %p114
      %p117 = scmp.ne.s32.totalorder %s102, %s116
      %p118 = scmp.eq.s32.totalorder %s36, 0
      %p119 = por %p117, %p118
      %s121 = sadd.s32 %s120, 1
      %p124 = scmp.eq.s32.totalorder %s30, 3
      %p125 = scmp.ne.s32.totalorder %s120, %s122
      %p126 = scmp.eq.s32.totalorder %s30, 0
      %p127 = por %p125, %p126
      %p128 = scmp.ne.s32.totalorder %s120, %s122
      %p129 = scmp.eq.s32.totalorder %s35, 3
      %p130 = por %p128, %p129
      %p131 = scmp.ne.s32.totalorder %s122, %s123
      %p132 = scmp.eq.s32.totalorder %s35, 0
      %p133 = por %p131, %p132
      %p134 = scmp.ne.s32.totalorder %s122, %s123
      %p135 = scmp.eq.s32.totalorder %s36, 3
      %p136 = por %p134, %p135
      %p138 = scmp.ne.s32.totalorder %s123, %s137
      %p139 = scmp.eq.s32.totalorder %s36, 0
      %p140 = por %p138, %p139
      %s142 = sadd.s32 %s141, 1
      %p145 = scmp.eq.s32.totalorder %s30, 3
      %p146 = scmp.ne.s32.totalorder %s141, %s143
      %p147 = scmp.eq.s32.totalorder %s30, 0
      %p148 = por %p146, %p147
      %p149 = scmp.ne.s32.totalorder %s141, %s143
      %p150 = scmp.eq.s32.totalorder %s35, 3
      %p151 = por %p149, %p150
      %p152 = scmp.ne.s32.totalorder %s143, %s144
      %p153 = scmp.eq.s32.totalorder %s35, 0
      %p154 = por %p152, %p153
      %p155 = scmp.ne.s32.totalorder %s143, %s144
      %p156 = scmp.eq.s32.totalorder %s36, 3
      %p157 = por %p155, %p156
      %p159 = scmp.ne.s32.totalorder %s144, %s158
      %p160 = scmp.eq.s32.totalorder %s36, 0
      %p161 = por %p159, %p160
      %s163 = sadd.s32 %s162, 1
      %p166 = scmp.eq.s32.totalorder %s30, 3
      %p167 = scmp.ne.s32.totalorder %s162, %s164
      %p168 = scmp.eq.s32.totalorder %s30, 0
      %p169 = por %p167, %p168
      %p170 = scmp.ne.s32.totalorder %s162, %s164
      %p171 = scmp.eq.s32.totalorder %s35, 3
      %p172 = por %p170, %p171
      %p173 = scmp.ne.s32.totalorder %s164, %s165
      %p174 = scmp.eq.s32.totalorder %s35, 0
      %p175 = por %p173, %p174
      %p176 = scmp.ne.s32.totalorder %s164, %s165
      %p177 = scmp.eq.s32.totalorder %s36, 3
      %p178 = por %p176, %p177
      %p180 = scmp.ne.s32.totalorder %s165, %s179
      %p181 = scmp.eq.s32.totalorder %s36, 0
      %p182 = por %p180, %p181
      %s184 = sadd.s32 %s183, 1
      %p187 = scmp.eq.s32.totalorder %s30, 3
      %p188 = scmp.ne.s32.totalorder %s183, %s185
      %p189 = scmp.eq.s32.totalorder %s30, 0
      %p190 = por %p188, %p189
      %p191 = scmp.ne.s32.totalorder %s183, %s185
      %p192 = scmp.eq.s32.totalorder %s35, 3
      %p193 = por %p191, %p192
      %p194 = scmp.ne.s32.totalorder %s185, %s186
      %p195 = scmp.eq.s32.totalorder %s35, 0
      %p196 = por %p194, %p195
      %p197 = scmp.ne.s32.totalorder %s185, %s186
      %p198 = scmp.eq.s32.totalorder %s36, 3
      %p199 = por %p197, %p198
      %p201 = scmp.ne.s32.totalorder %s186, %s200
      %p202 = scmp.eq.s32.totalorder %s36, 0
      %p203 = por %p201, %p202
      %s204 = ssub.s32 %s37, %s49
      %s205 = ssub.s32 %s38, %s45
      %s206 = sor.u32 %s204, %s205
      %p207 = scmp.eq.s32.totalorder %s206, 0
      %s209 = sadd.s32 %s208, 1
      %s210 = scalar_select %p207, %s208, %s209
      %p213 = pneg %p207
      %p214 = scmp.eq.s32.totalorder %s30, 3
      %p215 = por %p213, %p214
      %p216 = scmp.ne.s32.totalorder %s208, %s211
      %p217 = scmp.eq.s32.totalorder %s30, 0
      %p218 = por %p216, %p217
      %p219 = scmp.ne.s32.totalorder %s208, %s211
      %p220 = scmp.eq.s32.totalorder %s35, 3
      %p221 = por %p219, %p220
      %p222 = scmp.ne.s32.totalorder %s211, %s212
      %p223 = scmp.eq.s32.totalorder %s35, 0
      %p224 = por %p222, %p223
      %p225 = scmp.ne.s32.totalorder %s211, %s212
      %p226 = scmp.eq.s32.totalorder %s36, 3
      %p227 = por %p225, %p226
      %p229 = scmp.ne.s32.totalorder %s212, %s228
      %p230 = scmp.eq.s32.totalorder %s36, 0
      %p231 = por %p229, %p230
      %s232 = ssub.s32 %s37, %s49
      %s233 = ssub.s32 %s38, %s45
      %s234 = sor.u32 %s232, %s233
      %p235 = scmp.eq.s32.totalorder %s234, 0
      %s237 = sadd.s32 %s236, 1
      %s238 = scalar_select %p235, %s236, %s237
      %p241 = pneg %p235
      %p242 = scmp.eq.s32.totalorder %s30, 3
      %p243 = por %p241, %p242
      %p244 = scmp.ne.s32.totalorder %s236, %s239
      %p245 = scmp.eq.s32.totalorder %s30, 0
      %p246 = por %p244, %p245
      %p247 = scmp.ne.s32.totalorder %s236, %s239
      %p248 = scmp.eq.s32.totalorder %s35, 3
      %p249 = por %p247, %p248
      %p250 = scmp.ne.s32.totalorder %s239, %s240
      %p251 = scmp.eq.s32.totalorder %s35, 0
      %p252 = por %p250, %p251
      %p253 = scmp.ne.s32.totalorder %s239, %s240
      %p254 = scmp.eq.s32.totalorder %s36, 3
      %p255 = por %p253, %p254
      %p257 = scmp.ne.s32.totalorder %s240, %s256
      %p258 = scmp.eq.s32.totalorder %s36, 0
      %p259 = por %p257, %p258
      %s260 = ssub.s32 %s37, %s49
      %s261 = ssub.s32 %s38, %s45
      %s262 = sor.u32 %s260, %s261
      %p263 = scmp.eq.s32.totalorder %s262, 0
      %s265 = sadd.s32 %s264, 1
      %s266 = scalar_select %p263, %s264, %s265
      %p269 = pneg %p263
      %p270 = scmp.eq.s32.totalorder %s30, 3
      %p271 = por %p269, %p270
      %p272 = scmp.ne.s32.totalorder %s264, %s267
      %p273 = scmp.eq.s32.totalorder %s30, 0
      %p274 = por %p272, %p273
      %p275 = scmp.ne.s32.totalorder %s264, %s267
      %p276 = scmp.eq.s32.totalorder %s35, 3
      %p277 = por %p275, %p276
      %p278 = scmp.ne.s32.totalorder %s267, %s268
      %p279 = scmp.eq.s32.totalorder %s35, 0
      %p280 = por %p278, %p279
      %p281 = scmp.ne.s32.totalorder %s267, %s268
      %p282 = scmp.eq.s32.totalorder %s36, 3
      %p283 = por %p281, %p282
      %p285 = scmp.ne.s32.totalorder %s268, %s284
      %p286 = scmp.eq.s32.totalorder %s36, 0
      %p287 = por %p285, %p286
      %s288 = ssub.s32 %s37, %s49
      %s289 = ssub.s32 %s38, %s45
      %s290 = sor.u32 %s288, %s289
      %p291 = scmp.eq.s32.totalorder %s290, 0
      %s293 = sadd.s32 %s292, 1
      %s294 = scalar_select %p291, %s292, %s293
      %p297 = pneg %p291
      %p298 = scmp.eq.s32.totalorder %s30, 3
      %p299 = por %p297, %p298
      %p300 = scmp.ne.s32.totalorder %s292, %s295
      %p301 = scmp.eq.s32.totalorder %s30, 0
      %p302 = por %p300, %p301
      %p303 = scmp.ne.s32.totalorder %s292, %s295
      %p304 = scmp.eq.s32.totalorder %s35, 3
      %p305 = por %p303, %p304
      %p306 = scmp.ne.s32.totalorder %s295, %s296
      %p307 = scmp.eq.s32.totalorder %s35, 0
      %p308 = por %p306, %p307
      %p309 = scmp.ne.s32.totalorder %s295, %s296
      %p310 = scmp.eq.s32.totalorder %s36, 3
      %p311 = por %p309, %p310
      %p313 = scmp.ne.s32.totalorder %s296, %s312
      %p314 = scmp.eq.s32.totalorder %s36, 0
      %p315 = por %p313, %p314
      %p316 = scmp.le.s32.totalorder 1, %s30
      %p317 = scmp.lt.s32.totalorder %s30, 5
      %p318 = pnand %p316, %p317
      %p319 = pneg %p318
      // Predicated region
      $region9: #{tpu_custom_call.1} parent=5 // pred_check
        _
      $region10: #{tpu_custom_call.1} parent=5 // pred_check_branch
        %321 = sbr.rel (%p318) target = $region12
      $region11: #{tpu_custom_call.1} parent=5 // pred_region
        %s322 = ssub.s32 %s30, 1
        // Predicated region
        $region13: #{tpu_custom_call.1} parent=11 // pred_check
          %p323 = pneg %p91
        $region14: #{tpu_custom_call.1} parent=11 // pred_check_branch
          %325 = sbr.rel (%p323) target = $region16
        $region15: #{tpu_custom_call.1} parent=11 // pred_region
          _
        $region16: #{tpu_custom_call.1} parent=11 // pred_fallthru
          _
        // Predicated region
        $region17: #{tpu_custom_call.1} parent=11 // pred_check
          %p326 = pneg %p112
        $region18: #{tpu_custom_call.1} parent=11 // pred_check_branch
          %328 = sbr.rel (%p326) target = $region20
        $region19: #{tpu_custom_call.1} parent=11 // pred_region
          _
        $region20: #{tpu_custom_call.1} parent=11 // pred_fallthru
          _
        // Predicated region
        $region21: #{tpu_custom_call.1} parent=11 // pred_check
          %p329 = pneg %p133
        $region22: #{tpu_custom_call.1} parent=11 // pred_check_branch
          %331 = sbr.rel (%p329) target = $region24
        $region23: #{tpu_custom_call.1} parent=11 // pred_region
          _
        $region24: #{tpu_custom_call.1} parent=11 // pred_fallthru
          _
        // Predicated region
        $region25: #{tpu_custom_call.1} parent=11 // pred_check
          %p332 = pneg %p154
        $region26: #{tpu_custom_call.1} parent=11 // pred_check_branch
          %334 = sbr.rel (%p332) target = $region28
        $region27: #{tpu_custom_call.1} parent=11 // pred_region
          %336 = vsyncadd [#allocation6], 0
          %s337 = sshll.u32 %s4, 4
          %s338 = int_to_ptr.hbm [resolvable:$true] %s337
          %s339 = sshll.u32 [#allocation5], 4
          %s340 = int_to_ptr.vmem [resolvable:$true] %s339
          %345 = dma.hbm_to_vmem [thread:$0]  %s338, 1024, %s340, [#allocation6], 256, 256, 16
        $region28: #{tpu_custom_call.1} parent=11 // pred_fallthru
          _
        // Predicated region
        $region29: #{tpu_custom_call.1} parent=11 // pred_check
          %p346 = pneg %p175
        $region30: #{tpu_custom_call.1} parent=11 // pred_check_branch
          %348 = sbr.rel (%p346) target = $region32
        $region31: #{tpu_custom_call.1} parent=11 // pred_region
          %350 = vsyncadd [#allocation6], 0
          %s351 = sshll.u32 %s5, 4
          %s352 = int_to_ptr.hbm [resolvable:$true] %s351
          %s353 = sshll.u32 [#allocation7], 4
          %s354 = int_to_ptr.vmem [resolvable:$true] %s353
          %359 = dma.hbm_to_vmem [thread:$0]  %s352, 512, %s354, [#allocation6], 128, 128, 8
        $region32: #{tpu_custom_call.1} parent=11 // pred_fallthru
          _
        // Predicated region
        $region33: #{tpu_custom_call.1} parent=11 // pred_check
          %p360 = pneg %p196
        $region34: #{tpu_custom_call.1} parent=11 // pred_check_branch
          %362 = sbr.rel (%p360) target = $region36
        $region35: #{tpu_custom_call.1} parent=11 // pred_region
          _
        $region36: #{tpu_custom_call.1} parent=11 // pred_fallthru
          _
      $region12: #{tpu_custom_call.1} parent=5 // pred_fallthru
        _
      %p363 = scmp.lt.s32.totalorder %s30, 4
      // Predicated region
      $region37: #{tpu_custom_call.1} parent=5 // pred_check
        %p364 = pneg %p363
      $region38: #{tpu_custom_call.1} parent=5 // pred_check_branch
        %366 = sbr.rel (%p364) target = $region40
      $region39: #{tpu_custom_call.1} parent=5 // pred_region
        // Predicated region
        $region41: #{tpu_custom_call.1} parent=39 // pred_check
          %p367 = pneg %p64
        $region42: #{tpu_custom_call.1} parent=39 // pred_check_branch
          %369 = sbr.rel (%p367) target = $region44
        $region43: #{tpu_custom_call.1} parent=39 // pred_region
          %s370 = sand.u32 %s54, 1
          %s371 = scalar_lea.sflag [#allocation3], %s370
          %s372 = sand.u32 %s54, 1
          %s373 = smul.addr %s372, 64
          %s374 = scalar_lea.vmem [#allocation2], %s373
          %376 = vsyncadd %s371, 0
          %s377 = smul.addr %s37, 16
          %s378 = sadd.s32 %s38, %s377
          %s379 = smul.addr %s378, 8
          %s380 = scalar_lea.hbm %s0, %s379
          %s381 = sshll.u32 %s380, 4
          %s382 = int_to_ptr.hbm [resolvable:$true] %s381
          %s383 = sshll.u32 %s374, 4
          %s384 = int_to_ptr.vmem [resolvable:$true] %s383
          %389 = dma.hbm_to_vmem [thread:$0]  %s382, 1024, %s384, %s371, 256, 128, 8
        $region44: #{tpu_custom_call.1} parent=39 // pred_fallthru
          _
      $region40: #{tpu_custom_call.1} parent=5 // pred_fallthru
        _
      %p390 = scmp.le.s32.totalorder 1, %s30
      %p391 = scmp.lt.s32.totalorder %s30, 5
      %p392 = pnand %p390, %p391
      %p393 = pneg %p392
      // Predicated region
      $region45: #{tpu_custom_call.1} parent=5 // pred_check
        _
      $region46: #{tpu_custom_call.1} parent=5 // pred_check_branch
        %395 = sbr.rel (%p392) target = $region48
      $region47: #{tpu_custom_call.1} parent=5 // pred_region
        %s396 = ssub.s32 %s30, 1
        %s397 = sand.u32 %s57, 1
        %s398 = scalar_lea.sflag [#allocation3], %s397
        %s399 = sand.u32 %s57, 1
        %s400 = smul.addr %s399, 64
        %s401 = scalar_lea.vmem [#allocation2], %s400
        // Predicated region
        $region49: #{tpu_custom_call.1} parent=47 // pred_check
          %p402 = pneg %p70
        $region50: #{tpu_custom_call.1} parent=47 // pred_check_branch
          %404 = sbr.rel (%p402) target = $region52
        $region51: #{tpu_custom_call.1} parent=47 // pred_region
          %406 = dma.done %s398, 1024
        $region52: #{tpu_custom_call.1} parent=47 // pred_fallthru
          _
        // Predicated region
        $region53: #{tpu_custom_call.1} parent=47 // pred_check
          %p407 = pneg %p154
        $region54: #{tpu_custom_call.1} parent=47 // pred_check_branch
          %409 = sbr.rel (%p407) target = $region56
        $region55: #{tpu_custom_call.1} parent=47 // pred_region
          %411 = dma.done [#allocation6], 1024
        $region56: #{tpu_custom_call.1} parent=47 // pred_fallthru
          _
        // Predicated region
        $region57: #{tpu_custom_call.1} parent=47 // pred_check
          %p412 = pneg %p175
        $region58: #{tpu_custom_call.1} parent=47 // pred_check_branch
          %414 = sbr.rel (%p412) target = $region60
        $region59: #{tpu_custom_call.1} parent=47 // pred_region
          %416 = dma.done [#allocation6], 512
        $region60: #{tpu_custom_call.1} parent=47 // pred_fallthru
          _
        %s417 = sand.u32 %s57, 1
        %s418 = scalar_lea.sflag [#allocation3], %s417
        %s419 = sand.u32 %s57, 1
        %s420 = smul.addr %s419, 64
        %s421 = scalar_lea.vmem [#allocation2], %s420
        %p422 = pneg %p70
        %p423 = pneg %p67
        %p424 = pneg %p91
        %p425 = pneg %p88
        %p426 = pneg %p112
        %p427 = pneg %p109
        %p428 = pneg %p133
        %p429 = pneg %p130
        %p430 = pneg %p154
        %p431 = pneg %p151
        %p432 = pneg %p175
        %p433 = pneg %p172
        %p434 = pneg %p196
        %p435 = pneg %p193
        %p436 = pneg %p224
        %p437 = pneg %p221
        %s438 = sand.u32 %s211, 1
        %s439 = scalar_lea.sflag [#allocation4], %s438
        %s440 = sand.u32 %s211, 1
        %s441 = smul.addr %s440, 64
        %s442 = scalar_lea.vmem [#allocation8], %s441
        %p443 = pneg %p252
        %p444 = pneg %p249
        %s445 = sand.u32 %s35, 1
        %s446 = scalar_lea.sflag [#allocation10], %s445
        %s447 = sand.u32 %s239, 1
        %s448 = smul.addr %s447, 4
        %s449 = scalar_lea.vmem [#allocation9], %s448
        %p450 = pneg %p280
        %p451 = pneg %p277
        %s452 = sand.u32 %s35, 1
        %s453 = scalar_lea.sflag [#allocation10], %s452
        %s454 = sand.u32 %s267, 1
        %s455 = smul.addr %s454, 32
        %s456 = scalar_lea.vmem [#allocation11], %s455
        %p457 = pneg %p308
        %p458 = pneg %p305
        %s459 = sand.u32 %s295, 1
        %s460 = scalar_lea.sflag [#allocation13], %s459
        %s461 = sand.u32 %s295, 1
        %s462 = smul.addr %s461, 4
        %s463 = scalar_lea.vmem [#allocation12], %s462
        %v464 = vld [vmem:[%s401] sm:$0xff]
        %v465 = vld [vmem:[%s401 + $0x8] sm:$0xff]
        %v466 = vld [vmem:[%s401 + $0x10] sm:$0xff]
        %v467 = vld [vmem:[%s401 + $0x18] sm:$0xff]
        %v468 = vld [vmem:[%s401 + $0x20] sm:$0xff]
        %v469 = vld [vmem:[%s401 + $0x28] sm:$0xff]
        %v470 = vld [vmem:[%s401 + $0x30] sm:$0xff]
        %v471 = vld [vmem:[%s401 + $0x38] sm:$0xff]
        %v472 = vlaneseq
        %v473 = vshrl.u32 %v472, 7
        %v474 = vadd.s32 %v473, 8
        %v475 = vadd.s32 %v473, 16
        %v476 = vadd.s32 %v473, 24
        %v477 = vadd.s32 %v473, 32
        %v478 = vadd.s32 %v473, 40
        %v479 = vadd.s32 %v473, 48
        %v480 = vadd.s32 %v473, 56
        %v481 = vadd.s32 %v473, 64
        %v482 = vadd.s32 %v473, 72
        %v483 = vadd.s32 %v473, 80
        %v484 = vadd.s32 %v473, 88
        %v485 = vadd.s32 %v473, 96
        %v486 = vadd.s32 %v473, 104
        %v487 = vadd.s32 %v473, 112
        %v488 = vadd.s32 %v473, 120
        %v489 = vadd.s32 %v473, 128
        %v490 = vadd.s32 %v473, 136
        %v491 = vadd.s32 %v473, 144
        %v492 = vadd.s32 %v473, 152
        %v493 = vadd.s32 %v473, 160
        %v494 = vadd.s32 %v473, 168
        %v495 = vadd.s32 %v473, 176
        %v496 = vadd.s32 %v473, 184
        %v497 = vadd.s32 %v473, 192
        %v498 = vadd.s32 %v473, 200
        %v499 = vadd.s32 %v473, 208
        %v500 = vadd.s32 %v473, 216
        %v501 = vadd.s32 %v473, 224
        %v502 = vadd.s32 %v473, 232
        %v503 = vadd.s32 %v473, 240
        %v504 = vadd.s32 %v473, 248
        %v505 = vcvt.s32.f32 %v473
        %v506 = vcvt.s32.f32 %v474
        %v507 = vcvt.s32.f32 %v475
        %v508 = vcvt.s32.f32 %v476
        %v509 = vcvt.s32.f32 %v477
        %v510 = vcvt.s32.f32 %v478
        %v511 = vcvt.s32.f32 %v479
        %v512 = vcvt.s32.f32 %v480
        %v513 = vcvt.s32.f32 %v481
        %v514 = vcvt.s32.f32 %v482
        %v515 = vcvt.s32.f32 %v483
        %v516 = vcvt.s32.f32 %v484
        %v517 = vcvt.s32.f32 %v485
        %v518 = vcvt.s32.f32 %v486
        %v519 = vcvt.s32.f32 %v487
        %v520 = vcvt.s32.f32 %v488
        %v521 = vcvt.s32.f32 %v489
        %v522 = vcvt.s32.f32 %v490
        %v523 = vcvt.s32.f32 %v491
        %v524 = vcvt.s32.f32 %v492
        %v525 = vcvt.s32.f32 %v493
        %v526 = vcvt.s32.f32 %v494
        %v527 = vcvt.s32.f32 %v495
        %v528 = vcvt.s32.f32 %v496
        %v529 = vcvt.s32.f32 %v497
        %v530 = vcvt.s32.f32 %v498
        %v531 = vcvt.s32.f32 %v499
        %v532 = vcvt.s32.f32 %v500
        %v533 = vcvt.s32.f32 %v501
        %v534 = vcvt.s32.f32 %v502
        %v535 = vcvt.s32.f32 %v503
        %v536 = vcvt.s32.f32 %v504
        %v537 = vld [vmem:[%s1] sm:$0xff]
        %v538 = vld [vmem:[%s2] sm:$0xff]
        %540 = vset.pattern.permute.xlu0 0
        %541 = vperm.xlu0 %540, %v538
        %v542 = vpop.permute.xlu0 %541
        %vm544 = vcmask 523264
        %v546 = vsel %vm544, %v537, 0
        %548 = vmatpush.msra.mxu0 0.0
        %549 = vmatpush.msra.mxu0 0.0
        %550 = vmatpush.msra.mxu0 0.0
        %551 = vmatpush.msra.mxu0 0.0
        %552 = vmatpush.msra.mxu0 0.0
        %553 = vmatpush.msra.mxu0 0.0
        %554 = vmatpush.msra.mxu0 0.0
        %555 = vmatpush.msra.mxu0 0.0
        %556 = vmatpush.msra.mxu0 %v471
        %557 = vmatpush.msra.mxu0 %v470
        %558 = vmatpush.msra.mxu0 %v469
        %559 = vmatpush.msra.mxu0 %v468
        %560 = vmatpush.msra.mxu0 %v467
        %561 = vmatpush.msra.mxu0 %v466
        %562 = vmatpush.msra.mxu0 %v465
        %563 = vmatpush.msra.mxu0 %v464
        %564 = vmatmul.f32.gmra.mxu0 %v546
        %v565 = vpop.f32.mrf.mxu0
        %v566 = vadd.f32 %v542, %v565
        %567 = vdwg.mxu0
        %v568 = vld [vmem:[%s3] sm:$0xff]
        %v569 = vld [vmem:[%s3 + $0x8] sm:$0xff]
        %570 = vxpose.xlu0.b32.start [1/16] %v568, 128
        %571 = vxpose.xlu0.b32.cont [2/16] 0.0, 128
        %572 = vxpose.xlu0.b32.cont [3/16] 0.0, 128
        %573 = vxpose.xlu0.b32.cont [4/16] 0.0, 128
        %574 = vxpose.xlu0.b32.cont [5/16] 0.0, 128
        %575 = vxpose.xlu0.b32.cont [6/16] 0.0, 128
        %576 = vxpose.xlu0.b32.cont [7/16] 0.0, 128
        %577 = vxpose.xlu0.b32.cont [8/16] 0.0, 128
        %578 = vxpose.xlu0.b32.cont [9/16] 0.0, 128
        %579 = vxpose.xlu0.b32.cont [10/16] 0.0, 128
        %580 = vxpose.xlu0.b32.cont [11/16] 0.0, 128
        %581 = vxpose.xlu0.b32.cont [12/16] 0.0, 128
        %582 = vxpose.xlu0.b32.cont [13/16] 0.0, 128
        %583 = vxpose.xlu0.b32.cont [14/16] 0.0, 128
        %584 = vxpose.xlu0.b32.cont [15/16] 0.0, 128
        %585 = vxpose.xlu0.b32.end [16/16] 0.0, 128
        %v586 = vpop.trf.xlu0
        %v587 = vpop.trf.xlu0
        %v588 = vpop.trf.xlu0
        %v589 = vpop.trf.xlu0
        %v590 = vpop.trf.xlu0
        %v591 = vpop.trf.xlu0
        %v592 = vpop.trf.xlu0
        %v593 = vpop.trf.xlu0
        %v594 = vpop.trf.xlu0
        %v595 = vpop.trf.xlu0
        %v596 = vpop.trf.xlu0
        %v597 = vpop.trf.xlu0
        %v598 = vpop.trf.xlu0
        %v599 = vpop.trf.xlu0
        %v600 = vpop.trf.xlu0
        %v601 = vpop.trf.xlu0
        %602 = vxpose.xlu0.b32.start [1/16] %v569, 128
        %603 = vxpose.xlu0.b32.cont [2/16] 0.0, 128
        %604 = vxpose.xlu0.b32.cont [3/16] 0.0, 128
        %605 = vxpose.xlu0.b32.cont [4/16] 0.0, 128
        %606 = vxpose.xlu0.b32.cont [5/16] 0.0, 128
        %607 = vxpose.xlu0.b32.cont [6/16] 0.0, 128
        %608 = vxpose.xlu0.b32.cont [7/16] 0.0, 128
        %609 = vxpose.xlu0.b32.cont [8/16] 0.0, 128
        %610 = vxpose.xlu0.b32.cont [9/16] 0.0, 128
        %611 = vxpose.xlu0.b32.cont [10/16] 0.0, 128
        %612 = vxpose.xlu0.b32.cont [11/16] 0.0, 128
        %613 = vxpose.xlu0.b32.cont [12/16] 0.0, 128
        %614 = vxpose.xlu0.b32.cont [13/16] 0.0, 128
        %615 = vxpose.xlu0.b32.cont [14/16] 0.0, 128
        %616 = vxpose.xlu0.b32.cont [15/16] 0.0, 128
        %617 = vxpose.xlu0.b32.end [16/16] 0.0, 128
        %v618 = vpop.trf.xlu0
        %v619 = vpop.trf.xlu0
        %v620 = vpop.trf.xlu0
        %v621 = vpop.trf.xlu0
        %v622 = vpop.trf.xlu0
        %v623 = vpop.trf.xlu0
        %v624 = vpop.trf.xlu0
        %v625 = vpop.trf.xlu0
        %v626 = vpop.trf.xlu0
        %v627 = vpop.trf.xlu0
        %v628 = vpop.trf.xlu0
        %v629 = vpop.trf.xlu0
        %v630 = vpop.trf.xlu0
        %v631 = vpop.trf.xlu0
        %v632 = vpop.trf.xlu0
        %v633 = vpop.trf.xlu0
        %vm634 = vcmask 64512
        %v636 = vsel %vm634, %v586, 0
        %v639 = vsel %vm634, %v587, 0
        %v642 = vsel %vm634, %v588, 0
        %v645 = vsel %vm634, %v589, 0
        %v648 = vsel %vm634, %v590, 0
        %v651 = vsel %vm634, %v591, 0
        %v654 = vsel %vm634, %v592, 0
        %v657 = vsel %vm634, %v593, 0
        %v660 = vsel %vm634, %v594, 0
        %v663 = vsel %vm634, %v595, 0
        %v666 = vsel %vm634, %v596, 0
        %v669 = vsel %vm634, %v597, 0
        %v672 = vsel %vm634, %v598, 0
        %v675 = vsel %vm634, %v599, 0
        %v678 = vsel %vm634, %v600, 0
        %v681 = vsel %vm634, %v601, 0
        %v684 = vsel %vm634, %v618, 0
        %v687 = vsel %vm634, %v619, 0
        %v690 = vsel %vm634, %v620, 0
        %v693 = vsel %vm634, %v621, 0
        %v696 = vsel %vm634, %v622, 0
        %v699 = vsel %vm634, %v623, 0
        %v702 = vsel %vm634, %v624, 0
        %v705 = vsel %vm634, %v625, 0
        %v708 = vsel %vm634, %v626, 0
        %v711 = vsel %vm634, %v627, 0
        %v714 = vsel %vm634, %v628, 0
        %v717 = vsel %vm634, %v629, 0
        %v720 = vsel %vm634, %v630, 0
        %v723 = vsel %vm634, %v631, 0
        %v726 = vsel %vm634, %v632, 0
        %v729 = vsel %vm634, %v633, 0
        %731 = vmatpush.msra.mxu0 0.0
        %732 = vmatpush.msra.mxu0 0.0
        %733 = vmatpush.msra.mxu0 0.0
        %734 = vmatpush.msra.mxu0 0.0
        %735 = vmatpush.msra.mxu0 0.0
        %736 = vmatpush.msra.mxu0 0.0
        %737 = vmatpush.msra.mxu0 0.0
        %738 = vmatpush.msra.mxu0 0.0
        %739 = vmatpush.msra.mxu0 0.0
        %740 = vmatpush.msra.mxu0 0.0
        %741 = vmatpush.msra.mxu0 0.0
        %742 = vmatpush.msra.mxu0 0.0
        %743 = vmatpush.msra.mxu0 0.0
        %744 = vmatpush.msra.mxu0 0.0
        %745 = vmatpush.msra.mxu0 0.0
        %746 = vmatpush.msra.mxu0 %v566
        %747 = vmatmul.f32.gmra.mxu0 %v636
        %v748 = vpop.f32.mrf.mxu0
        %v749 = vadd.f32 0.0, %v748
        %750 = vmatmul.f32.gmra.mxu0 %v639
        %v751 = vpop.f32.mrf.mxu0
        %v752 = vadd.f32 0.0, %v751
        %753 = vmatmul.f32.gmra.mxu0 %v642
        %v754 = vpop.f32.mrf.mxu0
        %v755 = vadd.f32 0.0, %v754
        %756 = vmatmul.f32.gmra.mxu0 %v645
        %v757 = vpop.f32.mrf.mxu0
        %v758 = vadd.f32 0.0, %v757
        %759 = vmatmul.f32.gmra.mxu0 %v648
        %v760 = vpop.f32.mrf.mxu0
        %v761 = vadd.f32 0.0, %v760
        %762 = vmatmul.f32.gmra.mxu0 %v651
        %v763 = vpop.f32.mrf.mxu0
        %v764 = vadd.f32 0.0, %v763
        %765 = vmatmul.f32.gmra.mxu0 %v654
        %v766 = vpop.f32.mrf.mxu0
        %v767 = vadd.f32 0.0, %v766
        %768 = vmatmul.f32.gmra.mxu0 %v657
        %v769 = vpop.f32.mrf.mxu0
        %v770 = vadd.f32 0.0, %v769
        %771 = vmatmul.f32.gmra.mxu0 %v660
        %v772 = vpop.f32.mrf.mxu0
        %v773 = vadd.f32 0.0, %v772
        %774 = vmatmul.f32.gmra.mxu0 %v663
        %v775 = vpop.f32.mrf.mxu0
        %v776 = vadd.f32 0.0, %v775
        %777 = vmatmul.f32.gmra.mxu0 %v666
        %v778 = vpop.f32.mrf.mxu0
        %v779 = vadd.f32 0.0, %v778
        %780 = vmatmul.f32.gmra.mxu0 %v669
        %v781 = vpop.f32.mrf.mxu0
        %v782 = vadd.f32 0.0, %v781
        %783 = vmatmul.f32.gmra.mxu0 %v672
        %v784 = vpop.f32.mrf.mxu0
        %v785 = vadd.f32 0.0, %v784
        %786 = vmatmul.f32.gmra.mxu0 %v675
        %v787 = vpop.f32.mrf.mxu0
        %v788 = vadd.f32 0.0, %v787
        %789 = vmatmul.f32.gmra.mxu0 %v678
        %v790 = vpop.f32.mrf.mxu0
        %v791 = vadd.f32 0.0, %v790
        %792 = vmatmul.f32.gmra.mxu0 %v681
        %v793 = vpop.f32.mrf.mxu0
        %v794 = vadd.f32 0.0, %v793
        %795 = vmatmul.f32.gmra.mxu0 %v684
        %v796 = vpop.f32.mrf.mxu0
        %v797 = vadd.f32 0.0, %v796
        %798 = vmatmul.f32.gmra.mxu0 %v687
        %v799 = vpop.f32.mrf.mxu0
        %v800 = vadd.f32 0.0, %v799
        %801 = vmatmul.f32.gmra.mxu0 %v690
        %v802 = vpop.f32.mrf.mxu0
        %v803 = vadd.f32 0.0, %v802
        %804 = vmatmul.f32.gmra.mxu0 %v693
        %v805 = vpop.f32.mrf.mxu0
        %v806 = vadd.f32 0.0, %v805
        %807 = vmatmul.f32.gmra.mxu0 %v696
        %v808 = vpop.f32.mrf.mxu0
        %v809 = vadd.f32 0.0, %v808
        %810 = vmatmul.f32.gmra.mxu0 %v699
        %v811 = vpop.f32.mrf.mxu0
        %v812 = vadd.f32 0.0, %v811
        %813 = vmatmul.f32.gmra.mxu0 %v702
        %v814 = vpop.f32.mrf.mxu0
        %v815 = vadd.f32 0.0, %v814
        %816 = vmatmul.f32.gmra.mxu0 %v705
        %v817 = vpop.f32.mrf.mxu0
        %v818 = vadd.f32 0.0, %v817
        %819 = vmatmul.f32.gmra.mxu0 %v708
        %v820 = vpop.f32.mrf.mxu0
        %v821 = vadd.f32 0.0, %v820
        %822 = vmatmul.f32.gmra.mxu0 %v711
        %v823 = vpop.f32.mrf.mxu0
        %v824 = vadd.f32 0.0, %v823
        %825 = vmatmul.f32.gmra.mxu0 %v714
        %v826 = vpop.f32.mrf.mxu0
        %v827 = vadd.f32 0.0, %v826
        %828 = vmatmul.f32.gmra.mxu0 %v717
        %v829 = vpop.f32.mrf.mxu0
        %v830 = vadd.f32 0.0, %v829
        %831 = vmatmul.f32.gmra.mxu0 %v720
        %v832 = vpop.f32.mrf.mxu0
        %v833 = vadd.f32 0.0, %v832
        %834 = vmatmul.f32.gmra.mxu0 %v723
        %v835 = vpop.f32.mrf.mxu0
        %v836 = vadd.f32 0.0, %v835
        %837 = vmatmul.f32.gmra.mxu0 %v726
        %v838 = vpop.f32.mrf.mxu0
        %v839 = vadd.f32 0.0, %v838
        %840 = vmatmul.f32.gmra.mxu0 %v729
        %v841 = vpop.f32.mrf.mxu0
        %v842 = vadd.f32 0.0, %v841
        %843 = vdwg.mxu0
        %v844 = vmax.f32 %v749, %v761
        %v845 = vmax.f32 %v752, %v764
        %v846 = vmax.f32 %v755, %v767
        %v847 = vmax.f32 %v758, %v770
        %v848 = vmax.f32 %v844, %v773
        %v849 = vmax.f32 %v845, %v776
        %v850 = vmax.f32 %v846, %v779
        %v851 = vmax.f32 %v847, %v782
        %v852 = vmax.f32 %v848, %v785
        %v853 = vmax.f32 %v849, %v788
        %v854 = vmax.f32 %v850, %v791
        %v855 = vmax.f32 %v851, %v794
        %v856 = vmax.f32 %v852, %v797
        %v857 = vmax.f32 %v853, %v800
        %v858 = vmax.f32 %v854, %v803
        %v859 = vmax.f32 %v855, %v806
        %v860 = vmax.f32 %v856, %v809
        %v861 = vmax.f32 %v857, %v812
        %v862 = vmax.f32 %v858, %v815
        %v863 = vmax.f32 %v859, %v818
        %v864 = vmax.f32 %v860, %v821
        %v865 = vmax.f32 %v861, %v824
        %v866 = vmax.f32 %v862, %v827
        %v867 = vmax.f32 %v863, %v830
        %v868 = vmax.f32 %v864, %v833
        %v869 = vmax.f32 %v865, %v836
        %v870 = vmax.f32 %v866, %v839
        %v871 = vmax.f32 %v867, %v842
        %v872 = vmax.f32 %v868, %v869
        %v873 = vmax.f32 %v870, %v871
        %v874 = vmax.f32 %v872, %v873
        %v875 = vrot.slane %v874, 4
        %v876 = vmax.f32 %v874, %v875
        %v877 = vrot.slane %v876, 2
        %v878 = vmax.f32 %v876, %v877
        %v879 = vrot.slane %v878, 1
        %v880 = vmax.f32 %v878, %v879
        %vm881 = vcmp.eq.f32.partialorder %v749, %v880
        %vm882 = vcmp.eq.f32.partialorder %v752, %v880
        %vm883 = vcmp.eq.f32.partialorder %v755, %v880
        %vm884 = vcmp.eq.f32.partialorder %v758, %v880
        %vm885 = vcmp.eq.f32.partialorder %v761, %v880
        %vm886 = vcmp.eq.f32.partialorder %v764, %v880
        %vm887 = vcmp.eq.f32.partialorder %v767, %v880
        %vm888 = vcmp.eq.f32.partialorder %v770, %v880
        %vm889 = vcmp.eq.f32.partialorder %v773, %v880
        %vm890 = vcmp.eq.f32.partialorder %v776, %v880
        %vm891 = vcmp.eq.f32.partialorder %v779, %v880
        %vm892 = vcmp.eq.f32.partialorder %v782, %v880
        %vm893 = vcmp.eq.f32.partialorder %v785, %v880
        %vm894 = vcmp.eq.f32.partialorder %v788, %v880
        %vm895 = vcmp.eq.f32.partialorder %v791, %v880
        %vm896 = vcmp.eq.f32.partialorder %v794, %v880
        %vm897 = vcmp.eq.f32.partialorder %v797, %v880
        %vm898 = vcmp.eq.f32.partialorder %v800, %v880
        %vm899 = vcmp.eq.f32.partialorder %v803, %v880
        %vm900 = vcmp.eq.f32.partialorder %v806, %v880
        %vm901 = vcmp.eq.f32.partialorder %v809, %v880
        %vm902 = vcmp.eq.f32.partialorder %v812, %v880
        %vm903 = vcmp.eq.f32.partialorder %v815, %v880
        %vm904 = vcmp.eq.f32.partialorder %v818, %v880
        %vm905 = vcmp.eq.f32.partialorder %v821, %v880
        %vm906 = vcmp.eq.f32.partialorder %v824, %v880
        %vm907 = vcmp.eq.f32.partialorder %v827, %v880
        %vm908 = vcmp.eq.f32.partialorder %v830, %v880
        %vm909 = vcmp.eq.f32.partialorder %v833, %v880
        %vm910 = vcmp.eq.f32.partialorder %v836, %v880
        %vm911 = vcmp.eq.f32.partialorder %v839, %v880
        %vm912 = vcmp.eq.f32.partialorder %v842, %v880
        %v913 = vsel %vm881, %v505, 256.0
        %v914 = vsel %vm882, %v506, 256.0
        %v915 = vsel %vm883, %v507, 256.0
        %v916 = vsel %vm884, %v508, 256.0
        %v917 = vsel %vm885, %v509, 256.0
        %v918 = vsel %vm886, %v510, 256.0
        %v919 = vsel %vm887, %v511, 256.0
        %v920 = vsel %vm888, %v512, 256.0
        %v921 = vsel %vm889, %v513, 256.0
        %v922 = vsel %vm890, %v514, 256.0
        %v923 = vsel %vm891, %v515, 256.0
        %v924 = vsel %vm892, %v516, 256.0
        %v925 = vsel %vm893, %v517, 256.0
        %v926 = vsel %vm894, %v518, 256.0
        %v927 = vsel %vm895, %v519, 256.0
        %v928 = vsel %vm896, %v520, 256.0
        %v929 = vsel %vm897, %v521, 256.0
        %v930 = vsel %vm898, %v522, 256.0
        %v931 = vsel %vm899, %v523, 256.0
        %v932 = vsel %vm900, %v524, 256.0
        %v933 = vsel %vm901, %v525, 256.0
        %v934 = vsel %vm902, %v526, 256.0
        %v935 = vsel %vm903, %v527, 256.0
        %v936 = vsel %vm904, %v528, 256.0
        %v937 = vsel %vm905, %v529, 256.0
        %v938 = vsel %vm906, %v530, 256.0
        %v939 = vsel %vm907, %v531, 256.0
        %v940 = vsel %vm908, %v532, 256.0
        %v941 = vsel %vm909, %v533, 256.0
        %v942 = vsel %vm910, %v534, 256.0
        %v943 = vsel %vm911, %v535, 256.0
        %v944 = vsel %vm912, %v536, 256.0
        %v945 = vmin.f32 %v913, %v917
        %v946 = vmin.f32 %v914, %v918
        %v947 = vmin.f32 %v915, %v919
        %v948 = vmin.f32 %v916, %v920
        %v949 = vmin.f32 %v945, %v921
        %v950 = vmin.f32 %v946, %v922
        %v951 = vmin.f32 %v947, %v923
        %v952 = vmin.f32 %v948, %v924
        %v953 = vmin.f32 %v949, %v925
        %v954 = vmin.f32 %v950, %v926
        %v955 = vmin.f32 %v951, %v927
        %v956 = vmin.f32 %v952, %v928
        %v957 = vmin.f32 %v953, %v929
        %v958 = vmin.f32 %v954, %v930
        %v959 = vmin.f32 %v955, %v931
        %v960 = vmin.f32 %v956, %v932
        %v961 = vmin.f32 %v957, %v933
        %v962 = vmin.f32 %v958, %v934
        %v963 = vmin.f32 %v959, %v935
        %v964 = vmin.f32 %v960, %v936
        %v965 = vmin.f32 %v961, %v937
        %v966 = vmin.f32 %v962, %v938
        %v967 = vmin.f32 %v963, %v939
        %v968 = vmin.f32 %v964, %v940
        %v969 = vmin.f32 %v965, %v941
        %v970 = vmin.f32 %v966, %v942
        %v971 = vmin.f32 %v967, %v943
        %v972 = vmin.f32 %v968, %v944
        %v973 = vmin.f32 %v969, %v970
        %v974 = vmin.f32 %v971, %v972
        %v975 = vmin.f32 %v973, %v974
        %v976 = vrot.slane %v975, 4
        %v977 = vmin.f32 %v975, %v976
        %v978 = vrot.slane %v977, 2
        %v979 = vmin.f32 %v977, %v978
        %v980 = vrot.slane %v979, 1
        %v981 = vmin.f32 %v979, %v980
        %v982 = vcvt.f32.s32.to.zero.pseudo %v981
        %vm983 = vcmp.eq.s32.totalorder %v473, %v982
        %vm984 = vcmp.eq.s32.totalorder %v474, %v982
        %vm985 = vcmp.eq.s32.totalorder %v475, %v982
        %vm986 = vcmp.eq.s32.totalorder %v476, %v982
        %vm987 = vcmp.eq.s32.totalorder %v477, %v982
        %vm988 = vcmp.eq.s32.totalorder %v478, %v982
        %vm989 = vcmp.eq.s32.totalorder %v479, %v982
        %vm990 = vcmp.eq.s32.totalorder %v480, %v982
        %vm991 = vcmp.eq.s32.totalorder %v481, %v982
        %vm992 = vcmp.eq.s32.totalorder %v482, %v982
        %vm993 = vcmp.eq.s32.totalorder %v483, %v982
        %vm994 = vcmp.eq.s32.totalorder %v484, %v982
        %vm995 = vcmp.eq.s32.totalorder %v485, %v982
        %vm996 = vcmp.eq.s32.totalorder %v486, %v982
        %vm997 = vcmp.eq.s32.totalorder %v487, %v982
        %vm998 = vcmp.eq.s32.totalorder %v488, %v982
        %vm999 = vcmp.eq.s32.totalorder %v489, %v982
        %vm1000 = vcmp.eq.s32.totalorder %v490, %v982
        %vm1001 = vcmp.eq.s32.totalorder %v491, %v982
        %vm1002 = vcmp.eq.s32.totalorder %v492, %v982
        %vm1003 = vcmp.eq.s32.totalorder %v493, %v982
        %vm1004 = vcmp.eq.s32.totalorder %v494, %v982
        %vm1005 = vcmp.eq.s32.totalorder %v495, %v982
        %vm1006 = vcmp.eq.s32.totalorder %v496, %v982
        %vm1007 = vcmp.eq.s32.totalorder %v497, %v982
        %vm1008 = vcmp.eq.s32.totalorder %v498, %v982
        %vm1009 = vcmp.eq.s32.totalorder %v499, %v982
        %vm1010 = vcmp.eq.s32.totalorder %v500, %v982
        %vm1011 = vcmp.eq.s32.totalorder %v501, %v982
        %vm1012 = vcmp.eq.s32.totalorder %v502, %v982
        %vm1013 = vcmp.eq.s32.totalorder %v503, %v982
        %vm1014 = vcmp.eq.s32.totalorder %v504, %v982
        %v1015 = vsel %vm983, 1, 0
        %v1016 = vsel %vm984, 1, 0
        %v1017 = vsel %vm985, 1, 0
        %v1018 = vsel %vm986, 1, 0
        %v1019 = vsel %vm987, 1, 0
        %v1020 = vsel %vm988, 1, 0
        %v1021 = vsel %vm989, 1, 0
        %v1022 = vsel %vm990, 1, 0
        %v1023 = vsel %vm991, 1, 0
        %v1024 = vsel %vm992, 1, 0
        %v1025 = vsel %vm993, 1, 0
        %v1026 = vsel %vm994, 1, 0
        %v1027 = vsel %vm995, 1, 0
        %v1028 = vsel %vm996, 1, 0
        %v1029 = vsel %vm997, 1, 0
        %v1030 = vsel %vm998, 1, 0
        %v1031 = vsel %vm999, 1, 0
        %v1032 = vsel %vm1000, 1, 0
        %v1033 = vsel %vm1001, 1, 0
        %v1034 = vsel %vm1002, 1, 0
        %v1035 = vsel %vm1003, 1, 0
        %v1036 = vsel %vm1004, 1, 0
        %v1037 = vsel %vm1005, 1, 0
        %v1038 = vsel %vm1006, 1, 0
        %v1039 = vsel %vm1007, 1, 0
        %v1040 = vsel %vm1008, 1, 0
        %v1041 = vsel %vm1009, 1, 0
        %v1042 = vsel %vm1010, 1, 0
        %v1043 = vsel %vm1011, 1, 0
        %v1044 = vsel %vm1012, 1, 0
        %v1045 = vsel %vm1013, 1, 0
        %v1046 = vsel %vm1014, 1, 0
        %v1047 = vcvt.s32.f32 %v1015
        %v1048 = vcvt.s32.f32 %v1016
        %v1049 = vcvt.s32.f32 %v1017
        %v1050 = vcvt.s32.f32 %v1018
        %v1051 = vcvt.s32.f32 %v1019
        %v1052 = vcvt.s32.f32 %v1020
        %v1053 = vcvt.s32.f32 %v1021
        %v1054 = vcvt.s32.f32 %v1022
        %v1055 = vcvt.s32.f32 %v1023
        %v1056 = vcvt.s32.f32 %v1024
        %v1057 = vcvt.s32.f32 %v1025
        %v1058 = vcvt.s32.f32 %v1026
        %v1059 = vcvt.s32.f32 %v1027
        %v1060 = vcvt.s32.f32 %v1028
        %v1061 = vcvt.s32.f32 %v1029
        %v1062 = vcvt.s32.f32 %v1030
        %v1063 = vcvt.s32.f32 %v1031
        %v1064 = vcvt.s32.f32 %v1032
        %v1065 = vcvt.s32.f32 %v1033
        %v1066 = vcvt.s32.f32 %v1034
        %v1067 = vcvt.s32.f32 %v1035
        %v1068 = vcvt.s32.f32 %v1036
        %v1069 = vcvt.s32.f32 %v1037
        %v1070 = vcvt.s32.f32 %v1038
        %v1071 = vcvt.s32.f32 %v1039
        %v1072 = vcvt.s32.f32 %v1040
        %v1073 = vcvt.s32.f32 %v1041
        %v1074 = vcvt.s32.f32 %v1042
        %v1075 = vcvt.s32.f32 %v1043
        %v1076 = vcvt.s32.f32 %v1044
        %v1077 = vcvt.s32.f32 %v1045
        %v1078 = vcvt.s32.f32 %v1046
        %v1079 = vld [vmem:[#allocation5] sm:$0xff]
        %v1080 = vld [vmem:[#allocation5 + $0x8] sm:$0xff]
        %1081 = vmatpush.msra.mxu0 %v1062
        %1082 = vmatpush.msra.mxu0 %v1061
        %1083 = vmatpush.msra.mxu0 %v1060
        %1084 = vmatpush.msra.mxu0 %v1059
        %1085 = vmatpush.msra.mxu0 %v1058
        %1086 = vmatpush.msra.mxu0 %v1057
        %1087 = vmatpush.msra.mxu0 %v1056
        %1088 = vmatpush.msra.mxu0 %v1055
        %1089 = vmatpush.msra.mxu0 %v1054
        %1090 = vmatpush.msra.mxu0 %v1053
        %1091 = vmatpush.msra.mxu0 %v1052
        %1092 = vmatpush.msra.mxu0 %v1051
        %1093 = vmatpush.msra.mxu0 %v1050
        %1094 = vmatpush.msra.mxu0 %v1049
        %1095 = vmatpush.msra.mxu0 %v1048
        %1096 = vmatpush.msra.mxu0 %v1047
        %1097 = vmatmul.f32.gmra.mxu0 %v1079
        %v1098 = vpop.f32.mrf.mxu0
        %v1099 = vadd.f32 0.0, %v1098
        %1100 = vdwg.mxu0
        %1101 = vmatpush.msra.mxu0 %v1078
        %1102 = vmatpush.msra.mxu0 %v1077
        %1103 = vmatpush.msra.mxu0 %v1076
        %1104 = vmatpush.msra.mxu0 %v1075
        %1105 = vmatpush.msra.mxu0 %v1074
        %1106 = vmatpush.msra.mxu0 %v1073
        %1107 = vmatpush.msra.mxu0 %v1072
        %1108 = vmatpush.msra.mxu0 %v1071
        %1109 = vmatpush.msra.mxu0 %v1070
        %1110 = vmatpush.msra.mxu0 %v1069
        %1111 = vmatpush.msra.mxu0 %v1068
        %1112 = vmatpush.msra.mxu0 %v1067
        %1113 = vmatpush.msra.mxu0 %v1066
        %1114 = vmatpush.msra.mxu0 %v1065
        %1115 = vmatpush.msra.mxu0 %v1064
        %1116 = vmatpush.msra.mxu0 %v1063
        %1117 = vmatmul.f32.gmra.mxu0 %v1080
        %v1118 = vpop.f32.mrf.mxu0
        %v1119 = vadd.f32 %v1099, %v1118
        %1120 = vdwg.mxu0
        %v1121 = vld [vmem:[#allocation7] sm:$0xff]
        %1122 = vxpose.xlu0.b32.start [1/16] %v1121, 128
        %1123 = vxpose.xlu0.b32.cont [2/16] 0.0, 128
        %1124 = vxpose.xlu0.b32.cont [3/16] 0.0, 128
        %1125 = vxpose.xlu0.b32.cont [4/16] 0.0, 128
        %1126 = vxpose.xlu0.b32.cont [5/16] 0.0, 128
        %1127 = vxpose.xlu0.b32.cont [6/16] 0.0, 128
        %1128 = vxpose.xlu0.b32.cont [7/16] 0.0, 128
        %1129 = vxpose.xlu0.b32.cont [8/16] 0.0, 128
        %1130 = vxpose.xlu0.b32.cont [9/16] 0.0, 128
        %1131 = vxpose.xlu0.b32.cont [10/16] 0.0, 128
        %1132 = vxpose.xlu0.b32.cont [11/16] 0.0, 128
        %1133 = vxpose.xlu0.b32.cont [12/16] 0.0, 128
        %1134 = vxpose.xlu0.b32.cont [13/16] 0.0, 128
        %1135 = vxpose.xlu0.b32.cont [14/16] 0.0, 128
        %1136 = vxpose.xlu0.b32.cont [15/16] 0.0, 128
        %1137 = vxpose.xlu0.b32.end [16/16] 0.0, 128
        %v1138 = vpop.trf.xlu0
        %v1139 = vpop.trf.xlu0
        %v1140 = vpop.trf.xlu0
        %v1141 = vpop.trf.xlu0
        %v1142 = vpop.trf.xlu0
        %v1143 = vpop.trf.xlu0
        %v1144 = vpop.trf.xlu0
        %v1145 = vpop.trf.xlu0
        %v1146 = vpop.trf.xlu0
        %v1147 = vpop.trf.xlu0
        %v1148 = vpop.trf.xlu0
        %v1149 = vpop.trf.xlu0
        %v1150 = vpop.trf.xlu0
        %v1151 = vpop.trf.xlu0
        %v1152 = vpop.trf.xlu0
        %v1153 = vpop.trf.xlu0
        %v1155 = vsel %vm634, %v1138, 0
        %v1158 = vsel %vm634, %v1139, 0
        %v1161 = vsel %vm634, %v1140, 0
        %v1164 = vsel %vm634, %v1141, 0
        %v1167 = vsel %vm634, %v1142, 0
        %v1170 = vsel %vm634, %v1143, 0
        %v1173 = vsel %vm634, %v1144, 0
        %v1176 = vsel %vm634, %v1145, 0
        %1178 = vmatpush.msra.mxu0 0.0
        %1179 = vmatpush.msra.mxu0 0.0
        %1180 = vmatpush.msra.mxu0 0.0
        %1181 = vmatpush.msra.mxu0 0.0
        %1182 = vmatpush.msra.mxu0 0.0
        %1183 = vmatpush.msra.mxu0 0.0
        %1184 = vmatpush.msra.mxu0 0.0
        %1185 = vmatpush.msra.mxu0 0.0
        %1186 = vmatpush.msra.mxu0 0.0
        %1187 = vmatpush.msra.mxu0 0.0
        %1188 = vmatpush.msra.mxu0 0.0
        %1189 = vmatpush.msra.mxu0 0.0
        %1190 = vmatpush.msra.mxu0 0.0
        %1191 = vmatpush.msra.mxu0 0.0
        %1192 = vmatpush.msra.mxu0 0.0
        %1193 = vmatpush.msra.mxu0 %v1119
        %1194 = vmatmul.f32.gmra.mxu0 %v1155
        %v1195 = vpop.f32.mrf.mxu0
        %v1196 = vadd.f32 0.0, %v1195
        %1197 = vmatmul.f32.gmra.mxu0 %v1158
        %v1198 = vpop.f32.mrf.mxu0
        %v1199 = vadd.f32 0.0, %v1198
        %1200 = vmatmul.f32.gmra.mxu0 %v1161
        %v1201 = vpop.f32.mrf.mxu0
        %v1202 = vadd.f32 0.0, %v1201
        %1203 = vmatmul.f32.gmra.mxu0 %v1164
        %v1204 = vpop.f32.mrf.mxu0
        %v1205 = vadd.f32 0.0, %v1204
        %1206 = vmatmul.f32.gmra.mxu0 %v1167
        %v1207 = vpop.f32.mrf.mxu0
        %v1208 = vadd.f32 0.0, %v1207
        %1209 = vmatmul.f32.gmra.mxu0 %v1170
        %v1210 = vpop.f32.mrf.mxu0
        %v1211 = vadd.f32 0.0, %v1210
        %1212 = vmatmul.f32.gmra.mxu0 %v1173
        %v1213 = vpop.f32.mrf.mxu0
        %v1214 = vadd.f32 0.0, %v1213
        %1215 = vmatmul.f32.gmra.mxu0 %v1176
        %v1216 = vpop.f32.mrf.mxu0
        %v1217 = vadd.f32 0.0, %v1216
        %1218 = vdwg.mxu0
        %v1219 = vadd.f32 %v1196, 0.0
        %v1220 = vadd.f32 %v1199, 0.0
        %v1221 = vadd.f32 %v1202, 0.0
        %v1222 = vadd.f32 %v1205, 0.0
        %v1223 = vadd.f32 %v1208, 0.0
        %v1224 = vadd.f32 %v1211, 0.0
        %v1225 = vadd.f32 %v1214, 0.0
        %v1226 = vadd.f32 %v1217, 0.0
        %v1227 = vsub.f32 %v464, %v1196
        %v1228 = vsub.f32 %v465, %v1199
        %v1229 = vsub.f32 %v466, %v1202
        %v1230 = vsub.f32 %v467, %v1205
        %v1231 = vsub.f32 %v468, %v1208
        %v1232 = vsub.f32 %v469, %v1211
        %v1233 = vsub.f32 %v470, %v1214
        %v1234 = vsub.f32 %v471, %v1217
        %1235 = vst [vmem:[%s449] sm:$0x1] %v982
        %1236 = vst [vmem:[%s456] sm:$0xff] %v566
        %v1237 = vsub.f32 %v566, %v1119
        %v1238 = vmul.f32 %v1237, %v1237
        %v1239 = vrot.slane %v1238, 4
        %v1240 = vadd.f32 %v1238, %v1239
        %v1241 = vrot.slane %v1240, 2
        %v1242 = vadd.f32 %v1240, %v1241
        %v1243 = vrot.slane %v1242, 1
        %v1244 = vadd.f32 %v1242, %v1243
        %1245 = vst [vmem:[%s463] sm:$0x1] %v1244
        %s1246 = scalar_lea.vmem %s1, 8
        %v1247 = vld [vmem:[%s1246] sm:$0xff]
        %s1248 = scalar_lea.vmem %s2, 8
        %v1249 = vld [vmem:[%s1248] sm:$0xff]
        %1251 = vset.pattern.permute.xlu0 0
        %1252 = vperm.xlu0 %1251, %v1249
        %v1253 = vpop.permute.xlu0 %1252
        %v1256 = vsel %vm544, %v1247, 0
        %1258 = vmatpush.msra.mxu0 0.0
        %1259 = vmatpush.msra.mxu0 0.0
        %1260 = vmatpush.msra.mxu0 0.0
        %1261 = vmatpush.msra.mxu0 0.0
        %1262 = vmatpush.msra.mxu0 0.0
        %1263 = vmatpush.msra.mxu0 0.0
        %1264 = vmatpush.msra.mxu0 0.0
        %1265 = vmatpush.msra.mxu0 0.0
        %1266 = vmatpush.msra.mxu0 %v1234
        %1267 = vmatpush.msra.mxu0 %v1233
        %1268 = vmatpush.msra.mxu0 %v1232
        %1269 = vmatpush.msra.mxu0 %v1231
        %1270 = vmatpush.msra.mxu0 %v1230
        %1271 = vmatpush.msra.mxu0 %v1229
        %1272 = vmatpush.msra.mxu0 %v1228
        %1273 = vmatpush.msra.mxu0 %v1227
        %1274 = vmatmul.f32.gmra.mxu0 %v1256
        %v1275 = vpop.f32.mrf.mxu0
        %v1276 = vadd.f32 %v1253, %v1275
        %1277 = vdwg.mxu0
        %s1278 = scalar_lea.vmem %s3, 16
        %v1279 = vld [vmem:[%s1278] sm:$0xff]
        %v1280 = vld [vmem:[%s1278 + $0x8] sm:$0xff]
        %1281 = vxpose.xlu0.b32.start [1/16] %v1279, 128
        %1282 = vxpose.xlu0.b32.cont [2/16] 0.0, 128
        %1283 = vxpose.xlu0.b32.cont [3/16] 0.0, 128
        %1284 = vxpose.xlu0.b32.cont [4/16] 0.0, 128
        %1285 = vxpose.xlu0.b32.cont [5/16] 0.0, 128
        %1286 = vxpose.xlu0.b32.cont [6/16] 0.0, 128
        %1287 = vxpose.xlu0.b32.cont [7/16] 0.0, 128
        %1288 = vxpose.xlu0.b32.cont [8/16] 0.0, 128
        %1289 = vxpose.xlu0.b32.cont [9/16] 0.0, 128
        %1290 = vxpose.xlu0.b32.cont [10/16] 0.0, 128
        %1291 = vxpose.xlu0.b32.cont [11/16] 0.0, 128
        %1292 = vxpose.xlu0.b32.cont [12/16] 0.0, 128
        %1293 = vxpose.xlu0.b32.cont [13/16] 0.0, 128
        %1294 = vxpose.xlu0.b32.cont [14/16] 0.0, 128
        %1295 = vxpose.xlu0.b32.cont [15/16] 0.0, 128
        %1296 = vxpose.xlu0.b32.end [16/16] 0.0, 128
        %v1297 = vpop.trf.xlu0
        %v1298 = vpop.trf.xlu0
        %v1299 = vpop.trf.xlu0
        %v1300 = vpop.trf.xlu0
        %v1301 = vpop.trf.xlu0
        %v1302 = vpop.trf.xlu0
        %v1303 = vpop.trf.xlu0
        %v1304 = vpop.trf.xlu0
        %v1305 = vpop.trf.xlu0
        %v1306 = vpop.trf.xlu0
        %v1307 = vpop.trf.xlu0
        %v1308 = vpop.trf.xlu0
        %v1309 = vpop.trf.xlu0
        %v1310 = vpop.trf.xlu0
        %v1311 = vpop.trf.xlu0
        %v1312 = vpop.trf.xlu0
        %1313 = vxpose.xlu0.b32.start [1/16] %v1280, 128
        %1314 = vxpose.xlu0.b32.cont [2/16] 0.0, 128
        %1315 = vxpose.xlu0.b32.cont [3/16] 0.0, 128
        %1316 = vxpose.xlu0.b32.cont [4/16] 0.0, 128
        %1317 = vxpose.xlu0.b32.cont [5/16] 0.0, 128
        %1318 = vxpose.xlu0.b32.cont [6/16] 0.0, 128
        %1319 = vxpose.xlu0.b32.cont [7/16] 0.0, 128
        %1320 = vxpose.xlu0.b32.cont [8/16] 0.0, 128
        %1321 = vxpose.xlu0.b32.cont [9/16] 0.0, 128
        %1322 = vxpose.xlu0.b32.cont [10/16] 0.0, 128
        %1323 = vxpose.xlu0.b32.cont [11/16] 0.0, 128
        %1324 = vxpose.xlu0.b32.cont [12/16] 0.0, 128
        %1325 = vxpose.xlu0.b32.cont [13/16] 0.0, 128
        %1326 = vxpose.xlu0.b32.cont [14/16] 0.0, 128
        %1327 = vxpose.xlu0.b32.cont [15/16] 0.0, 128
        %1328 = vxpose.xlu0.b32.end [16/16] 0.0, 128
        %v1329 = vpop.trf.xlu0
        %v1330 = vpop.trf.xlu0
        %v1331 = vpop.trf.xlu0
        %v1332 = vpop.trf.xlu0
        %v1333 = vpop.trf.xlu0
        %v1334 = vpop.trf.xlu0
        %v1335 = vpop.trf.xlu0
        %v1336 = vpop.trf.xlu0
        %v1337 = vpop.trf.xlu0
        %v1338 = vpop.trf.xlu0
        %v1339 = vpop.trf.xlu0
        %v1340 = vpop.trf.xlu0
        %v1341 = vpop.trf.xlu0
        %v1342 = vpop.trf.xlu0
        %v1343 = vpop.trf.xlu0
        %v1344 = vpop.trf.xlu0
        %v1346 = vsel %vm634, %v1297, 0
        %v1349 = vsel %vm634, %v1298, 0
        %v1352 = vsel %vm634, %v1299, 0
        %v1355 = vsel %vm634, %v1300, 0
        %v1358 = vsel %vm634, %v1301, 0
        %v1361 = vsel %vm634, %v1302, 0
        %v1364 = vsel %vm634, %v1303, 0
        %v1367 = vsel %vm634, %v1304, 0
        %v1370 = vsel %vm634, %v1305, 0
        %v1373 = vsel %vm634, %v1306, 0
        %v1376 = vsel %vm634, %v1307, 0
        %v1379 = vsel %vm634, %v1308, 0
        %v1382 = vsel %vm634, %v1309, 0
        %v1385 = vsel %vm634, %v1310, 0
        %v1388 = vsel %vm634, %v1311, 0
        %v1391 = vsel %vm634, %v1312, 0
        %v1394 = vsel %vm634, %v1329, 0
        %v1397 = vsel %vm634, %v1330, 0
        %v1400 = vsel %vm634, %v1331, 0
        %v1403 = vsel %vm634, %v1332, 0
        %v1406 = vsel %vm634, %v1333, 0
        %v1409 = vsel %vm634, %v1334, 0
        %v1412 = vsel %vm634, %v1335, 0
        %v1415 = vsel %vm634, %v1336, 0
        %v1418 = vsel %vm634, %v1337, 0
        %v1421 = vsel %vm634, %v1338, 0
        %v1424 = vsel %vm634, %v1339, 0
        %v1427 = vsel %vm634, %v1340, 0
        %v1430 = vsel %vm634, %v1341, 0
        %v1433 = vsel %vm634, %v1342, 0
        %v1436 = vsel %vm634, %v1343, 0
        %v1439 = vsel %vm634, %v1344, 0
        %1441 = vmatpush.msra.mxu0 0.0
        %1442 = vmatpush.msra.mxu0 0.0
        %1443 = vmatpush.msra.mxu0 0.0
        %1444 = vmatpush.msra.mxu0 0.0
        %1445 = vmatpush.msra.mxu0 0.0
        %1446 = vmatpush.msra.mxu0 0.0
        %1447 = vmatpush.msra.mxu0 0.0
        %1448 = vmatpush.msra.mxu0 0.0
        %1449 = vmatpush.msra.mxu0 0.0
        %1450 = vmatpush.msra.mxu0 0.0
        %1451 = vmatpush.msra.mxu0 0.0
        %1452 = vmatpush.msra.mxu0 0.0
        %1453 = vmatpush.msra.mxu0 0.0
        %1454 = vmatpush.msra.mxu0 0.0
        %1455 = vmatpush.msra.mxu0 0.0
        %1456 = vmatpush.msra.mxu0 %v1276
        %1457 = vmatmul.f32.gmra.mxu0 %v1346
        %v1458 = vpop.f32.mrf.mxu0
        %v1459 = vadd.f32 0.0, %v1458
        %1460 = vmatmul.f32.gmra.mxu0 %v1349
        %v1461 = vpop.f32.mrf.mxu0
        %v1462 = vadd.f32 0.0, %v1461
        %1463 = vmatmul.f32.gmra.mxu0 %v1352
        %v1464 = vpop.f32.mrf.mxu0
        %v1465 = vadd.f32 0.0, %v1464
        %1466 = vmatmul.f32.gmra.mxu0 %v1355
        %v1467 = vpop.f32.mrf.mxu0
        %v1468 = vadd.f32 0.0, %v1467
        %1469 = vmatmul.f32.gmra.mxu0 %v1358
        %v1470 = vpop.f32.mrf.mxu0
        %v1471 = vadd.f32 0.0, %v1470
        %1472 = vmatmul.f32.gmra.mxu0 %v1361
        %v1473 = vpop.f32.mrf.mxu0
        %v1474 = vadd.f32 0.0, %v1473
        %1475 = vmatmul.f32.gmra.mxu0 %v1364
        %v1476 = vpop.f32.mrf.mxu0
        %v1477 = vadd.f32 0.0, %v1476
        %1478 = vmatmul.f32.gmra.mxu0 %v1367
        %v1479 = vpop.f32.mrf.mxu0
        %v1480 = vadd.f32 0.0, %v1479
        %1481 = vmatmul.f32.gmra.mxu0 %v1370
        %v1482 = vpop.f32.mrf.mxu0
        %v1483 = vadd.f32 0.0, %v1482
        %1484 = vmatmul.f32.gmra.mxu0 %v1373
        %v1485 = vpop.f32.mrf.mxu0
        %v1486 = vadd.f32 0.0, %v1485
        %1487 = vmatmul.f32.gmra.mxu0 %v1376
        %v1488 = vpop.f32.mrf.mxu0
        %v1489 = vadd.f32 0.0, %v1488
        %1490 = vmatmul.f32.gmra.mxu0 %v1379
        %v1491 = vpop.f32.mrf.mxu0
        %v1492 = vadd.f32 0.0, %v1491
        %1493 = vmatmul.f32.gmra.mxu0 %v1382
        %v1494 = vpop.f32.mrf.mxu0
        %v1495 = vadd.f32 0.0, %v1494
        %1496 = vmatmul.f32.gmra.mxu0 %v1385
        %v1497 = vpop.f32.mrf.mxu0
        %v1498 = vadd.f32 0.0, %v1497
        %1499 = vmatmul.f32.gmra.mxu0 %v1388
        %v1500 = vpop.f32.mrf.mxu0
        %v1501 = vadd.f32 0.0, %v1500
        %1502 = vmatmul.f32.gmra.mxu0 %v1391
        %v1503 = vpop.f32.mrf.mxu0
        %v1504 = vadd.f32 0.0, %v1503
        %1505 = vmatmul.f32.gmra.mxu0 %v1394
        %v1506 = vpop.f32.mrf.mxu0
        %v1507 = vadd.f32 0.0, %v1506
        %1508 = vmatmul.f32.gmra.mxu0 %v1397
        %v1509 = vpop.f32.mrf.mxu0
        %v1510 = vadd.f32 0.0, %v1509
        %1511 = vmatmul.f32.gmra.mxu0 %v1400
        %v1512 = vpop.f32.mrf.mxu0
        %v1513 = vadd.f32 0.0, %v1512
        %1514 = vmatmul.f32.gmra.mxu0 %v1403
        %v1515 = vpop.f32.mrf.mxu0
        %v1516 = vadd.f32 0.0, %v1515
        %1517 = vmatmul.f32.gmra.mxu0 %v1406
        %v1518 = vpop.f32.mrf.mxu0
        %v1519 = vadd.f32 0.0, %v1518
        %1520 = vmatmul.f32.gmra.mxu0 %v1409
        %v1521 = vpop.f32.mrf.mxu0
        %v1522 = vadd.f32 0.0, %v1521
        %1523 = vmatmul.f32.gmra.mxu0 %v1412
        %v1524 = vpop.f32.mrf.mxu0
        %v1525 = vadd.f32 0.0, %v1524
        %1526 = vmatmul.f32.gmra.mxu0 %v1415
        %v1527 = vpop.f32.mrf.mxu0
        %v1528 = vadd.f32 0.0, %v1527
        %1529 = vmatmul.f32.gmra.mxu0 %v1418
        %v1530 = vpop.f32.mrf.mxu0
        %v1531 = vadd.f32 0.0, %v1530
        %1532 = vmatmul.f32.gmra.mxu0 %v1421
        %v1533 = vpop.f32.mrf.mxu0
        %v1534 = vadd.f32 0.0, %v1533
        %1535 = vmatmul.f32.gmra.mxu0 %v1424
        %v1536 = vpop.f32.mrf.mxu0
        %v1537 = vadd.f32 0.0, %v1536
        %1538 = vmatmul.f32.gmra.mxu0 %v1427
        %v1539 = vpop.f32.mrf.mxu0
        %v1540 = vadd.f32 0.0, %v1539
        %1541 = vmatmul.f32.gmra.mxu0 %v1430
        %v1542 = vpop.f32.mrf.mxu0
        %v1543 = vadd.f32 0.0, %v1542
        %1544 = vmatmul.f32.gmra.mxu0 %v1433
        %v1545 = vpop.f32.mrf.mxu0
        %v1546 = vadd.f32 0.0, %v1545
        %1547 = vmatmul.f32.gmra.mxu0 %v1436
        %v1548 = vpop.f32.mrf.mxu0
        %v1549 = vadd.f32 0.0, %v1548
        %1550 = vmatmul.f32.gmra.mxu0 %v1439
        %v1551 = vpop.f32.mrf.mxu0
        %v1552 = vadd.f32 0.0, %v1551
        %1553 = vdwg.mxu0
        %v1554 = vmax.f32 %v1459, %v1471
        %v1555 = vmax.f32 %v1462, %v1474
        %v1556 = vmax.f32 %v1465, %v1477
        %v1557 = vmax.f32 %v1468, %v1480
        %v1558 = vmax.f32 %v1554, %v1483
        %v1559 = vmax.f32 %v1555, %v1486
        %v1560 = vmax.f32 %v1556, %v1489
        %v1561 = vmax.f32 %v1557, %v1492
        %v1562 = vmax.f32 %v1558, %v1495
        %v1563 = vmax.f32 %v1559, %v1498
        %v1564 = vmax.f32 %v1560, %v1501
        %v1565 = vmax.f32 %v1561, %v1504
        %v1566 = vmax.f32 %v1562, %v1507
        %v1567 = vmax.f32 %v1563, %v1510
        %v1568 = vmax.f32 %v1564, %v1513
        %v1569 = vmax.f32 %v1565, %v1516
        %v1570 = vmax.f32 %v1566, %v1519
        %v1571 = vmax.f32 %v1567, %v1522
        %v1572 = vmax.f32 %v1568, %v1525
        %v1573 = vmax.f32 %v1569, %v1528
        %v1574 = vmax.f32 %v1570, %v1531
        %v1575 = vmax.f32 %v1571, %v1534
        %v1576 = vmax.f32 %v1572, %v1537
        %v1577 = vmax.f32 %v1573, %v1540
        %v1578 = vmax.f32 %v1574, %v1543
        %v1579 = vmax.f32 %v1575, %v1546
        %v1580 = vmax.f32 %v1576, %v1549
        %v1581 = vmax.f32 %v1577, %v1552
        %v1582 = vmax.f32 %v1578, %v1579
        %v1583 = vmax.f32 %v1580, %v1581
        %v1584 = vmax.f32 %v1582, %v1583
        %v1585 = vrot.slane %v1584, 4
        %v1586 = vmax.f32 %v1584, %v1585
        %v1587 = vrot.slane %v1586, 2
        %v1588 = vmax.f32 %v1586, %v1587
        %v1589 = vrot.slane %v1588, 1
        %v1590 = vmax.f32 %v1588, %v1589
        %vm1591 = vcmp.eq.f32.partialorder %v1459, %v1590
        %vm1592 = vcmp.eq.f32.partialorder %v1462, %v1590
        %vm1593 = vcmp.eq.f32.partialorder %v1465, %v1590
        %vm1594 = vcmp.eq.f32.partialorder %v1468, %v1590
        %vm1595 = vcmp.eq.f32.partialorder %v1471, %v1590
        %vm1596 = vcmp.eq.f32.partialorder %v1474, %v1590
        %vm1597 = vcmp.eq.f32.partialorder %v1477, %v1590
        %vm1598 = vcmp.eq.f32.partialorder %v1480, %v1590
        %vm1599 = vcmp.eq.f32.partialorder %v1483, %v1590
        %vm1600 = vcmp.eq.f32.partialorder %v1486, %v1590
        %vm1601 = vcmp.eq.f32.partialorder %v1489, %v1590
        %vm1602 = vcmp.eq.f32.partialorder %v1492, %v1590
        %vm1603 = vcmp.eq.f32.partialorder %v1495, %v1590
        %vm1604 = vcmp.eq.f32.partialorder %v1498, %v1590
        %vm1605 = vcmp.eq.f32.partialorder %v1501, %v1590
        %vm1606 = vcmp.eq.f32.partialorder %v1504, %v1590
        %vm1607 = vcmp.eq.f32.partialorder %v1507, %v1590
        %vm1608 = vcmp.eq.f32.partialorder %v1510, %v1590
        %vm1609 = vcmp.eq.f32.partialorder %v1513, %v1590
        %vm1610 = vcmp.eq.f32.partialorder %v1516, %v1590
        %vm1611 = vcmp.eq.f32.partialorder %v1519, %v1590
        %vm1612 = vcmp.eq.f32.partialorder %v1522, %v1590
        %vm1613 = vcmp.eq.f32.partialorder %v1525, %v1590
        %vm1614 = vcmp.eq.f32.partialorder %v1528, %v1590
        %vm1615 = vcmp.eq.f32.partialorder %v1531, %v1590
        %vm1616 = vcmp.eq.f32.partialorder %v1534, %v1590
        %vm1617 = vcmp.eq.f32.partialorder %v1537, %v1590
        %vm1618 = vcmp.eq.f32.partialorder %v1540, %v1590
        %vm1619 = vcmp.eq.f32.partialorder %v1543, %v1590
        %vm1620 = vcmp.eq.f32.partialorder %v1546, %v1590
        %vm1621 = vcmp.eq.f32.partialorder %v1549, %v1590
        %vm1622 = vcmp.eq.f32.partialorder %v1552, %v1590
        %v1623 = vsel %vm1591, %v505, 256.0
        %v1624 = vsel %vm1592, %v506, 256.0
        %v1625 = vsel %vm1593, %v507, 256.0
        %v1626 = vsel %vm1594, %v508, 256.0
        %v1627 = vsel %vm1595, %v509, 256.0
        %v1628 = vsel %vm1596, %v510, 256.0
        %v1629 = vsel %vm1597, %v511, 256.0
        %v1630 = vsel %vm1598, %v512, 256.0
        %v1631 = vsel %vm1599, %v513, 256.0
        %v1632 = vsel %vm1600, %v514, 256.0
        %v1633 = vsel %vm1601, %v515, 256.0
        %v1634 = vsel %vm1602, %v516, 256.0
        %v1635 = vsel %vm1603, %v517, 256.0
        %v1636 = vsel %vm1604, %v518, 256.0
        %v1637 = vsel %vm1605, %v519, 256.0
        %v1638 = vsel %vm1606, %v520, 256.0
        %v1639 = vsel %vm1607, %v521, 256.0
        %v1640 = vsel %vm1608, %v522, 256.0
        %v1641 = vsel %vm1609, %v523, 256.0
        %v1642 = vsel %vm1610, %v524, 256.0
        %v1643 = vsel %vm1611, %v525, 256.0
        %v1644 = vsel %vm1612, %v526, 256.0
        %v1645 = vsel %vm1613, %v527, 256.0
        %v1646 = vsel %vm1614, %v528, 256.0
        %v1647 = vsel %vm1615, %v529, 256.0
        %v1648 = vsel %vm1616, %v530, 256.0
        %v1649 = vsel %vm1617, %v531, 256.0
        %v1650 = vsel %vm1618, %v532, 256.0
        %v1651 = vsel %vm1619, %v533, 256.0
        %v1652 = vsel %vm1620, %v534, 256.0
        %v1653 = vsel %vm1621, %v535, 256.0
        %v1654 = vsel %vm1622, %v536, 256.0
        %v1655 = vmin.f32 %v1623, %v1627
        %v1656 = vmin.f32 %v1624, %v1628
        %v1657 = vmin.f32 %v1625, %v1629
        %v1658 = vmin.f32 %v1626, %v1630
        %v1659 = vmin.f32 %v1655, %v1631
        %v1660 = vmin.f32 %v1656, %v1632
        %v1661 = vmin.f32 %v1657, %v1633
        %v1662 = vmin.f32 %v1658, %v1634
        %v1663 = vmin.f32 %v1659, %v1635
        %v1664 = vmin.f32 %v1660, %v1636
        %v1665 = vmin.f32 %v1661, %v1637
        %v1666 = vmin.f32 %v1662, %v1638
        %v1667 = vmin.f32 %v1663, %v1639
        %v1668 = vmin.f32 %v1664, %v1640
        %v1669 = vmin.f32 %v1665, %v1641
        %v1670 = vmin.f32 %v1666, %v1642
        %v1671 = vmin.f32 %v1667, %v1643
        %v1672 = vmin.f32 %v1668, %v1644
        %v1673 = vmin.f32 %v1669, %v1645
        %v1674 = vmin.f32 %v1670, %v1646
        %v1675 = vmin.f32 %v1671, %v1647
        %v1676 = vmin.f32 %v1672, %v1648
        %v1677 = vmin.f32 %v1673, %v1649
        %v1678 = vmin.f32 %v1674, %v1650
        %v1679 = vmin.f32 %v1675, %v1651
        %v1680 = vmin.f32 %v1676, %v1652
        %v1681 = vmin.f32 %v1677, %v1653
        %v1682 = vmin.f32 %v1678, %v1654
        %v1683 = vmin.f32 %v1679, %v1680
        %v1684 = vmin.f32 %v1681, %v1682
        %v1685 = vmin.f32 %v1683, %v1684
        %v1686 = vrot.slane %v1685, 4
        %v1687 = vmin.f32 %v1685, %v1686
        %v1688 = vrot.slane %v1687, 2
        %v1689 = vmin.f32 %v1687, %v1688
        %v1690 = vrot.slane %v1689, 1
        %v1691 = vmin.f32 %v1689, %v1690
        %v1692 = vcvt.f32.s32.to.zero.pseudo %v1691
        %vm1693 = vcmp.eq.s32.totalorder %v473, %v1692
        %vm1694 = vcmp.eq.s32.totalorder %v474, %v1692
        %vm1695 = vcmp.eq.s32.totalorder %v475, %v1692
        %vm1696 = vcmp.eq.s32.totalorder %v476, %v1692
        %vm1697 = vcmp.eq.s32.totalorder %v477, %v1692
        %vm1698 = vcmp.eq.s32.totalorder %v478, %v1692
        %vm1699 = vcmp.eq.s32.totalorder %v479, %v1692
        %vm1700 = vcmp.eq.s32.totalorder %v480, %v1692
        %vm1701 = vcmp.eq.s32.totalorder %v481, %v1692
        %vm1702 = vcmp.eq.s32.totalorder %v482, %v1692
        %vm1703 = vcmp.eq.s32.totalorder %v483, %v1692
        %vm1704 = vcmp.eq.s32.totalorder %v484, %v1692
        %vm1705 = vcmp.eq.s32.totalorder %v485, %v1692
        %vm1706 = vcmp.eq.s32.totalorder %v486, %v1692
        %vm1707 = vcmp.eq.s32.totalorder %v487, %v1692
        %vm1708 = vcmp.eq.s32.totalorder %v488, %v1692
        %vm1709 = vcmp.eq.s32.totalorder %v489, %v1692
        %vm1710 = vcmp.eq.s32.totalorder %v490, %v1692
        %vm1711 = vcmp.eq.s32.totalorder %v491, %v1692
        %vm1712 = vcmp.eq.s32.totalorder %v492, %v1692
        %vm1713 = vcmp.eq.s32.totalorder %v493, %v1692
        %vm1714 = vcmp.eq.s32.totalorder %v494, %v1692
        %vm1715 = vcmp.eq.s32.totalorder %v495, %v1692
        %vm1716 = vcmp.eq.s32.totalorder %v496, %v1692
        %vm1717 = vcmp.eq.s32.totalorder %v497, %v1692
        %vm1718 = vcmp.eq.s32.totalorder %v498, %v1692
        %vm1719 = vcmp.eq.s32.totalorder %v499, %v1692
        %vm1720 = vcmp.eq.s32.totalorder %v500, %v1692
        %vm1721 = vcmp.eq.s32.totalorder %v501, %v1692
        %vm1722 = vcmp.eq.s32.totalorder %v502, %v1692
        %vm1723 = vcmp.eq.s32.totalorder %v503, %v1692
        %vm1724 = vcmp.eq.s32.totalorder %v504, %v1692
        %v1725 = vsel %vm1693, 1, 0
        %v1726 = vsel %vm1694, 1, 0
        %v1727 = vsel %vm1695, 1, 0
        %v1728 = vsel %vm1696, 1, 0
        %v1729 = vsel %vm1697, 1, 0
        %v1730 = vsel %vm1698, 1, 0
        %v1731 = vsel %vm1699, 1, 0
        %v1732 = vsel %vm1700, 1, 0
        %v1733 = vsel %vm1701, 1, 0
        %v1734 = vsel %vm1702, 1, 0
        %v1735 = vsel %vm1703, 1, 0
        %v1736 = vsel %vm1704, 1, 0
        %v1737 = vsel %vm1705, 1, 0
        %v1738 = vsel %vm1706, 1, 0
        %v1739 = vsel %vm1707, 1, 0
        %v1740 = vsel %vm1708, 1, 0
        %v1741 = vsel %vm1709, 1, 0
        %v1742 = vsel %vm1710, 1, 0
        %v1743 = vsel %vm1711, 1, 0
        %v1744 = vsel %vm1712, 1, 0
        %v1745 = vsel %vm1713, 1, 0
        %v1746 = vsel %vm1714, 1, 0
        %v1747 = vsel %vm1715, 1, 0
        %v1748 = vsel %vm1716, 1, 0
        %v1749 = vsel %vm1717, 1, 0
        %v1750 = vsel %vm1718, 1, 0
        %v1751 = vsel %vm1719, 1, 0
        %v1752 = vsel %vm1720, 1, 0
        %v1753 = vsel %vm1721, 1, 0
        %v1754 = vsel %vm1722, 1, 0
        %v1755 = vsel %vm1723, 1, 0
        %v1756 = vsel %vm1724, 1, 0
        %v1757 = vcvt.s32.f32 %v1725
        %v1758 = vcvt.s32.f32 %v1726
        %v1759 = vcvt.s32.f32 %v1727
        %v1760 = vcvt.s32.f32 %v1728
        %v1761 = vcvt.s32.f32 %v1729
        %v1762 = vcvt.s32.f32 %v1730
        %v1763 = vcvt.s32.f32 %v1731
        %v1764 = vcvt.s32.f32 %v1732
        %v1765 = vcvt.s32.f32 %v1733
        %v1766 = vcvt.s32.f32 %v1734
        %v1767 = vcvt.s32.f32 %v1735
        %v1768 = vcvt.s32.f32 %v1736
        %v1769 = vcvt.s32.f32 %v1737
        %v1770 = vcvt.s32.f32 %v1738
        %v1771 = vcvt.s32.f32 %v1739
        %v1772 = vcvt.s32.f32 %v1740
        %v1773 = vcvt.s32.f32 %v1741
        %v1774 = vcvt.s32.f32 %v1742
        %v1775 = vcvt.s32.f32 %v1743
        %v1776 = vcvt.s32.f32 %v1744
        %v1777 = vcvt.s32.f32 %v1745
        %v1778 = vcvt.s32.f32 %v1746
        %v1779 = vcvt.s32.f32 %v1747
        %v1780 = vcvt.s32.f32 %v1748
        %v1781 = vcvt.s32.f32 %v1749
        %v1782 = vcvt.s32.f32 %v1750
        %v1783 = vcvt.s32.f32 %v1751
        %v1784 = vcvt.s32.f32 %v1752
        %v1785 = vcvt.s32.f32 %v1753
        %v1786 = vcvt.s32.f32 %v1754
        %v1787 = vcvt.s32.f32 %v1755
        %v1788 = vcvt.s32.f32 %v1756
        %s1789 = scalar_lea.vmem [#allocation5], 16
        %v1790 = vld [vmem:[%s1789] sm:$0xff]
        %v1791 = vld [vmem:[%s1789 + $0x8] sm:$0xff]
        %1792 = vmatpush.msra.mxu0 %v1772
        %1793 = vmatpush.msra.mxu0 %v1771
        %1794 = vmatpush.msra.mxu0 %v1770
        %1795 = vmatpush.msra.mxu0 %v1769
        %1796 = vmatpush.msra.mxu0 %v1768
        %1797 = vmatpush.msra.mxu0 %v1767
        %1798 = vmatpush.msra.mxu0 %v1766
        %1799 = vmatpush.msra.mxu0 %v1765
        %1800 = vmatpush.msra.mxu0 %v1764
        %1801 = vmatpush.msra.mxu0 %v1763
        %1802 = vmatpush.msra.mxu0 %v1762
        %1803 = vmatpush.msra.mxu0 %v1761
        %1804 = vmatpush.msra.mxu0 %v1760
        %1805 = vmatpush.msra.mxu0 %v1759
        %1806 = vmatpush.msra.mxu0 %v1758
        %1807 = vmatpush.msra.mxu0 %v1757
        %1808 = vmatmul.f32.gmra.mxu0 %v1790
        %v1809 = vpop.f32.mrf.mxu0
        %v1810 = vadd.f32 0.0, %v1809
        %1811 = vdwg.mxu0
        %1812 = vmatpush.msra.mxu0 %v1788
        %1813 = vmatpush.msra.mxu0 %v1787
        %1814 = vmatpush.msra.mxu0 %v1786
        %1815 = vmatpush.msra.mxu0 %v1785
        %1816 = vmatpush.msra.mxu0 %v1784
        %1817 = vmatpush.msra.mxu0 %v1783
        %1818 = vmatpush.msra.mxu0 %v1782
        %1819 = vmatpush.msra.mxu0 %v1781
        %1820 = vmatpush.msra.mxu0 %v1780
        %1821 = vmatpush.msra.mxu0 %v1779
        %1822 = vmatpush.msra.mxu0 %v1778
        %1823 = vmatpush.msra.mxu0 %v1777
        %1824 = vmatpush.msra.mxu0 %v1776
        %1825 = vmatpush.msra.mxu0 %v1775
        %1826 = vmatpush.msra.mxu0 %v1774
        %1827 = vmatpush.msra.mxu0 %v1773
        %1828 = vmatmul.f32.gmra.mxu0 %v1791
        %v1829 = vpop.f32.mrf.mxu0
        %v1830 = vadd.f32 %v1810, %v1829
        %1831 = vdwg.mxu0
        %s1832 = scalar_lea.vmem [#allocation7], 8
        %v1833 = vld [vmem:[%s1832] sm:$0xff]
        %1834 = vxpose.xlu0.b32.start [1/16] %v1833, 128
        %1835 = vxpose.xlu0.b32.cont [2/16] 0.0, 128
        %1836 = vxpose.xlu0.b32.cont [3/16] 0.0, 128
        %1837 = vxpose.xlu0.b32.cont [4/16] 0.0, 128
        %1838 = vxpose.xlu0.b32.cont [5/16] 0.0, 128
        %1839 = vxpose.xlu0.b32.cont [6/16] 0.0, 128
        %1840 = vxpose.xlu0.b32.cont [7/16] 0.0, 128
        %1841 = vxpose.xlu0.b32.cont [8/16] 0.0, 128
        %1842 = vxpose.xlu0.b32.cont [9/16] 0.0, 128
        %1843 = vxpose.xlu0.b32.cont [10/16] 0.0, 128
        %1844 = vxpose.xlu0.b32.cont [11/16] 0.0, 128
        %1845 = vxpose.xlu0.b32.cont [12/16] 0.0, 128
        %1846 = vxpose.xlu0.b32.cont [13/16] 0.0, 128
        %1847 = vxpose.xlu0.b32.cont [14/16] 0.0, 128
        %1848 = vxpose.xlu0.b32.cont [15/16] 0.0, 128
        %1849 = vxpose.xlu0.b32.end [16/16] 0.0, 128
        %v1850 = vpop.trf.xlu0
        %v1851 = vpop.trf.xlu0
        %v1852 = vpop.trf.xlu0
        %v1853 = vpop.trf.xlu0
        %v1854 = vpop.trf.xlu0
        %v1855 = vpop.trf.xlu0
        %v1856 = vpop.trf.xlu0
        %v1857 = vpop.trf.xlu0
        %v1858 = vpop.trf.xlu0
        %v1859 = vpop.trf.xlu0
        %v1860 = vpop.trf.xlu0
        %v1861 = vpop.trf.xlu0
        %v1862 = vpop.trf.xlu0
        %v1863 = vpop.trf.xlu0
        %v1864 = vpop.trf.xlu0
        %v1865 = vpop.trf.xlu0
        %v1867 = vsel %vm634, %v1850, 0
        %v1870 = vsel %vm634, %v1851, 0
        %v1873 = vsel %vm634, %v1852, 0
        %v1876 = vsel %vm634, %v1853, 0
        %v1879 = vsel %vm634, %v1854, 0
        %v1882 = vsel %vm634, %v1855, 0
        %v1885 = vsel %vm634, %v1856, 0
        %v1888 = vsel %vm634, %v1857, 0
        %1890 = vmatpush.msra.mxu0 0.0
        %1891 = vmatpush.msra.mxu0 0.0
        %1892 = vmatpush.msra.mxu0 0.0
        %1893 = vmatpush.msra.mxu0 0.0
        %1894 = vmatpush.msra.mxu0 0.0
        %1895 = vmatpush.msra.mxu0 0.0
        %1896 = vmatpush.msra.mxu0 0.0
        %1897 = vmatpush.msra.mxu0 0.0
        %1898 = vmatpush.msra.mxu0 0.0
        %1899 = vmatpush.msra.mxu0 0.0
        %1900 = vmatpush.msra.mxu0 0.0
        %1901 = vmatpush.msra.mxu0 0.0
        %1902 = vmatpush.msra.mxu0 0.0
        %1903 = vmatpush.msra.mxu0 0.0
        %1904 = vmatpush.msra.mxu0 0.0
        %1905 = vmatpush.msra.mxu0 %v1830
        %1906 = vmatmul.f32.gmra.mxu0 %v1867
        %v1907 = vpop.f32.mrf.mxu0
        %v1908 = vadd.f32 0.0, %v1907
        %1909 = vmatmul.f32.gmra.mxu0 %v1870
        %v1910 = vpop.f32.mrf.mxu0
        %v1911 = vadd.f32 0.0, %v1910
        %1912 = vmatmul.f32.gmra.mxu0 %v1873
        %v1913 = vpop.f32.mrf.mxu0
        %v1914 = vadd.f32 0.0, %v1913
        %1915 = vmatmul.f32.gmra.mxu0 %v1876
        %v1916 = vpop.f32.mrf.mxu0
        %v1917 = vadd.f32 0.0, %v1916
        %1918 = vmatmul.f32.gmra.mxu0 %v1879
        %v1919 = vpop.f32.mrf.mxu0
        %v1920 = vadd.f32 0.0, %v1919
        %1921 = vmatmul.f32.gmra.mxu0 %v1882
        %v1922 = vpop.f32.mrf.mxu0
        %v1923 = vadd.f32 0.0, %v1922
        %1924 = vmatmul.f32.gmra.mxu0 %v1885
        %v1925 = vpop.f32.mrf.mxu0
        %v1926 = vadd.f32 0.0, %v1925
        %1927 = vmatmul.f32.gmra.mxu0 %v1888
        %v1928 = vpop.f32.mrf.mxu0
        %v1929 = vadd.f32 0.0, %v1928
        %1930 = vdwg.mxu0
        %v1931 = vadd.f32 %v1219, %v1908
        %v1932 = vadd.f32 %v1220, %v1911
        %v1933 = vadd.f32 %v1221, %v1914
        %v1934 = vadd.f32 %v1222, %v1917
        %v1935 = vadd.f32 %v1223, %v1920
        %v1936 = vadd.f32 %v1224, %v1923
        %v1937 = vadd.f32 %v1225, %v1926
        %v1938 = vadd.f32 %v1226, %v1929
        %v1939 = vsub.f32 %v1227, %v1908
        %v1940 = vsub.f32 %v1228, %v1911
        %v1941 = vsub.f32 %v1229, %v1914
        %v1942 = vsub.f32 %v1230, %v1917
        %v1943 = vsub.f32 %v1231, %v1920
        %v1944 = vsub.f32 %v1232, %v1923
        %v1945 = vsub.f32 %v1233, %v1926
        %v1946 = vsub.f32 %v1234, %v1929
        %1947 = vst [vmem:[%s449 + $0x1] sm:$0x1] %v1692
        %1948 = vst [vmem:[%s456 + $0x8] sm:$0xff] %v1276
        %v1949 = vsub.f32 %v1276, %v1830
        %v1950 = vmul.f32 %v1949, %v1949
        %v1951 = vrot.slane %v1950, 4
        %v1952 = vadd.f32 %v1950, %v1951
        %v1953 = vrot.slane %v1952, 2
        %v1954 = vadd.f32 %v1952, %v1953
        %v1955 = vrot.slane %v1954, 1
        %v1956 = vadd.f32 %v1954, %v1955
        %1957 = vst [vmem:[%s463 + $0x1] sm:$0x1] %v1956
        %s1958 = scalar_lea.vmem %s1, 16
        %v1959 = vld [vmem:[%s1958] sm:$0xff]
        %s1960 = scalar_lea.vmem %s2, 16
        %v1961 = vld [vmem:[%s1960] sm:$0xff]
        %1963 = vset.pattern.permute.xlu0 0
        %1964 = vperm.xlu0 %1963, %v1961
        %v1965 = vpop.permute.xlu0 %1964
        %v1968 = vsel %vm544, %v1959, 0
        %1970 = vmatpush.msra.mxu0 0.0
        %1971 = vmatpush.msra.mxu0 0.0
        %1972 = vmatpush.msra.mxu0 0.0
        %1973 = vmatpush.msra.mxu0 0.0
        %1974 = vmatpush.msra.mxu0 0.0
        %1975 = vmatpush.msra.mxu0 0.0
        %1976 = vmatpush.msra.mxu0 0.0
        %1977 = vmatpush.msra.mxu0 0.0
        %1978 = vmatpush.msra.mxu0 %v1946
        %1979 = vmatpush.msra.mxu0 %v1945
        %1980 = vmatpush.msra.mxu0 %v1944
        %1981 = vmatpush.msra.mxu0 %v1943
        %1982 = vmatpush.msra.mxu0 %v1942
        %1983 = vmatpush.msra.mxu0 %v1941
        %1984 = vmatpush.msra.mxu0 %v1940
        %1985 = vmatpush.msra.mxu0 %v1939
        %1986 = vmatmul.f32.gmra.mxu0 %v1968
        %v1987 = vpop.f32.mrf.mxu0
        %v1988 = vadd.f32 %v1965, %v1987
        %1989 = vdwg.mxu0
        %s1990 = scalar_lea.vmem %s3, 32
        %v1991 = vld [vmem:[%s1990] sm:$0xff]
        %v1992 = vld [vmem:[%s1990 + $0x8] sm:$0xff]
        %1993 = vxpose.xlu0.b32.start [1/16] %v1991, 128
        %1994 = vxpose.xlu0.b32.cont [2/16] 0.0, 128
        %1995 = vxpose.xlu0.b32.cont [3/16] 0.0, 128
        %1996 = vxpose.xlu0.b32.cont [4/16] 0.0, 128
        %1997 = vxpose.xlu0.b32.cont [5/16] 0.0, 128
        %1998 = vxpose.xlu0.b32.cont [6/16] 0.0, 128
        %1999 = vxpose.xlu0.b32.cont [7/16] 0.0, 128
        %2000 = vxpose.xlu0.b32.cont [8/16] 0.0, 128
        %2001 = vxpose.xlu0.b32.cont [9/16] 0.0, 128
        %2002 = vxpose.xlu0.b32.cont [10/16] 0.0, 128
        %2003 = vxpose.xlu0.b32.cont [11/16] 0.0, 128
        %2004 = vxpose.xlu0.b32.cont [12/16] 0.0, 128
        %2005 = vxpose.xlu0.b32.cont [13/16] 0.0, 128
        %2006 = vxpose.xlu0.b32.cont [14/16] 0.0, 128
        %2007 = vxpose.xlu0.b32.cont [15/16] 0.0, 128
        %2008 = vxpose.xlu0.b32.end [16/16] 0.0, 128
        %v2009 = vpop.trf.xlu0
        %v2010 = vpop.trf.xlu0
        %v2011 = vpop.trf.xlu0
        %v2012 = vpop.trf.xlu0
        %v2013 = vpop.trf.xlu0
        %v2014 = vpop.trf.xlu0
        %v2015 = vpop.trf.xlu0
        %v2016 = vpop.trf.xlu0
        %v2017 = vpop.trf.xlu0
        %v2018 = vpop.trf.xlu0
        %v2019 = vpop.trf.xlu0
        %v2020 = vpop.trf.xlu0
        %v2021 = vpop.trf.xlu0
        %v2022 = vpop.trf.xlu0
        %v2023 = vpop.trf.xlu0
        %v2024 = vpop.trf.xlu0
        %2025 = vxpose.xlu0.b32.start [1/16] %v1992, 128
        %2026 = vxpose.xlu0.b32.cont [2/16] 0.0, 128
        %2027 = vxpose.xlu0.b32.cont [3/16] 0.0, 128
        %2028 = vxpose.xlu0.b32.cont [4/16] 0.0, 128
        %2029 = vxpose.xlu0.b32.cont [5/16] 0.0, 128
        %2030 = vxpose.xlu0.b32.cont [6/16] 0.0, 128
        %2031 = vxpose.xlu0.b32.cont [7/16] 0.0, 128
        %2032 = vxpose.xlu0.b32.cont [8/16] 0.0, 128
        %2033 = vxpose.xlu0.b32.cont [9/16] 0.0, 128
        %2034 = vxpose.xlu0.b32.cont [10/16] 0.0, 128
        %2035 = vxpose.xlu0.b32.cont [11/16] 0.0, 128
        %2036 = vxpose.xlu0.b32.cont [12/16] 0.0, 128
        %2037 = vxpose.xlu0.b32.cont [13/16] 0.0, 128
        %2038 = vxpose.xlu0.b32.cont [14/16] 0.0, 128
        %2039 = vxpose.xlu0.b32.cont [15/16] 0.0, 128
        %2040 = vxpose.xlu0.b32.end [16/16] 0.0, 128
        %v2041 = vpop.trf.xlu0
        %v2042 = vpop.trf.xlu0
        %v2043 = vpop.trf.xlu0
        %v2044 = vpop.trf.xlu0
        %v2045 = vpop.trf.xlu0
        %v2046 = vpop.trf.xlu0
        %v2047 = vpop.trf.xlu0
        %v2048 = vpop.trf.xlu0
        %v2049 = vpop.trf.xlu0
        %v2050 = vpop.trf.xlu0
        %v2051 = vpop.trf.xlu0
        %v2052 = vpop.trf.xlu0
        %v2053 = vpop.trf.xlu0
        %v2054 = vpop.trf.xlu0
        %v2055 = vpop.trf.xlu0
        %v2056 = vpop.trf.xlu0
        %v2058 = vsel %vm634, %v2009, 0
        %v2061 = vsel %vm634, %v2010, 0
        %v2064 = vsel %vm634, %v2011, 0
        %v2067 = vsel %vm634, %v2012, 0
        %v2070 = vsel %vm634, %v2013, 0
        %v2073 = vsel %vm634, %v2014, 0
        %v2076 = vsel %vm634, %v2015, 0
        %v2079 = vsel %vm634, %v2016, 0
        %v2082 = vsel %vm634, %v2017, 0
        %v2085 = vsel %vm634, %v2018, 0
        %v2088 = vsel %vm634, %v2019, 0
        %v2091 = vsel %vm634, %v2020, 0
        %v2094 = vsel %vm634, %v2021, 0
        %v2097 = vsel %vm634, %v2022, 0
        %v2100 = vsel %vm634, %v2023, 0
        %v2103 = vsel %vm634, %v2024, 0
        %v2106 = vsel %vm634, %v2041, 0
        %v2109 = vsel %vm634, %v2042, 0
        %v2112 = vsel %vm634, %v2043, 0
        %v2115 = vsel %vm634, %v2044, 0
        %v2118 = vsel %vm634, %v2045, 0
        %v2121 = vsel %vm634, %v2046, 0
        %v2124 = vsel %vm634, %v2047, 0
        %v2127 = vsel %vm634, %v2048, 0
        %v2130 = vsel %vm634, %v2049, 0
        %v2133 = vsel %vm634, %v2050, 0
        %v2136 = vsel %vm634, %v2051, 0
        %v2139 = vsel %vm634, %v2052, 0
        %v2142 = vsel %vm634, %v2053, 0
        %v2145 = vsel %vm634, %v2054, 0
        %v2148 = vsel %vm634, %v2055, 0
        %v2151 = vsel %vm634, %v2056, 0
        %2153 = vmatpush.msra.mxu0 0.0
        %2154 = vmatpush.msra.mxu0 0.0
        %2155 = vmatpush.msra.mxu0 0.0
        %2156 = vmatpush.msra.mxu0 0.0
        %2157 = vmatpush.msra.mxu0 0.0
        %2158 = vmatpush.msra.mxu0 0.0
        %2159 = vmatpush.msra.mxu0 0.0
        %2160 = vmatpush.msra.mxu0 0.0
        %2161 = vmatpush.msra.mxu0 0.0
        %2162 = vmatpush.msra.mxu0 0.0
        %2163 = vmatpush.msra.mxu0 0.0
        %2164 = vmatpush.msra.mxu0 0.0
        %2165 = vmatpush.msra.mxu0 0.0
        %2166 = vmatpush.msra.mxu0 0.0
        %2167 = vmatpush.msra.mxu0 0.0
        %2168 = vmatpush.msra.mxu0 %v1988
        %2169 = vmatmul.f32.gmra.mxu0 %v2058
        %v2170 = vpop.f32.mrf.mxu0
        %v2171 = vadd.f32 0.0, %v2170
        %2172 = vmatmul.f32.gmra.mxu0 %v2061
        %v2173 = vpop.f32.mrf.mxu0
        %v2174 = vadd.f32 0.0, %v2173
        %2175 = vmatmul.f32.gmra.mxu0 %v2064
        %v2176 = vpop.f32.mrf.mxu0
        %v2177 = vadd.f32 0.0, %v2176
        %2178 = vmatmul.f32.gmra.mxu0 %v2067
        %v2179 = vpop.f32.mrf.mxu0
        %v2180 = vadd.f32 0.0, %v2179
        %2181 = vmatmul.f32.gmra.mxu0 %v2070
        %v2182 = vpop.f32.mrf.mxu0
        %v2183 = vadd.f32 0.0, %v2182
        %2184 = vmatmul.f32.gmra.mxu0 %v2073
        %v2185 = vpop.f32.mrf.mxu0
        %v2186 = vadd.f32 0.0, %v2185
        %2187 = vmatmul.f32.gmra.mxu0 %v2076
        %v2188 = vpop.f32.mrf.mxu0
        %v2189 = vadd.f32 0.0, %v2188
        %2190 = vmatmul.f32.gmra.mxu0 %v2079
        %v2191 = vpop.f32.mrf.mxu0
        %v2192 = vadd.f32 0.0, %v2191
        %2193 = vmatmul.f32.gmra.mxu0 %v2082
        %v2194 = vpop.f32.mrf.mxu0
        %v2195 = vadd.f32 0.0, %v2194
        %2196 = vmatmul.f32.gmra.mxu0 %v2085
        %v2197 = vpop.f32.mrf.mxu0
        %v2198 = vadd.f32 0.0, %v2197
        %2199 = vmatmul.f32.gmra.mxu0 %v2088
        %v2200 = vpop.f32.mrf.mxu0
        %v2201 = vadd.f32 0.0, %v2200
        %2202 = vmatmul.f32.gmra.mxu0 %v2091
        %v2203 = vpop.f32.mrf.mxu0
        %v2204 = vadd.f32 0.0, %v2203
        %2205 = vmatmul.f32.gmra.mxu0 %v2094
        %v2206 = vpop.f32.mrf.mxu0
        %v2207 = vadd.f32 0.0, %v2206
        %2208 = vmatmul.f32.gmra.mxu0 %v2097
        %v2209 = vpop.f32.mrf.mxu0
        %v2210 = vadd.f32 0.0, %v2209
        %2211 = vmatmul.f32.gmra.mxu0 %v2100
        %v2212 = vpop.f32.mrf.mxu0
        %v2213 = vadd.f32 0.0, %v2212
        %2214 = vmatmul.f32.gmra.mxu0 %v2103
        %v2215 = vpop.f32.mrf.mxu0
        %v2216 = vadd.f32 0.0, %v2215
        %2217 = vmatmul.f32.gmra.mxu0 %v2106
        %v2218 = vpop.f32.mrf.mxu0
        %v2219 = vadd.f32 0.0, %v2218
        %2220 = vmatmul.f32.gmra.mxu0 %v2109
        %v2221 = vpop.f32.mrf.mxu0
        %v2222 = vadd.f32 0.0, %v2221
        %2223 = vmatmul.f32.gmra.mxu0 %v2112
        %v2224 = vpop.f32.mrf.mxu0
        %v2225 = vadd.f32 0.0, %v2224
        %2226 = vmatmul.f32.gmra.mxu0 %v2115
        %v2227 = vpop.f32.mrf.mxu0
        %v2228 = vadd.f32 0.0, %v2227
        %2229 = vmatmul.f32.gmra.mxu0 %v2118
        %v2230 = vpop.f32.mrf.mxu0
        %v2231 = vadd.f32 0.0, %v2230
        %2232 = vmatmul.f32.gmra.mxu0 %v2121
        %v2233 = vpop.f32.mrf.mxu0
        %v2234 = vadd.f32 0.0, %v2233
        %2235 = vmatmul.f32.gmra.mxu0 %v2124
        %v2236 = vpop.f32.mrf.mxu0
        %v2237 = vadd.f32 0.0, %v2236
        %2238 = vmatmul.f32.gmra.mxu0 %v2127
        %v2239 = vpop.f32.mrf.mxu0
        %v2240 = vadd.f32 0.0, %v2239
        %2241 = vmatmul.f32.gmra.mxu0 %v2130
        %v2242 = vpop.f32.mrf.mxu0
        %v2243 = vadd.f32 0.0, %v2242
        %2244 = vmatmul.f32.gmra.mxu0 %v2133
        %v2245 = vpop.f32.mrf.mxu0
        %v2246 = vadd.f32 0.0, %v2245
        %2247 = vmatmul.f32.gmra.mxu0 %v2136
        %v2248 = vpop.f32.mrf.mxu0
        %v2249 = vadd.f32 0.0, %v2248
        %2250 = vmatmul.f32.gmra.mxu0 %v2139
        %v2251 = vpop.f32.mrf.mxu0
        %v2252 = vadd.f32 0.0, %v2251
        %2253 = vmatmul.f32.gmra.mxu0 %v2142
        %v2254 = vpop.f32.mrf.mxu0
        %v2255 = vadd.f32 0.0, %v2254
        %2256 = vmatmul.f32.gmra.mxu0 %v2145
        %v2257 = vpop.f32.mrf.mxu0
        %v2258 = vadd.f32 0.0, %v2257
        %2259 = vmatmul.f32.gmra.mxu0 %v2148
        %v2260 = vpop.f32.mrf.mxu0
        %v2261 = vadd.f32 0.0, %v2260
        %2262 = vmatmul.f32.gmra.mxu0 %v2151
        %v2263 = vpop.f32.mrf.mxu0
        %v2264 = vadd.f32 0.0, %v2263
        %2265 = vdwg.mxu0
        %v2266 = vmax.f32 %v2171, %v2183
        %v2267 = vmax.f32 %v2174, %v2186
        %v2268 = vmax.f32 %v2177, %v2189
        %v2269 = vmax.f32 %v2180, %v2192
        %v2270 = vmax.f32 %v2266, %v2195
        %v2271 = vmax.f32 %v2267, %v2198
        %v2272 = vmax.f32 %v2268, %v2201
        %v2273 = vmax.f32 %v2269, %v2204
        %v2274 = vmax.f32 %v2270, %v2207
        %v2275 = vmax.f32 %v2271, %v2210
        %v2276 = vmax.f32 %v2272, %v2213
        %v2277 = vmax.f32 %v2273, %v2216
        %v2278 = vmax.f32 %v2274, %v2219
        %v2279 = vmax.f32 %v2275, %v2222
        %v2280 = vmax.f32 %v2276, %v2225
        %v2281 = vmax.f32 %v2277, %v2228
        %v2282 = vmax.f32 %v2278, %v2231
        %v2283 = vmax.f32 %v2279, %v2234
        %v2284 = vmax.f32 %v2280, %v2237
        %v2285 = vmax.f32 %v2281, %v2240
        %v2286 = vmax.f32 %v2282, %v2243
        %v2287 = vmax.f32 %v2283, %v2246
        %v2288 = vmax.f32 %v2284, %v2249
        %v2289 = vmax.f32 %v2285, %v2252
        %v2290 = vmax.f32 %v2286, %v2255
        %v2291 = vmax.f32 %v2287, %v2258
        %v2292 = vmax.f32 %v2288, %v2261
        %v2293 = vmax.f32 %v2289, %v2264
        %v2294 = vmax.f32 %v2290, %v2291
        %v2295 = vmax.f32 %v2292, %v2293
        %v2296 = vmax.f32 %v2294, %v2295
        %v2297 = vrot.slane %v2296, 4
        %v2298 = vmax.f32 %v2296, %v2297
        %v2299 = vrot.slane %v2298, 2
        %v2300 = vmax.f32 %v2298, %v2299
        %v2301 = vrot.slane %v2300, 1
        %v2302 = vmax.f32 %v2300, %v2301
        %vm2303 = vcmp.eq.f32.partialorder %v2171, %v2302
        %vm2304 = vcmp.eq.f32.partialorder %v2174, %v2302
        %vm2305 = vcmp.eq.f32.partialorder %v2177, %v2302
        %vm2306 = vcmp.eq.f32.partialorder %v2180, %v2302
        %vm2307 = vcmp.eq.f32.partialorder %v2183, %v2302
        %vm2308 = vcmp.eq.f32.partialorder %v2186, %v2302
        %vm2309 = vcmp.eq.f32.partialorder %v2189, %v2302
        %vm2310 = vcmp.eq.f32.partialorder %v2192, %v2302
        %vm2311 = vcmp.eq.f32.partialorder %v2195, %v2302
        %vm2312 = vcmp.eq.f32.partialorder %v2198, %v2302
        %vm2313 = vcmp.eq.f32.partialorder %v2201, %v2302
        %vm2314 = vcmp.eq.f32.partialorder %v2204, %v2302
        %vm2315 = vcmp.eq.f32.partialorder %v2207, %v2302
        %vm2316 = vcmp.eq.f32.partialorder %v2210, %v2302
        %vm2317 = vcmp.eq.f32.partialorder %v2213, %v2302
        %vm2318 = vcmp.eq.f32.partialorder %v2216, %v2302
        %vm2319 = vcmp.eq.f32.partialorder %v2219, %v2302
        %vm2320 = vcmp.eq.f32.partialorder %v2222, %v2302
        %vm2321 = vcmp.eq.f32.partialorder %v2225, %v2302
        %vm2322 = vcmp.eq.f32.partialorder %v2228, %v2302
        %vm2323 = vcmp.eq.f32.partialorder %v2231, %v2302
        %vm2324 = vcmp.eq.f32.partialorder %v2234, %v2302
        %vm2325 = vcmp.eq.f32.partialorder %v2237, %v2302
        %vm2326 = vcmp.eq.f32.partialorder %v2240, %v2302
        %vm2327 = vcmp.eq.f32.partialorder %v2243, %v2302
        %vm2328 = vcmp.eq.f32.partialorder %v2246, %v2302
        %vm2329 = vcmp.eq.f32.partialorder %v2249, %v2302
        %vm2330 = vcmp.eq.f32.partialorder %v2252, %v2302
        %vm2331 = vcmp.eq.f32.partialorder %v2255, %v2302
        %vm2332 = vcmp.eq.f32.partialorder %v2258, %v2302
        %vm2333 = vcmp.eq.f32.partialorder %v2261, %v2302
        %vm2334 = vcmp.eq.f32.partialorder %v2264, %v2302
        %v2335 = vsel %vm2303, %v505, 256.0
        %v2336 = vsel %vm2304, %v506, 256.0
        %v2337 = vsel %vm2305, %v507, 256.0
        %v2338 = vsel %vm2306, %v508, 256.0
        %v2339 = vsel %vm2307, %v509, 256.0
        %v2340 = vsel %vm2308, %v510, 256.0
        %v2341 = vsel %vm2309, %v511, 256.0
        %v2342 = vsel %vm2310, %v512, 256.0
        %v2343 = vsel %vm2311, %v513, 256.0
        %v2344 = vsel %vm2312, %v514, 256.0
        %v2345 = vsel %vm2313, %v515, 256.0
        %v2346 = vsel %vm2314, %v516, 256.0
        %v2347 = vsel %vm2315, %v517, 256.0
        %v2348 = vsel %vm2316, %v518, 256.0
        %v2349 = vsel %vm2317, %v519, 256.0
        %v2350 = vsel %vm2318, %v520, 256.0
        %v2351 = vsel %vm2319, %v521, 256.0
        %v2352 = vsel %vm2320, %v522, 256.0
        %v2353 = vsel %vm2321, %v523, 256.0
        %v2354 = vsel %vm2322, %v524, 256.0
        %v2355 = vsel %vm2323, %v525, 256.0
        %v2356 = vsel %vm2324, %v526, 256.0
        %v2357 = vsel %vm2325, %v527, 256.0
        %v2358 = vsel %vm2326, %v528, 256.0
        %v2359 = vsel %vm2327, %v529, 256.0
        %v2360 = vsel %vm2328, %v530, 256.0
        %v2361 = vsel %vm2329, %v531, 256.0
        %v2362 = vsel %vm2330, %v532, 256.0
        %v2363 = vsel %vm2331, %v533, 256.0
        %v2364 = vsel %vm2332, %v534, 256.0
        %v2365 = vsel %vm2333, %v535, 256.0
        %v2366 = vsel %vm2334, %v536, 256.0
        %v2367 = vmin.f32 %v2335, %v2339
        %v2368 = vmin.f32 %v2336, %v2340
        %v2369 = vmin.f32 %v2337, %v2341
        %v2370 = vmin.f32 %v2338, %v2342
        %v2371 = vmin.f32 %v2367, %v2343
        %v2372 = vmin.f32 %v2368, %v2344
        %v2373 = vmin.f32 %v2369, %v2345
        %v2374 = vmin.f32 %v2370, %v2346
        %v2375 = vmin.f32 %v2371, %v2347
        %v2376 = vmin.f32 %v2372, %v2348
        %v2377 = vmin.f32 %v2373, %v2349
        %v2378 = vmin.f32 %v2374, %v2350
        %v2379 = vmin.f32 %v2375, %v2351
        %v2380 = vmin.f32 %v2376, %v2352
        %v2381 = vmin.f32 %v2377, %v2353
        %v2382 = vmin.f32 %v2378, %v2354
        %v2383 = vmin.f32 %v2379, %v2355
        %v2384 = vmin.f32 %v2380, %v2356
        %v2385 = vmin.f32 %v2381, %v2357
        %v2386 = vmin.f32 %v2382, %v2358
        %v2387 = vmin.f32 %v2383, %v2359
        %v2388 = vmin.f32 %v2384, %v2360
        %v2389 = vmin.f32 %v2385, %v2361
        %v2390 = vmin.f32 %v2386, %v2362
        %v2391 = vmin.f32 %v2387, %v2363
        %v2392 = vmin.f32 %v2388, %v2364
        %v2393 = vmin.f32 %v2389, %v2365
        %v2394 = vmin.f32 %v2390, %v2366
        %v2395 = vmin.f32 %v2391, %v2392
        %v2396 = vmin.f32 %v2393, %v2394
        %v2397 = vmin.f32 %v2395, %v2396
        %v2398 = vrot.slane %v2397, 4
        %v2399 = vmin.f32 %v2397, %v2398
        %v2400 = vrot.slane %v2399, 2
        %v2401 = vmin.f32 %v2399, %v2400
        %v2402 = vrot.slane %v2401, 1
        %v2403 = vmin.f32 %v2401, %v2402
        %v2404 = vcvt.f32.s32.to.zero.pseudo %v2403
        %vm2405 = vcmp.eq.s32.totalorder %v473, %v2404
        %vm2406 = vcmp.eq.s32.totalorder %v474, %v2404
        %vm2407 = vcmp.eq.s32.totalorder %v475, %v2404
        %vm2408 = vcmp.eq.s32.totalorder %v476, %v2404
        %vm2409 = vcmp.eq.s32.totalorder %v477, %v2404
        %vm2410 = vcmp.eq.s32.totalorder %v478, %v2404
        %vm2411 = vcmp.eq.s32.totalorder %v479, %v2404
        %vm2412 = vcmp.eq.s32.totalorder %v480, %v2404
        %vm2413 = vcmp.eq.s32.totalorder %v481, %v2404
        %vm2414 = vcmp.eq.s32.totalorder %v482, %v2404
        %vm2415 = vcmp.eq.s32.totalorder %v483, %v2404
        %vm2416 = vcmp.eq.s32.totalorder %v484, %v2404
        %vm2417 = vcmp.eq.s32.totalorder %v485, %v2404
        %vm2418 = vcmp.eq.s32.totalorder %v486, %v2404
        %vm2419 = vcmp.eq.s32.totalorder %v487, %v2404
        %vm2420 = vcmp.eq.s32.totalorder %v488, %v2404
        %vm2421 = vcmp.eq.s32.totalorder %v489, %v2404
        %vm2422 = vcmp.eq.s32.totalorder %v490, %v2404
        %vm2423 = vcmp.eq.s32.totalorder %v491, %v2404
        %vm2424 = vcmp.eq.s32.totalorder %v492, %v2404
        %vm2425 = vcmp.eq.s32.totalorder %v493, %v2404
        %vm2426 = vcmp.eq.s32.totalorder %v494, %v2404
        %vm2427 = vcmp.eq.s32.totalorder %v495, %v2404
        %vm2428 = vcmp.eq.s32.totalorder %v496, %v2404
        %vm2429 = vcmp.eq.s32.totalorder %v497, %v2404
        %vm2430 = vcmp.eq.s32.totalorder %v498, %v2404
        %vm2431 = vcmp.eq.s32.totalorder %v499, %v2404
        %vm2432 = vcmp.eq.s32.totalorder %v500, %v2404
        %vm2433 = vcmp.eq.s32.totalorder %v501, %v2404
        %vm2434 = vcmp.eq.s32.totalorder %v502, %v2404
        %vm2435 = vcmp.eq.s32.totalorder %v503, %v2404
        %vm2436 = vcmp.eq.s32.totalorder %v504, %v2404
        %v2437 = vsel %vm2405, 1, 0
        %v2438 = vsel %vm2406, 1, 0
        %v2439 = vsel %vm2407, 1, 0
        %v2440 = vsel %vm2408, 1, 0
        %v2441 = vsel %vm2409, 1, 0
        %v2442 = vsel %vm2410, 1, 0
        %v2443 = vsel %vm2411, 1, 0
        %v2444 = vsel %vm2412, 1, 0
        %v2445 = vsel %vm2413, 1, 0
        %v2446 = vsel %vm2414, 1, 0
        %v2447 = vsel %vm2415, 1, 0
        %v2448 = vsel %vm2416, 1, 0
        %v2449 = vsel %vm2417, 1, 0
        %v2450 = vsel %vm2418, 1, 0
        %v2451 = vsel %vm2419, 1, 0
        %v2452 = vsel %vm2420, 1, 0
        %v2453 = vsel %vm2421, 1, 0
        %v2454 = vsel %vm2422, 1, 0
        %v2455 = vsel %vm2423, 1, 0
        %v2456 = vsel %vm2424, 1, 0
        %v2457 = vsel %vm2425, 1, 0
        %v2458 = vsel %vm2426, 1, 0
        %v2459 = vsel %vm2427, 1, 0
        %v2460 = vsel %vm2428, 1, 0
        %v2461 = vsel %vm2429, 1, 0
        %v2462 = vsel %vm2430, 1, 0
        %v2463 = vsel %vm2431, 1, 0
        %v2464 = vsel %vm2432, 1, 0
        %v2465 = vsel %vm2433, 1, 0
        %v2466 = vsel %vm2434, 1, 0
        %v2467 = vsel %vm2435, 1, 0
        %v2468 = vsel %vm2436, 1, 0
        %v2469 = vcvt.s32.f32 %v2437
        %v2470 = vcvt.s32.f32 %v2438
        %v2471 = vcvt.s32.f32 %v2439
        %v2472 = vcvt.s32.f32 %v2440
        %v2473 = vcvt.s32.f32 %v2441
        %v2474 = vcvt.s32.f32 %v2442
        %v2475 = vcvt.s32.f32 %v2443
        %v2476 = vcvt.s32.f32 %v2444
        %v2477 = vcvt.s32.f32 %v2445
        %v2478 = vcvt.s32.f32 %v2446
        %v2479 = vcvt.s32.f32 %v2447
        %v2480 = vcvt.s32.f32 %v2448
        %v2481 = vcvt.s32.f32 %v2449
        %v2482 = vcvt.s32.f32 %v2450
        %v2483 = vcvt.s32.f32 %v2451
        %v2484 = vcvt.s32.f32 %v2452
        %v2485 = vcvt.s32.f32 %v2453
        %v2486 = vcvt.s32.f32 %v2454
        %v2487 = vcvt.s32.f32 %v2455
        %v2488 = vcvt.s32.f32 %v2456
        %v2489 = vcvt.s32.f32 %v2457
        %v2490 = vcvt.s32.f32 %v2458
        %v2491 = vcvt.s32.f32 %v2459
        %v2492 = vcvt.s32.f32 %v2460
        %v2493 = vcvt.s32.f32 %v2461
        %v2494 = vcvt.s32.f32 %v2462
        %v2495 = vcvt.s32.f32 %v2463
        %v2496 = vcvt.s32.f32 %v2464
        %v2497 = vcvt.s32.f32 %v2465
        %v2498 = vcvt.s32.f32 %v2466
        %v2499 = vcvt.s32.f32 %v2467
        %v2500 = vcvt.s32.f32 %v2468
        %s2501 = scalar_lea.vmem [#allocation5], 32
        %v2502 = vld [vmem:[%s2501] sm:$0xff]
        %v2503 = vld [vmem:[%s2501 + $0x8] sm:$0xff]
        %2504 = vmatpush.msra.mxu0 %v2484
        %2505 = vmatpush.msra.mxu0 %v2483
        %2506 = vmatpush.msra.mxu0 %v2482
        %2507 = vmatpush.msra.mxu0 %v2481
        %2508 = vmatpush.msra.mxu0 %v2480
        %2509 = vmatpush.msra.mxu0 %v2479
        %2510 = vmatpush.msra.mxu0 %v2478
        %2511 = vmatpush.msra.mxu0 %v2477
        %2512 = vmatpush.msra.mxu0 %v2476
        %2513 = vmatpush.msra.mxu0 %v2475
        %2514 = vmatpush.msra.mxu0 %v2474
        %2515 = vmatpush.msra.mxu0 %v2473
        %2516 = vmatpush.msra.mxu0 %v2472
        %2517 = vmatpush.msra.mxu0 %v2471
        %2518 = vmatpush.msra.mxu0 %v2470
        %2519 = vmatpush.msra.mxu0 %v2469
        %2520 = vmatmul.f32.gmra.mxu0 %v2502
        %v2521 = vpop.f32.mrf.mxu0
        %v2522 = vadd.f32 0.0, %v2521
        %2523 = vdwg.mxu0
        %2524 = vmatpush.msra.mxu0 %v2500
        %2525 = vmatpush.msra.mxu0 %v2499
        %2526 = vmatpush.msra.mxu0 %v2498
        %2527 = vmatpush.msra.mxu0 %v2497
        %2528 = vmatpush.msra.mxu0 %v2496
        %2529 = vmatpush.msra.mxu0 %v2495
        %2530 = vmatpush.msra.mxu0 %v2494
        %2531 = vmatpush.msra.mxu0 %v2493
        %2532 = vmatpush.msra.mxu0 %v2492
        %2533 = vmatpush.msra.mxu0 %v2491
        %2534 = vmatpush.msra.mxu0 %v2490
        %2535 = vmatpush.msra.mxu0 %v2489
        %2536 = vmatpush.msra.mxu0 %v2488
        %2537 = vmatpush.msra.mxu0 %v2487
        %2538 = vmatpush.msra.mxu0 %v2486
        %2539 = vmatpush.msra.mxu0 %v2485
        %2540 = vmatmul.f32.gmra.mxu0 %v2503
        %v2541 = vpop.f32.mrf.mxu0
        %v2542 = vadd.f32 %v2522, %v2541
        %2543 = vdwg.mxu0
        %s2544 = scalar_lea.vmem [#allocation7], 16
        %v2545 = vld [vmem:[%s2544] sm:$0xff]
        %2546 = vxpose.xlu0.b32.start [1/16] %v2545, 128
        %2547 = vxpose.xlu0.b32.cont [2/16] 0.0, 128
        %2548 = vxpose.xlu0.b32.cont [3/16] 0.0, 128
        %2549 = vxpose.xlu0.b32.cont [4/16] 0.0, 128
        %2550 = vxpose.xlu0.b32.cont [5/16] 0.0, 128
        %2551 = vxpose.xlu0.b32.cont [6/16] 0.0, 128
        %2552 = vxpose.xlu0.b32.cont [7/16] 0.0, 128
        %2553 = vxpose.xlu0.b32.cont [8/16] 0.0, 128
        %2554 = vxpose.xlu0.b32.cont [9/16] 0.0, 128
        %2555 = vxpose.xlu0.b32.cont [10/16] 0.0, 128
        %2556 = vxpose.xlu0.b32.cont [11/16] 0.0, 128
        %2557 = vxpose.xlu0.b32.cont [12/16] 0.0, 128
        %2558 = vxpose.xlu0.b32.cont [13/16] 0.0, 128
        %2559 = vxpose.xlu0.b32.cont [14/16] 0.0, 128
        %2560 = vxpose.xlu0.b32.cont [15/16] 0.0, 128
        %2561 = vxpose.xlu0.b32.end [16/16] 0.0, 128
        %v2562 = vpop.trf.xlu0
        %v2563 = vpop.trf.xlu0
        %v2564 = vpop.trf.xlu0
        %v2565 = vpop.trf.xlu0
        %v2566 = vpop.trf.xlu0
        %v2567 = vpop.trf.xlu0
        %v2568 = vpop.trf.xlu0
        %v2569 = vpop.trf.xlu0
        %v2570 = vpop.trf.xlu0
        %v2571 = vpop.trf.xlu0
        %v2572 = vpop.trf.xlu0
        %v2573 = vpop.trf.xlu0
        %v2574 = vpop.trf.xlu0
        %v2575 = vpop.trf.xlu0
        %v2576 = vpop.trf.xlu0
        %v2577 = vpop.trf.xlu0
        %v2579 = vsel %vm634, %v2562, 0
        %v2582 = vsel %vm634, %v2563, 0
        %v2585 = vsel %vm634, %v2564, 0
        %v2588 = vsel %vm634, %v2565, 0
        %v2591 = vsel %vm634, %v2566, 0
        %v2594 = vsel %vm634, %v2567, 0
        %v2597 = vsel %vm634, %v2568, 0
        %v2600 = vsel %vm634, %v2569, 0
        %2602 = vmatpush.msra.mxu0 0.0
        %2603 = vmatpush.msra.mxu0 0.0
        %2604 = vmatpush.msra.mxu0 0.0
        %2605 = vmatpush.msra.mxu0 0.0
        %2606 = vmatpush.msra.mxu0 0.0
        %2607 = vmatpush.msra.mxu0 0.0
        %2608 = vmatpush.msra.mxu0 0.0
        %2609 = vmatpush.msra.mxu0 0.0
        %2610 = vmatpush.msra.mxu0 0.0
        %2611 = vmatpush.msra.mxu0 0.0
        %2612 = vmatpush.msra.mxu0 0.0
        %2613 = vmatpush.msra.mxu0 0.0
        %2614 = vmatpush.msra.mxu0 0.0
        %2615 = vmatpush.msra.mxu0 0.0
        %2616 = vmatpush.msra.mxu0 0.0
        %2617 = vmatpush.msra.mxu0 %v2542
        %2618 = vmatmul.f32.gmra.mxu0 %v2579
        %v2619 = vpop.f32.mrf.mxu0
        %v2620 = vadd.f32 0.0, %v2619
        %2621 = vmatmul.f32.gmra.mxu0 %v2582
        %v2622 = vpop.f32.mrf.mxu0
        %v2623 = vadd.f32 0.0, %v2622
        %2624 = vmatmul.f32.gmra.mxu0 %v2585
        %v2625 = vpop.f32.mrf.mxu0
        %v2626 = vadd.f32 0.0, %v2625
        %2627 = vmatmul.f32.gmra.mxu0 %v2588
        %v2628 = vpop.f32.mrf.mxu0
        %v2629 = vadd.f32 0.0, %v2628
        %2630 = vmatmul.f32.gmra.mxu0 %v2591
        %v2631 = vpop.f32.mrf.mxu0
        %v2632 = vadd.f32 0.0, %v2631
        %2633 = vmatmul.f32.gmra.mxu0 %v2594
        %v2634 = vpop.f32.mrf.mxu0
        %v2635 = vadd.f32 0.0, %v2634
        %2636 = vmatmul.f32.gmra.mxu0 %v2597
        %v2637 = vpop.f32.mrf.mxu0
        %v2638 = vadd.f32 0.0, %v2637
        %2639 = vmatmul.f32.gmra.mxu0 %v2600
        %v2640 = vpop.f32.mrf.mxu0
        %v2641 = vadd.f32 0.0, %v2640
        %2642 = vdwg.mxu0
        %v2643 = vadd.f32 %v1931, %v2620
        %v2644 = vadd.f32 %v1932, %v2623
        %v2645 = vadd.f32 %v1933, %v2626
        %v2646 = vadd.f32 %v1934, %v2629
        %v2647 = vadd.f32 %v1935, %v2632
        %v2648 = vadd.f32 %v1936, %v2635
        %v2649 = vadd.f32 %v1937, %v2638
        %v2650 = vadd.f32 %v1938, %v2641
        %v2651 = vsub.f32 %v1939, %v2620
        %v2652 = vsub.f32 %v1940, %v2623
        %v2653 = vsub.f32 %v1941, %v2626
        %v2654 = vsub.f32 %v1942, %v2629
        %v2655 = vsub.f32 %v1943, %v2632
        %v2656 = vsub.f32 %v1944, %v2635
        %v2657 = vsub.f32 %v1945, %v2638
        %v2658 = vsub.f32 %v1946, %v2641
        %2659 = vst [vmem:[%s449 + $0x2] sm:$0x1] %v2404
        %2660 = vst [vmem:[%s456 + $0x10] sm:$0xff] %v1988
        %v2661 = vsub.f32 %v1988, %v2542
        %v2662 = vmul.f32 %v2661, %v2661
        %v2663 = vrot.slane %v2662, 4
        %v2664 = vadd.f32 %v2662, %v2663
        %v2665 = vrot.slane %v2664, 2
        %v2666 = vadd.f32 %v2664, %v2665
        %v2667 = vrot.slane %v2666, 1
        %v2668 = vadd.f32 %v2666, %v2667
        %2669 = vst [vmem:[%s463 + $0x2] sm:$0x1] %v2668
        %s2670 = scalar_lea.vmem %s1, 24
        %v2671 = vld [vmem:[%s2670] sm:$0xff]
        %s2672 = scalar_lea.vmem %s2, 24
        %v2673 = vld [vmem:[%s2672] sm:$0xff]
        %2675 = vset.pattern.permute.xlu0 0
        %2676 = vperm.xlu0 %2675, %v2673
        %v2677 = vpop.permute.xlu0 %2676
        %v2680 = vsel %vm544, %v2671, 0
        %2682 = vmatpush.msra.mxu0 0.0
        %2683 = vmatpush.msra.mxu0 0.0
        %2684 = vmatpush.msra.mxu0 0.0
        %2685 = vmatpush.msra.mxu0 0.0
        %2686 = vmatpush.msra.mxu0 0.0
        %2687 = vmatpush.msra.mxu0 0.0
        %2688 = vmatpush.msra.mxu0 0.0
        %2689 = vmatpush.msra.mxu0 0.0
        %2690 = vmatpush.msra.mxu0 %v2658
        %2691 = vmatpush.msra.mxu0 %v2657
        %2692 = vmatpush.msra.mxu0 %v2656
        %2693 = vmatpush.msra.mxu0 %v2655
        %2694 = vmatpush.msra.mxu0 %v2654
        %2695 = vmatpush.msra.mxu0 %v2653
        %2696 = vmatpush.msra.mxu0 %v2652
        %2697 = vmatpush.msra.mxu0 %v2651
        %2698 = vmatmul.f32.gmra.mxu0 %v2680
        %v2699 = vpop.f32.mrf.mxu0
        %v2700 = vadd.f32 %v2677, %v2699
        %2701 = vdwg.mxu0
        %s2702 = scalar_lea.vmem %s3, 48
        %v2703 = vld [vmem:[%s2702] sm:$0xff]
        %v2704 = vld [vmem:[%s2702 + $0x8] sm:$0xff]
        %2705 = vxpose.xlu0.b32.start [1/16] %v2703, 128
        %2706 = vxpose.xlu0.b32.cont [2/16] 0.0, 128
        %2707 = vxpose.xlu0.b32.cont [3/16] 0.0, 128
        %2708 = vxpose.xlu0.b32.cont [4/16] 0.0, 128
        %2709 = vxpose.xlu0.b32.cont [5/16] 0.0, 128
        %2710 = vxpose.xlu0.b32.cont [6/16] 0.0, 128
        %2711 = vxpose.xlu0.b32.cont [7/16] 0.0, 128
        %2712 = vxpose.xlu0.b32.cont [8/16] 0.0, 128
        %2713 = vxpose.xlu0.b32.cont [9/16] 0.0, 128
        %2714 = vxpose.xlu0.b32.cont [10/16] 0.0, 128
        %2715 = vxpose.xlu0.b32.cont [11/16] 0.0, 128
        %2716 = vxpose.xlu0.b32.cont [12/16] 0.0, 128
        %2717 = vxpose.xlu0.b32.cont [13/16] 0.0, 128
        %2718 = vxpose.xlu0.b32.cont [14/16] 0.0, 128
        %2719 = vxpose.xlu0.b32.cont [15/16] 0.0, 128
        %2720 = vxpose.xlu0.b32.end [16/16] 0.0, 128
        %v2721 = vpop.trf.xlu0
        %v2722 = vpop.trf.xlu0
        %v2723 = vpop.trf.xlu0
        %v2724 = vpop.trf.xlu0
        %v2725 = vpop.trf.xlu0
        %v2726 = vpop.trf.xlu0
        %v2727 = vpop.trf.xlu0
        %v2728 = vpop.trf.xlu0
        %v2729 = vpop.trf.xlu0
        %v2730 = vpop.trf.xlu0
        %v2731 = vpop.trf.xlu0
        %v2732 = vpop.trf.xlu0
        %v2733 = vpop.trf.xlu0
        %v2734 = vpop.trf.xlu0
        %v2735 = vpop.trf.xlu0
        %v2736 = vpop.trf.xlu0
        %2737 = vxpose.xlu0.b32.start [1/16] %v2704, 128
        %2738 = vxpose.xlu0.b32.cont [2/16] 0.0, 128
        %2739 = vxpose.xlu0.b32.cont [3/16] 0.0, 128
        %2740 = vxpose.xlu0.b32.cont [4/16] 0.0, 128
        %2741 = vxpose.xlu0.b32.cont [5/16] 0.0, 128
        %2742 = vxpose.xlu0.b32.cont [6/16] 0.0, 128
        %2743 = vxpose.xlu0.b32.cont [7/16] 0.0, 128
        %2744 = vxpose.xlu0.b32.cont [8/16] 0.0, 128
        %2745 = vxpose.xlu0.b32.cont [9/16] 0.0, 128
        %2746 = vxpose.xlu0.b32.cont [10/16] 0.0, 128
        %2747 = vxpose.xlu0.b32.cont [11/16] 0.0, 128
        %2748 = vxpose.xlu0.b32.cont [12/16] 0.0, 128
        %2749 = vxpose.xlu0.b32.cont [13/16] 0.0, 128
        %2750 = vxpose.xlu0.b32.cont [14/16] 0.0, 128
        %2751 = vxpose.xlu0.b32.cont [15/16] 0.0, 128
        %2752 = vxpose.xlu0.b32.end [16/16] 0.0, 128
        %v2753 = vpop.trf.xlu0
        %v2754 = vpop.trf.xlu0
        %v2755 = vpop.trf.xlu0
        %v2756 = vpop.trf.xlu0
        %v2757 = vpop.trf.xlu0
        %v2758 = vpop.trf.xlu0
        %v2759 = vpop.trf.xlu0
        %v2760 = vpop.trf.xlu0
        %v2761 = vpop.trf.xlu0
        %v2762 = vpop.trf.xlu0
        %v2763 = vpop.trf.xlu0
        %v2764 = vpop.trf.xlu0
        %v2765 = vpop.trf.xlu0
        %v2766 = vpop.trf.xlu0
        %v2767 = vpop.trf.xlu0
        %v2768 = vpop.trf.xlu0
        %v2770 = vsel %vm634, %v2721, 0
        %v2773 = vsel %vm634, %v2722, 0
        %v2776 = vsel %vm634, %v2723, 0
        %v2779 = vsel %vm634, %v2724, 0
        %v2782 = vsel %vm634, %v2725, 0
        %v2785 = vsel %vm634, %v2726, 0
        %v2788 = vsel %vm634, %v2727, 0
        %v2791 = vsel %vm634, %v2728, 0
        %v2794 = vsel %vm634, %v2729, 0
        %v2797 = vsel %vm634, %v2730, 0
        %v2800 = vsel %vm634, %v2731, 0
        %v2803 = vsel %vm634, %v2732, 0
        %v2806 = vsel %vm634, %v2733, 0
        %v2809 = vsel %vm634, %v2734, 0
        %v2812 = vsel %vm634, %v2735, 0
        %v2815 = vsel %vm634, %v2736, 0
        %v2818 = vsel %vm634, %v2753, 0
        %v2821 = vsel %vm634, %v2754, 0
        %v2824 = vsel %vm634, %v2755, 0
        %v2827 = vsel %vm634, %v2756, 0
        %v2830 = vsel %vm634, %v2757, 0
        %v2833 = vsel %vm634, %v2758, 0
        %v2836 = vsel %vm634, %v2759, 0
        %v2839 = vsel %vm634, %v2760, 0
        %v2842 = vsel %vm634, %v2761, 0
        %v2845 = vsel %vm634, %v2762, 0
        %v2848 = vsel %vm634, %v2763, 0
        %v2851 = vsel %vm634, %v2764, 0
        %v2854 = vsel %vm634, %v2765, 0
        %v2857 = vsel %vm634, %v2766, 0
        %v2860 = vsel %vm634, %v2767, 0
        %v2863 = vsel %vm634, %v2768, 0
        %2865 = vmatpush.msra.mxu0 0.0
        %2866 = vmatpush.msra.mxu0 0.0
        %2867 = vmatpush.msra.mxu0 0.0
        %2868 = vmatpush.msra.mxu0 0.0
        %2869 = vmatpush.msra.mxu0 0.0
        %2870 = vmatpush.msra.mxu0 0.0
        %2871 = vmatpush.msra.mxu0 0.0
        %2872 = vmatpush.msra.mxu0 0.0
        %2873 = vmatpush.msra.mxu0 0.0
        %2874 = vmatpush.msra.mxu0 0.0
        %2875 = vmatpush.msra.mxu0 0.0
        %2876 = vmatpush.msra.mxu0 0.0
        %2877 = vmatpush.msra.mxu0 0.0
        %2878 = vmatpush.msra.mxu0 0.0
        %2879 = vmatpush.msra.mxu0 0.0
        %2880 = vmatpush.msra.mxu0 %v2700
        %2881 = vmatmul.f32.gmra.mxu0 %v2770
        %v2882 = vpop.f32.mrf.mxu0
        %v2883 = vadd.f32 0.0, %v2882
        %2884 = vmatmul.f32.gmra.mxu0 %v2773
        %v2885 = vpop.f32.mrf.mxu0
        %v2886 = vadd.f32 0.0, %v2885
        %2887 = vmatmul.f32.gmra.mxu0 %v2776
        %v2888 = vpop.f32.mrf.mxu0
        %v2889 = vadd.f32 0.0, %v2888
        %2890 = vmatmul.f32.gmra.mxu0 %v2779
        %v2891 = vpop.f32.mrf.mxu0
        %v2892 = vadd.f32 0.0, %v2891
        %2893 = vmatmul.f32.gmra.mxu0 %v2782
        %v2894 = vpop.f32.mrf.mxu0
        %v2895 = vadd.f32 0.0, %v2894
        %2896 = vmatmul.f32.gmra.mxu0 %v2785
        %v2897 = vpop.f32.mrf.mxu0
        %v2898 = vadd.f32 0.0, %v2897
        %2899 = vmatmul.f32.gmra.mxu0 %v2788
        %v2900 = vpop.f32.mrf.mxu0
        %v2901 = vadd.f32 0.0, %v2900
        %2902 = vmatmul.f32.gmra.mxu0 %v2791
        %v2903 = vpop.f32.mrf.mxu0
        %v2904 = vadd.f32 0.0, %v2903
        %2905 = vmatmul.f32.gmra.mxu0 %v2794
        %v2906 = vpop.f32.mrf.mxu0
        %v2907 = vadd.f32 0.0, %v2906
        %2908 = vmatmul.f32.gmra.mxu0 %v2797
        %v2909 = vpop.f32.mrf.mxu0
        %v2910 = vadd.f32 0.0, %v2909
        %2911 = vmatmul.f32.gmra.mxu0 %v2800
        %v2912 = vpop.f32.mrf.mxu0
        %v2913 = vadd.f32 0.0, %v2912
        %2914 = vmatmul.f32.gmra.mxu0 %v2803
        %v2915 = vpop.f32.mrf.mxu0
        %v2916 = vadd.f32 0.0, %v2915
        %2917 = vmatmul.f32.gmra.mxu0 %v2806
        %v2918 = vpop.f32.mrf.mxu0
        %v2919 = vadd.f32 0.0, %v2918
        %2920 = vmatmul.f32.gmra.mxu0 %v2809
        %v2921 = vpop.f32.mrf.mxu0
        %v2922 = vadd.f32 0.0, %v2921
        %2923 = vmatmul.f32.gmra.mxu0 %v2812
        %v2924 = vpop.f32.mrf.mxu0
        %v2925 = vadd.f32 0.0, %v2924
        %2926 = vmatmul.f32.gmra.mxu0 %v2815
        %v2927 = vpop.f32.mrf.mxu0
        %v2928 = vadd.f32 0.0, %v2927
        %2929 = vmatmul.f32.gmra.mxu0 %v2818
        %v2930 = vpop.f32.mrf.mxu0
        %v2931 = vadd.f32 0.0, %v2930
        %2932 = vmatmul.f32.gmra.mxu0 %v2821
        %v2933 = vpop.f32.mrf.mxu0
        %v2934 = vadd.f32 0.0, %v2933
        %2935 = vmatmul.f32.gmra.mxu0 %v2824
        %v2936 = vpop.f32.mrf.mxu0
        %v2937 = vadd.f32 0.0, %v2936
        %2938 = vmatmul.f32.gmra.mxu0 %v2827
        %v2939 = vpop.f32.mrf.mxu0
        %v2940 = vadd.f32 0.0, %v2939
        %2941 = vmatmul.f32.gmra.mxu0 %v2830
        %v2942 = vpop.f32.mrf.mxu0
        %v2943 = vadd.f32 0.0, %v2942
        %2944 = vmatmul.f32.gmra.mxu0 %v2833
        %v2945 = vpop.f32.mrf.mxu0
        %v2946 = vadd.f32 0.0, %v2945
        %2947 = vmatmul.f32.gmra.mxu0 %v2836
        %v2948 = vpop.f32.mrf.mxu0
        %v2949 = vadd.f32 0.0, %v2948
        %2950 = vmatmul.f32.gmra.mxu0 %v2839
        %v2951 = vpop.f32.mrf.mxu0
        %v2952 = vadd.f32 0.0, %v2951
        %2953 = vmatmul.f32.gmra.mxu0 %v2842
        %v2954 = vpop.f32.mrf.mxu0
        %v2955 = vadd.f32 0.0, %v2954
        %2956 = vmatmul.f32.gmra.mxu0 %v2845
        %v2957 = vpop.f32.mrf.mxu0
        %v2958 = vadd.f32 0.0, %v2957
        %2959 = vmatmul.f32.gmra.mxu0 %v2848
        %v2960 = vpop.f32.mrf.mxu0
        %v2961 = vadd.f32 0.0, %v2960
        %2962 = vmatmul.f32.gmra.mxu0 %v2851
        %v2963 = vpop.f32.mrf.mxu0
        %v2964 = vadd.f32 0.0, %v2963
        %2965 = vmatmul.f32.gmra.mxu0 %v2854
        %v2966 = vpop.f32.mrf.mxu0
        %v2967 = vadd.f32 0.0, %v2966
        %2968 = vmatmul.f32.gmra.mxu0 %v2857
        %v2969 = vpop.f32.mrf.mxu0
        %v2970 = vadd.f32 0.0, %v2969
        %2971 = vmatmul.f32.gmra.mxu0 %v2860
        %v2972 = vpop.f32.mrf.mxu0
        %v2973 = vadd.f32 0.0, %v2972
        %2974 = vmatmul.f32.gmra.mxu0 %v2863
        %v2975 = vpop.f32.mrf.mxu0
        %v2976 = vadd.f32 0.0, %v2975
        %2977 = vdwg.mxu0
        %v2978 = vmax.f32 %v2883, %v2895
        %v2979 = vmax.f32 %v2886, %v2898
        %v2980 = vmax.f32 %v2889, %v2901
        %v2981 = vmax.f32 %v2892, %v2904
        %v2982 = vmax.f32 %v2978, %v2907
        %v2983 = vmax.f32 %v2979, %v2910
        %v2984 = vmax.f32 %v2980, %v2913
        %v2985 = vmax.f32 %v2981, %v2916
        %v2986 = vmax.f32 %v2982, %v2919
        %v2987 = vmax.f32 %v2983, %v2922
        %v2988 = vmax.f32 %v2984, %v2925
        %v2989 = vmax.f32 %v2985, %v2928
        %v2990 = vmax.f32 %v2986, %v2931
        %v2991 = vmax.f32 %v2987, %v2934
        %v2992 = vmax.f32 %v2988, %v2937
        %v2993 = vmax.f32 %v2989, %v2940
        %v2994 = vmax.f32 %v2990, %v2943
        %v2995 = vmax.f32 %v2991, %v2946
        %v2996 = vmax.f32 %v2992, %v2949
        %v2997 = vmax.f32 %v2993, %v2952
        %v2998 = vmax.f32 %v2994, %v2955
        %v2999 = vmax.f32 %v2995, %v2958
        %v3000 = vmax.f32 %v2996, %v2961
        %v3001 = vmax.f32 %v2997, %v2964
        %v3002 = vmax.f32 %v2998, %v2967
        %v3003 = vmax.f32 %v2999, %v2970
        %v3004 = vmax.f32 %v3000, %v2973
        %v3005 = vmax.f32 %v3001, %v2976
        %v3006 = vmax.f32 %v3002, %v3003
        %v3007 = vmax.f32 %v3004, %v3005
        %v3008 = vmax.f32 %v3006, %v3007
        %v3009 = vrot.slane %v3008, 4
        %v3010 = vmax.f32 %v3008, %v3009
        %v3011 = vrot.slane %v3010, 2
        %v3012 = vmax.f32 %v3010, %v3011
        %v3013 = vrot.slane %v3012, 1
        %v3014 = vmax.f32 %v3012, %v3013
        %vm3015 = vcmp.eq.f32.partialorder %v2883, %v3014
        %vm3016 = vcmp.eq.f32.partialorder %v2886, %v3014
        %vm3017 = vcmp.eq.f32.partialorder %v2889, %v3014
        %vm3018 = vcmp.eq.f32.partialorder %v2892, %v3014
        %vm3019 = vcmp.eq.f32.partialorder %v2895, %v3014
        %vm3020 = vcmp.eq.f32.partialorder %v2898, %v3014
        %vm3021 = vcmp.eq.f32.partialorder %v2901, %v3014
        %vm3022 = vcmp.eq.f32.partialorder %v2904, %v3014
        %vm3023 = vcmp.eq.f32.partialorder %v2907, %v3014
        %vm3024 = vcmp.eq.f32.partialorder %v2910, %v3014
        %vm3025 = vcmp.eq.f32.partialorder %v2913, %v3014
        %vm3026 = vcmp.eq.f32.partialorder %v2916, %v3014
        %vm3027 = vcmp.eq.f32.partialorder %v2919, %v3014
        %vm3028 = vcmp.eq.f32.partialorder %v2922, %v3014
        %vm3029 = vcmp.eq.f32.partialorder %v2925, %v3014
        %vm3030 = vcmp.eq.f32.partialorder %v2928, %v3014
        %vm3031 = vcmp.eq.f32.partialorder %v2931, %v3014
        %vm3032 = vcmp.eq.f32.partialorder %v2934, %v3014
        %vm3033 = vcmp.eq.f32.partialorder %v2937, %v3014
        %vm3034 = vcmp.eq.f32.partialorder %v2940, %v3014
        %vm3035 = vcmp.eq.f32.partialorder %v2943, %v3014
        %vm3036 = vcmp.eq.f32.partialorder %v2946, %v3014
        %vm3037 = vcmp.eq.f32.partialorder %v2949, %v3014
        %vm3038 = vcmp.eq.f32.partialorder %v2952, %v3014
        %vm3039 = vcmp.eq.f32.partialorder %v2955, %v3014
        %vm3040 = vcmp.eq.f32.partialorder %v2958, %v3014
        %vm3041 = vcmp.eq.f32.partialorder %v2961, %v3014
        %vm3042 = vcmp.eq.f32.partialorder %v2964, %v3014
        %vm3043 = vcmp.eq.f32.partialorder %v2967, %v3014
        %vm3044 = vcmp.eq.f32.partialorder %v2970, %v3014
        %vm3045 = vcmp.eq.f32.partialorder %v2973, %v3014
        %vm3046 = vcmp.eq.f32.partialorder %v2976, %v3014
        %v3047 = vsel %vm3015, %v505, 256.0
        %v3048 = vsel %vm3016, %v506, 256.0
        %v3049 = vsel %vm3017, %v507, 256.0
        %v3050 = vsel %vm3018, %v508, 256.0
        %v3051 = vsel %vm3019, %v509, 256.0
        %v3052 = vsel %vm3020, %v510, 256.0
        %v3053 = vsel %vm3021, %v511, 256.0
        %v3054 = vsel %vm3022, %v512, 256.0
        %v3055 = vsel %vm3023, %v513, 256.0
        %v3056 = vsel %vm3024, %v514, 256.0
        %v3057 = vsel %vm3025, %v515, 256.0
        %v3058 = vsel %vm3026, %v516, 256.0
        %v3059 = vsel %vm3027, %v517, 256.0
        %v3060 = vsel %vm3028, %v518, 256.0
        %v3061 = vsel %vm3029, %v519, 256.0
        %v3062 = vsel %vm3030, %v520, 256.0
        %v3063 = vsel %vm3031, %v521, 256.0
        %v3064 = vsel %vm3032, %v522, 256.0
        %v3065 = vsel %vm3033, %v523, 256.0
        %v3066 = vsel %vm3034, %v524, 256.0
        %v3067 = vsel %vm3035, %v525, 256.0
        %v3068 = vsel %vm3036, %v526, 256.0
        %v3069 = vsel %vm3037, %v527, 256.0
        %v3070 = vsel %vm3038, %v528, 256.0
        %v3071 = vsel %vm3039, %v529, 256.0
        %v3072 = vsel %vm3040, %v530, 256.0
        %v3073 = vsel %vm3041, %v531, 256.0
        %v3074 = vsel %vm3042, %v532, 256.0
        %v3075 = vsel %vm3043, %v533, 256.0
        %v3076 = vsel %vm3044, %v534, 256.0
        %v3077 = vsel %vm3045, %v535, 256.0
        %v3078 = vsel %vm3046, %v536, 256.0
        %v3079 = vmin.f32 %v3047, %v3051
        %v3080 = vmin.f32 %v3048, %v3052
        %v3081 = vmin.f32 %v3049, %v3053
        %v3082 = vmin.f32 %v3050, %v3054
        %v3083 = vmin.f32 %v3079, %v3055
        %v3084 = vmin.f32 %v3080, %v3056
        %v3085 = vmin.f32 %v3081, %v3057
        %v3086 = vmin.f32 %v3082, %v3058
        %v3087 = vmin.f32 %v3083, %v3059
        %v3088 = vmin.f32 %v3084, %v3060
        %v3089 = vmin.f32 %v3085, %v3061
        %v3090 = vmin.f32 %v3086, %v3062
        %v3091 = vmin.f32 %v3087, %v3063
        %v3092 = vmin.f32 %v3088, %v3064
        %v3093 = vmin.f32 %v3089, %v3065
        %v3094 = vmin.f32 %v3090, %v3066
        %v3095 = vmin.f32 %v3091, %v3067
        %v3096 = vmin.f32 %v3092, %v3068
        %v3097 = vmin.f32 %v3093, %v3069
        %v3098 = vmin.f32 %v3094, %v3070
        %v3099 = vmin.f32 %v3095, %v3071
        %v3100 = vmin.f32 %v3096, %v3072
        %v3101 = vmin.f32 %v3097, %v3073
        %v3102 = vmin.f32 %v3098, %v3074
        %v3103 = vmin.f32 %v3099, %v3075
        %v3104 = vmin.f32 %v3100, %v3076
        %v3105 = vmin.f32 %v3101, %v3077
        %v3106 = vmin.f32 %v3102, %v3078
        %v3107 = vmin.f32 %v3103, %v3104
        %v3108 = vmin.f32 %v3105, %v3106
        %v3109 = vmin.f32 %v3107, %v3108
        %v3110 = vrot.slane %v3109, 4
        %v3111 = vmin.f32 %v3109, %v3110
        %v3112 = vrot.slane %v3111, 2
        %v3113 = vmin.f32 %v3111, %v3112
        %v3114 = vrot.slane %v3113, 1
        %v3115 = vmin.f32 %v3113, %v3114
        %v3116 = vcvt.f32.s32.to.zero.pseudo %v3115
        %vm3117 = vcmp.eq.s32.totalorder %v473, %v3116
        %vm3118 = vcmp.eq.s32.totalorder %v474, %v3116
        %vm3119 = vcmp.eq.s32.totalorder %v475, %v3116
        %vm3120 = vcmp.eq.s32.totalorder %v476, %v3116
        %vm3121 = vcmp.eq.s32.totalorder %v477, %v3116
        %vm3122 = vcmp.eq.s32.totalorder %v478, %v3116
        %vm3123 = vcmp.eq.s32.totalorder %v479, %v3116
        %vm3124 = vcmp.eq.s32.totalorder %v480, %v3116
        %vm3125 = vcmp.eq.s32.totalorder %v481, %v3116
        %vm3126 = vcmp.eq.s32.totalorder %v482, %v3116
        %vm3127 = vcmp.eq.s32.totalorder %v483, %v3116
        %vm3128 = vcmp.eq.s32.totalorder %v484, %v3116
        %vm3129 = vcmp.eq.s32.totalorder %v485, %v3116
        %vm3130 = vcmp.eq.s32.totalorder %v486, %v3116
        %vm3131 = vcmp.eq.s32.totalorder %v487, %v3116
        %vm3132 = vcmp.eq.s32.totalorder %v488, %v3116
        %vm3133 = vcmp.eq.s32.totalorder %v489, %v3116
        %vm3134 = vcmp.eq.s32.totalorder %v490, %v3116
        %vm3135 = vcmp.eq.s32.totalorder %v491, %v3116
        %vm3136 = vcmp.eq.s32.totalorder %v492, %v3116
        %vm3137 = vcmp.eq.s32.totalorder %v493, %v3116
        %vm3138 = vcmp.eq.s32.totalorder %v494, %v3116
        %vm3139 = vcmp.eq.s32.totalorder %v495, %v3116
        %vm3140 = vcmp.eq.s32.totalorder %v496, %v3116
        %vm3141 = vcmp.eq.s32.totalorder %v497, %v3116
        %vm3142 = vcmp.eq.s32.totalorder %v498, %v3116
        %vm3143 = vcmp.eq.s32.totalorder %v499, %v3116
        %vm3144 = vcmp.eq.s32.totalorder %v500, %v3116
        %vm3145 = vcmp.eq.s32.totalorder %v501, %v3116
        %vm3146 = vcmp.eq.s32.totalorder %v502, %v3116
        %vm3147 = vcmp.eq.s32.totalorder %v503, %v3116
        %vm3148 = vcmp.eq.s32.totalorder %v504, %v3116
        %v3149 = vsel %vm3117, 1, 0
        %v3150 = vsel %vm3118, 1, 0
        %v3151 = vsel %vm3119, 1, 0
        %v3152 = vsel %vm3120, 1, 0
        %v3153 = vsel %vm3121, 1, 0
        %v3154 = vsel %vm3122, 1, 0
        %v3155 = vsel %vm3123, 1, 0
        %v3156 = vsel %vm3124, 1, 0
        %v3157 = vsel %vm3125, 1, 0
        %v3158 = vsel %vm3126, 1, 0
        %v3159 = vsel %vm3127, 1, 0
        %v3160 = vsel %vm3128, 1, 0
        %v3161 = vsel %vm3129, 1, 0
        %v3162 = vsel %vm3130, 1, 0
        %v3163 = vsel %vm3131, 1, 0
        %v3164 = vsel %vm3132, 1, 0
        %v3165 = vsel %vm3133, 1, 0
        %v3166 = vsel %vm3134, 1, 0
        %v3167 = vsel %vm3135, 1, 0
        %v3168 = vsel %vm3136, 1, 0
        %v3169 = vsel %vm3137, 1, 0
        %v3170 = vsel %vm3138, 1, 0
        %v3171 = vsel %vm3139, 1, 0
        %v3172 = vsel %vm3140, 1, 0
        %v3173 = vsel %vm3141, 1, 0
        %v3174 = vsel %vm3142, 1, 0
        %v3175 = vsel %vm3143, 1, 0
        %v3176 = vsel %vm3144, 1, 0
        %v3177 = vsel %vm3145, 1, 0
        %v3178 = vsel %vm3146, 1, 0
        %v3179 = vsel %vm3147, 1, 0
        %v3180 = vsel %vm3148, 1, 0
        %v3181 = vcvt.s32.f32 %v3149
        %v3182 = vcvt.s32.f32 %v3150
        %v3183 = vcvt.s32.f32 %v3151
        %v3184 = vcvt.s32.f32 %v3152
        %v3185 = vcvt.s32.f32 %v3153
        %v3186 = vcvt.s32.f32 %v3154
        %v3187 = vcvt.s32.f32 %v3155
        %v3188 = vcvt.s32.f32 %v3156
        %v3189 = vcvt.s32.f32 %v3157
        %v3190 = vcvt.s32.f32 %v3158
        %v3191 = vcvt.s32.f32 %v3159
        %v3192 = vcvt.s32.f32 %v3160
        %v3193 = vcvt.s32.f32 %v3161
        %v3194 = vcvt.s32.f32 %v3162
        %v3195 = vcvt.s32.f32 %v3163
        %v3196 = vcvt.s32.f32 %v3164
        %v3197 = vcvt.s32.f32 %v3165
        %v3198 = vcvt.s32.f32 %v3166
        %v3199 = vcvt.s32.f32 %v3167
        %v3200 = vcvt.s32.f32 %v3168
        %v3201 = vcvt.s32.f32 %v3169
        %v3202 = vcvt.s32.f32 %v3170
        %v3203 = vcvt.s32.f32 %v3171
        %v3204 = vcvt.s32.f32 %v3172
        %v3205 = vcvt.s32.f32 %v3173
        %v3206 = vcvt.s32.f32 %v3174
        %v3207 = vcvt.s32.f32 %v3175
        %v3208 = vcvt.s32.f32 %v3176
        %v3209 = vcvt.s32.f32 %v3177
        %v3210 = vcvt.s32.f32 %v3178
        %v3211 = vcvt.s32.f32 %v3179
        %v3212 = vcvt.s32.f32 %v3180
        %s3213 = scalar_lea.vmem [#allocation5], 48
        %v3214 = vld [vmem:[%s3213] sm:$0xff]
        %v3215 = vld [vmem:[%s3213 + $0x8] sm:$0xff]
        %3216 = vmatpush.msra.mxu0 %v3196
        %3217 = vmatpush.msra.mxu0 %v3195
        %3218 = vmatpush.msra.mxu0 %v3194
        %3219 = vmatpush.msra.mxu0 %v3193
        %3220 = vmatpush.msra.mxu0 %v3192
        %3221 = vmatpush.msra.mxu0 %v3191
        %3222 = vmatpush.msra.mxu0 %v3190
        %3223 = vmatpush.msra.mxu0 %v3189
        %3224 = vmatpush.msra.mxu0 %v3188
        %3225 = vmatpush.msra.mxu0 %v3187
        %3226 = vmatpush.msra.mxu0 %v3186
        %3227 = vmatpush.msra.mxu0 %v3185
        %3228 = vmatpush.msra.mxu0 %v3184
        %3229 = vmatpush.msra.mxu0 %v3183
        %3230 = vmatpush.msra.mxu0 %v3182
        %3231 = vmatpush.msra.mxu0 %v3181
        %3232 = vmatmul.f32.gmra.mxu0 %v3214
        %v3233 = vpop.f32.mrf.mxu0
        %v3234 = vadd.f32 0.0, %v3233
        %3235 = vdwg.mxu0
        %3236 = vmatpush.msra.mxu0 %v3212
        %3237 = vmatpush.msra.mxu0 %v3211
        %3238 = vmatpush.msra.mxu0 %v3210
        %3239 = vmatpush.msra.mxu0 %v3209
        %3240 = vmatpush.msra.mxu0 %v3208
        %3241 = vmatpush.msra.mxu0 %v3207
        %3242 = vmatpush.msra.mxu0 %v3206
        %3243 = vmatpush.msra.mxu0 %v3205
        %3244 = vmatpush.msra.mxu0 %v3204
        %3245 = vmatpush.msra.mxu0 %v3203
        %3246 = vmatpush.msra.mxu0 %v3202
        %3247 = vmatpush.msra.mxu0 %v3201
        %3248 = vmatpush.msra.mxu0 %v3200
        %3249 = vmatpush.msra.mxu0 %v3199
        %3250 = vmatpush.msra.mxu0 %v3198
        %3251 = vmatpush.msra.mxu0 %v3197
        %3252 = vmatmul.f32.gmra.mxu0 %v3215
        %v3253 = vpop.f32.mrf.mxu0
        %v3254 = vadd.f32 %v3234, %v3253
        %3255 = vdwg.mxu0
        %s3256 = scalar_lea.vmem [#allocation7], 24
        %v3257 = vld [vmem:[%s3256] sm:$0xff]
        %3258 = vxpose.xlu0.b32.start [1/16] %v3257, 128
        %3259 = vxpose.xlu0.b32.cont [2/16] 0.0, 128
        %3260 = vxpose.xlu0.b32.cont [3/16] 0.0, 128
        %3261 = vxpose.xlu0.b32.cont [4/16] 0.0, 128
        %3262 = vxpose.xlu0.b32.cont [5/16] 0.0, 128
        %3263 = vxpose.xlu0.b32.cont [6/16] 0.0, 128
        %3264 = vxpose.xlu0.b32.cont [7/16] 0.0, 128
        %3265 = vxpose.xlu0.b32.cont [8/16] 0.0, 128
        %3266 = vxpose.xlu0.b32.cont [9/16] 0.0, 128
        %3267 = vxpose.xlu0.b32.cont [10/16] 0.0, 128
        %3268 = vxpose.xlu0.b32.cont [11/16] 0.0, 128
        %3269 = vxpose.xlu0.b32.cont [12/16] 0.0, 128
        %3270 = vxpose.xlu0.b32.cont [13/16] 0.0, 128
        %3271 = vxpose.xlu0.b32.cont [14/16] 0.0, 128
        %3272 = vxpose.xlu0.b32.cont [15/16] 0.0, 128
        %3273 = vxpose.xlu0.b32.end [16/16] 0.0, 128
        %v3274 = vpop.trf.xlu0
        %v3275 = vpop.trf.xlu0
        %v3276 = vpop.trf.xlu0
        %v3277 = vpop.trf.xlu0
        %v3278 = vpop.trf.xlu0
        %v3279 = vpop.trf.xlu0
        %v3280 = vpop.trf.xlu0
        %v3281 = vpop.trf.xlu0
        %v3282 = vpop.trf.xlu0
        %v3283 = vpop.trf.xlu0
        %v3284 = vpop.trf.xlu0
        %v3285 = vpop.trf.xlu0
        %v3286 = vpop.trf.xlu0
        %v3287 = vpop.trf.xlu0
        %v3288 = vpop.trf.xlu0
        %v3289 = vpop.trf.xlu0
        %v3291 = vsel %vm634, %v3274, 0
        %v3294 = vsel %vm634, %v3275, 0
        %v3297 = vsel %vm634, %v3276, 0
        %v3300 = vsel %vm634, %v3277, 0
        %v3303 = vsel %vm634, %v3278, 0
        %v3306 = vsel %vm634, %v3279, 0
        %v3309 = vsel %vm634, %v3280, 0
        %v3312 = vsel %vm634, %v3281, 0
        %3314 = vmatpush.msra.mxu0 0.0
        %3315 = vmatpush.msra.mxu0 0.0
        %3316 = vmatpush.msra.mxu0 0.0
        %3317 = vmatpush.msra.mxu0 0.0
        %3318 = vmatpush.msra.mxu0 0.0
        %3319 = vmatpush.msra.mxu0 0.0
        %3320 = vmatpush.msra.mxu0 0.0
        %3321 = vmatpush.msra.mxu0 0.0
        %3322 = vmatpush.msra.mxu0 0.0
        %3323 = vmatpush.msra.mxu0 0.0
        %3324 = vmatpush.msra.mxu0 0.0
        %3325 = vmatpush.msra.mxu0 0.0
        %3326 = vmatpush.msra.mxu0 0.0
        %3327 = vmatpush.msra.mxu0 0.0
        %3328 = vmatpush.msra.mxu0 0.0
        %3329 = vmatpush.msra.mxu0 %v3254
        %3330 = vmatmul.f32.gmra.mxu0 %v3291
        %v3331 = vpop.f32.mrf.mxu0
        %v3332 = vadd.f32 0.0, %v3331
        %3333 = vmatmul.f32.gmra.mxu0 %v3294
        %v3334 = vpop.f32.mrf.mxu0
        %v3335 = vadd.f32 0.0, %v3334
        %3336 = vmatmul.f32.gmra.mxu0 %v3297
        %v3337 = vpop.f32.mrf.mxu0
        %v3338 = vadd.f32 0.0, %v3337
        %3339 = vmatmul.f32.gmra.mxu0 %v3300
        %v3340 = vpop.f32.mrf.mxu0
        %v3341 = vadd.f32 0.0, %v3340
        %3342 = vmatmul.f32.gmra.mxu0 %v3303
        %v3343 = vpop.f32.mrf.mxu0
        %v3344 = vadd.f32 0.0, %v3343
        %3345 = vmatmul.f32.gmra.mxu0 %v3306
        %v3346 = vpop.f32.mrf.mxu0
        %v3347 = vadd.f32 0.0, %v3346
        %3348 = vmatmul.f32.gmra.mxu0 %v3309
        %v3349 = vpop.f32.mrf.mxu0
        %v3350 = vadd.f32 0.0, %v3349
        %3351 = vmatmul.f32.gmra.mxu0 %v3312
        %v3352 = vpop.f32.mrf.mxu0
        %v3353 = vadd.f32 0.0, %v3352
        %3354 = vdwg.mxu0
        %v3355 = vadd.f32 %v2643, %v3332
        %v3356 = vadd.f32 %v2644, %v3335
        %v3357 = vadd.f32 %v2645, %v3338
        %v3358 = vadd.f32 %v2646, %v3341
        %v3359 = vadd.f32 %v2647, %v3344
        %v3360 = vadd.f32 %v2648, %v3347
        %v3361 = vadd.f32 %v2649, %v3350
        %v3362 = vadd.f32 %v2650, %v3353
        %3363 = vst [vmem:[%s449 + $0x3] sm:$0x1] %v3116
        %3364 = vst [vmem:[%s456 + $0x18] sm:$0xff] %v2700
        %v3365 = vsub.f32 %v2700, %v3254
        %v3366 = vmul.f32 %v3365, %v3365
        %v3367 = vrot.slane %v3366, 4
        %v3368 = vadd.f32 %v3366, %v3367
        %v3369 = vrot.slane %v3368, 2
        %v3370 = vadd.f32 %v3368, %v3369
        %v3371 = vrot.slane %v3370, 1
        %v3372 = vadd.f32 %v3370, %v3371
        %3373 = vst [vmem:[%s463 + $0x3] sm:$0x1] %v3372
        %v3374 = vld [vmem:[%s6] sm:$0xff]
        %v3375 = vld [vmem:[%s6 + $0x8] sm:$0xff]
        %v3376 = vld [vmem:[%s6 + $0x10] sm:$0xff]
        %v3377 = vld [vmem:[%s6 + $0x18] sm:$0xff]
        %v3378 = vld [vmem:[%s6 + $0x20] sm:$0xff]
        %v3379 = vld [vmem:[%s6 + $0x28] sm:$0xff]
        %v3380 = vld [vmem:[%s6 + $0x30] sm:$0xff]
        %v3381 = vld [vmem:[%s6 + $0x38] sm:$0xff]
        %3383 = vset.pattern.permute.xlu0 0
        %3384 = vperm.xlu0 %3383, %v3374
        %v3385 = vpop.permute.xlu0 %3384
        %3388 = vset.pattern.permute.xlu0 0
        %3389 = vperm.xlu0 %3388, %v3375
        %v3390 = vpop.permute.xlu0 %3389
        %3393 = vset.pattern.permute.xlu0 0
        %3394 = vperm.xlu0 %3393, %v3376
        %v3395 = vpop.permute.xlu0 %3394
        %3398 = vset.pattern.permute.xlu0 0
        %3399 = vperm.xlu0 %3398, %v3377
        %v3400 = vpop.permute.xlu0 %3399
        %3403 = vset.pattern.permute.xlu0 0
        %3404 = vperm.xlu0 %3403, %v3378
        %v3405 = vpop.permute.xlu0 %3404
        %3408 = vset.pattern.permute.xlu0 0
        %3409 = vperm.xlu0 %3408, %v3379
        %v3410 = vpop.permute.xlu0 %3409
        %3413 = vset.pattern.permute.xlu0 0
        %3414 = vperm.xlu0 %3413, %v3380
        %v3415 = vpop.permute.xlu0 %3414
        %3418 = vset.pattern.permute.xlu0 0
        %3419 = vperm.xlu0 %3418, %v3381
        %v3420 = vpop.permute.xlu0 %3419
        %v3422 = vadd.f32 %v3355, %v3385
        %v3423 = vadd.f32 %v3356, %v3390
        %v3424 = vadd.f32 %v3357, %v3395
        %v3425 = vadd.f32 %v3358, %v3400
        %v3426 = vadd.f32 %v3359, %v3405
        %v3427 = vadd.f32 %v3360, %v3410
        %v3428 = vadd.f32 %v3361, %v3415
        %v3429 = vadd.f32 %v3362, %v3420
        %3430 = vst [vmem:[%s442] sm:$0xff] %v3422
        %3431 = vst [vmem:[%s442 + $0x8] sm:$0xff] %v3423
        %3432 = vst [vmem:[%s442 + $0x10] sm:$0xff] %v3424
        %3433 = vst [vmem:[%s442 + $0x18] sm:$0xff] %v3425
        %3434 = vst [vmem:[%s442 + $0x20] sm:$0xff] %v3426
        %3435 = vst [vmem:[%s442 + $0x28] sm:$0xff] %v3427
        %3436 = vst [vmem:[%s442 + $0x30] sm:$0xff] %v3428
        %3437 = vst [vmem:[%s442 + $0x38] sm:$0xff] %v3429
        %s3438 = sand.u32 %s211, 1
        %s3439 = scalar_lea.sflag [#allocation4], %s3438
        %s3440 = sand.u32 %s211, 1
        %s3441 = smul.addr %s3440, 64
        %s3442 = scalar_lea.vmem [#allocation8], %s3441
        %s3443 = sand.u32 %s35, 1
        %s3444 = scalar_lea.sflag [#allocation10], %s3443
        %s3445 = sand.u32 %s239, 1
        %s3446 = smul.addr %s3445, 4
        %s3447 = scalar_lea.vmem [#allocation9], %s3446
        %s3448 = sand.u32 %s35, 1
        %s3449 = scalar_lea.sflag [#allocation10], %s3448
        %s3450 = sand.u32 %s267, 1
        %s3451 = smul.addr %s3450, 32
        %s3452 = scalar_lea.vmem [#allocation11], %s3451
        %s3453 = sand.u32 %s295, 1
        %s3454 = scalar_lea.sflag [#allocation13], %s3453
        %s3455 = sand.u32 %s295, 1
        %s3456 = smul.addr %s3455, 4
        %s3457 = scalar_lea.vmem [#allocation12], %s3456
        // Predicated region
        $region61: #{tpu_custom_call.1} parent=47 // pred_check
          %p3458 = pneg %p221
        $region62: #{tpu_custom_call.1} parent=47 // pred_check_branch
          %3460 = sbr.rel (%p3458) target = $region64
        $region63: #{tpu_custom_call.1} parent=47 // pred_region
          %3462 = vsyncadd %s3439, 0
          %s3463 = smul.addr %s39, 16
          %s3464 = sadd.s32 %s40, %s3463
          %s3465 = smul.addr %s3464, 8
          %s3466 = scalar_lea.hbm %s7, %s3465
          %s3467 = sshll.u32 %s3442, 4
          %s3468 = int_to_ptr.vmem [resolvable:$true] %s3467
          %s3469 = sshll.u32 %s3466, 4
          %s3470 = int_to_ptr.hbm [resolvable:$true] %s3469
          %3475 = dma.vmem_to_hbm [thread:$0]  %s3468, 1024, %s3470, %s3439, 128, 256, 8
        $region64: #{tpu_custom_call.1} parent=47 // pred_fallthru
          _
        // Predicated region
        $region65: #{tpu_custom_call.1} parent=47 // pred_check
          %p3476 = pneg %p249
        $region66: #{tpu_custom_call.1} parent=47 // pred_check_branch
          %3478 = sbr.rel (%p3476) target = $region68
        $region67: #{tpu_custom_call.1} parent=47 // pred_region
          %3480 = vsyncadd %s3444, 0
          %s3481 = smul.addr %s39, 2
          %s3482 = sadd.s32 %s40, %s3481
          %s3483 = smul.addr %s3482, 4
          %s3484 = scalar_lea.hbm %s8, %s3483
          %s3486 = sshll.u32 %s3447, 4
          %s3487 = int_to_ptr.vmem [resolvable:$true] %s3486
          %s3488 = sshll.u32 %s3484, 4
          %s3489 = int_to_ptr.hbm [resolvable:$true] %s3488
          %3491 = dma.vmem_to_hbm [thread:$0]  %s3487, 64, %s3489, %s3444
        $region68: #{tpu_custom_call.1} parent=47 // pred_fallthru
          _
        // Predicated region
        $region69: #{tpu_custom_call.1} parent=47 // pred_check
          %p3492 = pneg %p277
        $region70: #{tpu_custom_call.1} parent=47 // pred_check_branch
          %3494 = sbr.rel (%p3492) target = $region72
        $region71: #{tpu_custom_call.1} parent=47 // pred_region
          %3496 = vsyncadd %s3449, 0
          %s3497 = smul.addr %s39, 8
          %s3498 = sadd.s32 %s40, %s3497
          %s3499 = smul.addr %s3498, 8
          %s3500 = scalar_lea.hbm %s9, %s3499
          %s3501 = sshll.u32 %s3452, 4
          %s3502 = int_to_ptr.vmem [resolvable:$true] %s3501
          %s3503 = sshll.u32 %s3500, 4
          %s3504 = int_to_ptr.hbm [resolvable:$true] %s3503
          %3509 = dma.vmem_to_hbm [thread:$0]  %s3502, 512, %s3504, %s3449, 128, 256, 8
        $region72: #{tpu_custom_call.1} parent=47 // pred_fallthru
          _
        // Predicated region
        $region73: #{tpu_custom_call.1} parent=47 // pred_check
          %p3510 = pneg %p305
        $region74: #{tpu_custom_call.1} parent=47 // pred_check_branch
          %3512 = sbr.rel (%p3510) target = $region76
        $region75: #{tpu_custom_call.1} parent=47 // pred_region
          %3514 = vsyncadd %s3454, 0
          %s3515 = smul.addr %s39, 2
          %s3516 = sadd.s32 %s40, %s3515
          %s3517 = smul.addr %s3516, 4
          %s3518 = scalar_lea.hbm %s10, %s3517
          %s3520 = sshll.u32 %s3457, 4
          %s3521 = int_to_ptr.vmem [resolvable:$true] %s3520
          %s3522 = sshll.u32 %s3518, 4
          %s3523 = int_to_ptr.hbm [resolvable:$true] %s3522
          %3525 = dma.vmem_to_hbm [thread:$0]  %s3521, 64, %s3523, %s3454
        $region76: #{tpu_custom_call.1} parent=47 // pred_fallthru
          _
      $region48: #{tpu_custom_call.1} parent=5 // pred_fallthru
        _
      %p3526 = scmp.le.s32.totalorder 2, %s30
      // Predicated region
      $region77: #{tpu_custom_call.1} parent=5 // pred_check
        %p3527 = pneg %p3526
      $region78: #{tpu_custom_call.1} parent=5 // pred_check_branch
        %3529 = sbr.rel (%p3527) target = $region80
      $region79: #{tpu_custom_call.1} parent=5 // pred_region
        %s3530 = ssub.s32 %s30, 2
        // Predicated region
        $region81: #{tpu_custom_call.1} parent=79 // pred_check
          %p3531 = pneg %p227
        $region82: #{tpu_custom_call.1} parent=79 // pred_check_branch
          %3533 = sbr.rel (%p3531) target = $region84
        $region83: #{tpu_custom_call.1} parent=79 // pred_region
          %s3534 = sand.u32 %s212, 1
          %s3535 = scalar_lea.sflag [#allocation4], %s3534
          %s3536 = sand.u32 %s212, 1
          %s3537 = smul.addr %s3536, 64
          %s3538 = scalar_lea.vmem [#allocation8], %s3537
          %3540 = dma.done %s3535, 1024
        $region84: #{tpu_custom_call.1} parent=79 // pred_fallthru
          _
        // Predicated region
        $region85: #{tpu_custom_call.1} parent=79 // pred_check
          %p3541 = pneg %p255
        $region86: #{tpu_custom_call.1} parent=79 // pred_check_branch
          %3543 = sbr.rel (%p3541) target = $region88
        $region87: #{tpu_custom_call.1} parent=79 // pred_region
          %s3544 = sand.u32 %s36, 1
          %s3545 = scalar_lea.sflag [#allocation10], %s3544
          %s3546 = sand.u32 %s240, 1
          %s3547 = smul.addr %s3546, 4
          %s3548 = scalar_lea.vmem [#allocation9], %s3547
          %3550 = dma.done %s3545, 64
        $region88: #{tpu_custom_call.1} parent=79 // pred_fallthru
          _
        // Predicated region
        $region89: #{tpu_custom_call.1} parent=79 // pred_check
          %p3551 = pneg %p283
        $region90: #{tpu_custom_call.1} parent=79 // pred_check_branch
          %3553 = sbr.rel (%p3551) target = $region92
        $region91: #{tpu_custom_call.1} parent=79 // pred_region
          %s3554 = sand.u32 %s36, 1
          %s3555 = scalar_lea.sflag [#allocation10], %s3554
          %s3556 = sand.u32 %s268, 1
          %s3557 = smul.addr %s3556, 32
          %s3558 = scalar_lea.vmem [#allocation11], %s3557
          %3560 = dma.done %s3555, 512
        $region92: #{tpu_custom_call.1} parent=79 // pred_fallthru
          _
        // Predicated region
        $region93: #{tpu_custom_call.1} parent=79 // pred_check
          %p3561 = pneg %p311
        $region94: #{tpu_custom_call.1} parent=79 // pred_check_branch
          %3563 = sbr.rel (%p3561) target = $region96
        $region95: #{tpu_custom_call.1} parent=79 // pred_region
          %s3564 = sand.u32 %s296, 1
          %s3565 = scalar_lea.sflag [#allocation13], %s3564
          %s3566 = sand.u32 %s296, 1
          %s3567 = smul.addr %s3566, 4
          %s3568 = scalar_lea.vmem [#allocation12], %s3567
          %3570 = dma.done %s3565, 64
        $region96: #{tpu_custom_call.1} parent=79 // pred_fallthru
          _
      $region80: #{tpu_custom_call.1} parent=5 // pred_fallthru
        _
    $region6: #{tpu_custom_call.1} parent=1 // loop_footer
      %s34 = sadd.s32 1, %s30
    $region7: #{tpu_custom_call.1} parent=1 // loop_footer_branch
      %29 = sbr.rel target = $region3
    $region8: #{tpu_custom_call.1} parent=1 // loop_exit
      _
    %3571 = vsyncpa [#allocation3], 1
    %s3572 = scalar_lea.sflag [#allocation3], 1
    %3573 = vsyncpa %s3572, 1
    %3574 = vsyncpa [#allocation6], 1
    %3575 = vsyncpa [#allocation4], 1
    %s3576 = scalar_lea.sflag [#allocation4], 1
    %3577 = vsyncpa %s3576, 1
    %3578 = vsyncpa [#allocation10], 1
    %s3579 = scalar_lea.sflag [#allocation10], 1
    %3580 = vsyncpa %s3579, 1
    %3581 = vsyncpa [#allocation13], 1
    %s3582 = scalar_lea.sflag [#allocation13], 1
    %3583 = vsyncpa %s3582, 1

</llo_original>
